<compile_context>
chip_gen: v7x
topology: tpu7x:2x2x1
jax: 0.10.0
libtpu: 0.0.40
codegen_flags: <defaults>
</compile_context>

<pallas_src>
import functools

import jax
import jax.numpy as jnp
from jax import lax
from jax.experimental import pallas as pl
from jax.experimental.pallas import tpu as pltpu

_VMEM_LIMIT = 48 * 1024 * 1024   # fits v5e/v6e (128 MiB) and v7x (64 MiB) VMEM
_TK_SINGLE_MAX = 1024            # single-pass K reduction up to this width


def _round_up(x, m):
    return (x + m - 1) // m * m


def _pick_tile(size, candidates):
    for c in candidates:
        if size % c == 0:
            return c
    return size


# ----------------------------------------------------------------------------
# Fused matmul:  out = epi( prologue(A) @ B )
#   prologue: per-K-column affine (+ReLU)   (pre-activation BN+ReLU)
#   epilogue: per-N-column affine / bias (+ReLU)
# ----------------------------------------------------------------------------
def _mm_kernel(*refs, multi, has_pro, pro_relu, has_escale, has_eshift,
               epi_relu):
    it = iter(refs)
    a_ref = next(it)
    b_ref = next(it)
    ps_ref = pb_ref = es_ref = eb_ref = None
    if has_pro:
        ps_ref = next(it)
        pb_ref = next(it)
    if has_escale:
        es_ref = next(it)
    if has_eshift:
        eb_ref = next(it)
    o_ref = next(it)
    acc_ref = next(it) if multi else None

    def partial_dot():
        a = a_ref[...]
        if has_pro:
            a = a.astype(jnp.float32) * ps_ref[...] + pb_ref[...]
            if pro_relu:
                a = jnp.maximum(a, 0.0)
        return jnp.dot(a.astype(b_ref.dtype), b_ref[...],
                       preferred_element_type=jnp.float32)

    def finish(y):
        if has_escale:
            y = y * es_ref[...]
        if has_eshift:
            y = y + eb_ref[...]
        if epi_relu:
            y = jnp.maximum(y, 0.0)
        o_ref[...] = y.astype(o_ref.dtype)

    if not multi:
        finish(partial_dot())
    else:
        k = pl.program_id(2)

        @pl.when(k == 0)
        def _():
            acc_ref[...] = jnp.zeros_like(acc_ref)

        acc_ref[...] += partial_dot()

        @pl.when(k == pl.num_programs(2) - 1)
        def _():
            finish(acc_ref[...])


def fused_matmul(a, b, *, pro_scale=None, pro_shift=None, pro_relu=True,
                 epi_scale=None, epi_shift=None, epi_relu=False,
                 out_dtype=jnp.float32):
    """a: (M, Ka); b: (kv, N) with kv <= Ka.  Reduces over the first
    round_up(kv,128) columns of A only (extra A columns are never fetched).
    Returns the (Mp, Np) padded result (callers slice only when needed)."""
    M, Ka = a.shape
    kv, Nc = b.shape
    Kp = _round_up(kv, 128)
    Np = _round_up(Nc, 128)
    Mp = _round_up(M, 16)

    if Mp != M:
        a = jnp.pad(a, ((0, Mp - M), (0, 0)))
    if Ka < Kp:
        a = jnp.pad(a, ((0, 0), (0, Kp - Ka)))
    bp = jnp.pad(b.astype(jnp.bfloat16), ((0, Kp - kv), (0, Np - Nc)))

    has_pro = pro_scale is not None
    has_escale = epi_scale is not None
    has_eshift = epi_shift is not None

    tm = _pick_tile(Mp, (512, 256, 128, 64, 32, 16))
    tn = 256 if Np % 256 == 0 else 128
    multi = Kp > _TK_SINGLE_MAX
    tk = _pick_tile(Kp, (1024, 512, 256, 128)) if multi else Kp

    inputs = [a, bp]
    if has_pro:
        inputs += [
            jnp.pad(pro_scale.astype(jnp.float32), (0, Kp - kv)).reshape(1, Kp),
            jnp.pad(pro_shift.astype(jnp.float32), (0, Kp - kv)).reshape(1, Kp)]
    if has_escale:
        inputs.append(
            jnp.pad(epi_scale.astype(jnp.float32), (0, Np - Nc)).reshape(1, Np))
    if has_eshift:
        inputs.append(
            jnp.pad(epi_shift.astype(jnp.float32), (0, Np - Nc)).reshape(1, Np))

    kernel = functools.partial(_mm_kernel, multi=multi, has_pro=has_pro,
                               pro_relu=pro_relu, has_escale=has_escale,
                               has_eshift=has_eshift, epi_relu=epi_relu)

    if multi:
        grid = (Mp // tm, Np // tn, Kp // tk)
        in_specs = [pl.BlockSpec((tm, tk), lambda i, j, k: (i, k)),
                    pl.BlockSpec((tk, tn), lambda i, j, k: (k, j))]
        if has_pro:
            in_specs += [pl.BlockSpec((1, tk), lambda i, j, k: (0, k))] * 2
        if has_escale:
            # k-invariant index -> not re-DMA'd across k steps.
            in_specs.append(pl.BlockSpec((1, tn), lambda i, j, k: (0, j)))
        if has_eshift:
            in_specs.append(pl.BlockSpec((1, tn), lambda i, j, k: (0, j)))
        out_spec = pl.BlockSpec((tm, tn), lambda i, j, k: (i, j))
        scratch = [pltpu.VMEM((tm, tn), jnp.float32)]
        dims = ("parallel", "parallel", "arbitrary")
    else:
        grid = (Mp // tm, Np // tn)
        in_specs = [pl.BlockSpec((tm, Kp), lambda i, j: (i, 0)),
                    pl.BlockSpec((Kp, tn), lambda i, j: (0, j))]
        if has_pro:
            in_specs += [pl.BlockSpec((1, Kp), lambda i, j: (0, 0))] * 2
        if has_escale:
            in_specs.append(pl.BlockSpec((1, tn), lambda i, j: (0, j)))
        if has_eshift:
            in_specs.append(pl.BlockSpec((1, tn), lambda i, j: (0, j)))
        out_spec = pl.BlockSpec((tm, tn), lambda i, j: (i, j))
        scratch = []
        dims = ("parallel", "parallel")

    return pl.pallas_call(
        kernel,
        out_shape=jax.ShapeDtypeStruct((Mp, Np), out_dtype),
        grid_spec=pltpu.PrefetchScalarGridSpec(
            num_scalar_prefetch=0, grid=grid,
            in_specs=in_specs, out_specs=out_spec, scratch_shapes=scratch),
        compiler_params=pltpu.CompilerParams(
            dimension_semantics=dims, vmem_limit_bytes=_VMEM_LIMIT),
    )(*inputs)


# ----------------------------------------------------------------------------
# Direct 3x3 stride-1 conv (no im2col): tap loop in-kernel, per-output-row
# MXU dots with f32 accumulation, bf16 in/out.
# ----------------------------------------------------------------------------
def _conv3x3_kernel(x_ref, w_ref, o_ref, *, kh, kw, oh, ow):
    tco = o_ref.shape[-1]

    def row_body(r, carry):
        acc = jnp.zeros((ow, tco), jnp.float32)
        for di in range(kh):
            for dj in range(kw):
                a = x_ref[0, r + di, dj:dj + ow, :]          # (ow, Cin)
                acc = acc + jnp.dot(a, w_ref[di, dj],
                                    preferred_element_type=jnp.float32)
        o_ref[0, r] = acc.astype(o_ref.dtype)
        return carry

    lax.fori_loop(0, oh, row_body, 0)


def conv3x3(x, w):
    """x: (N, H, W, Cin) bf16 with Cin % 128 == 0; w: (3, 3, cin_valid, cout).
    Returns (N, H, W, round_up(cout, 128)) bf16."""
    N, H, W, Cin = x.shape
    kh, kw, cin_v, cout = w.shape
    assert Cin % 128 == 0 and cin_v <= Cin
    Coutp = _round_up(cout, 128)
    wp = jnp.pad(w.astype(jnp.bfloat16),
                 ((0, 0), (0, 0), (0, Cin - cin_v), (0, Coutp - cout)))
    xp = jnp.pad(x, ((0, 0), (1, 1), (1, 1), (0, 0)))
    Hp, Wp = H + 2, W + 2
    tco = 256 if Coutp % 256 == 0 else 128

    kernel = functools.partial(_conv3x3_kernel, kh=kh, kw=kw, oh=H, ow=W)
    return pl.pallas_call(
        kernel,
        out_shape=jax.ShapeDtypeStruct((N, H, W, Coutp), jnp.bfloat16),
        grid=(N, Coutp // tco),
        in_specs=[pl.BlockSpec((1, Hp, Wp, Cin), lambda n, j: (n, 0, 0, 0)),
                  pl.BlockSpec((kh, kw, Cin, tco), lambda n, j: (0, 0, 0, j))],
        out_specs=pl.BlockSpec((1, H, W, tco), lambda n, j: (n, 0, 0, j)),
        compiler_params=pltpu.CompilerParams(
            dimension_semantics=("parallel", "parallel"),
            vmem_limit_bytes=_VMEM_LIMIT),
    )(xp, wp)


# ----------------------------------------------------------------------------
# Stride-2 kxk pooling: the padded NHWC map is read once; W phases are merged
# into the lane dim (free reshape) so every in-kernel access is a contiguous,
# lane-aligned slice.  kxk window reduced on the VPU per output row.
# ----------------------------------------------------------------------------
def _pool_kernel(x_ref, o_ref, *, k, oh, ow, c, mode):
    def row_body(r, carry):
        acc = None
        for di in range(k):
            for dj in range(k):
                c0 = (dj % 2) * c
                v = x_ref[0, 2 * r + di, dj // 2: dj // 2 + ow,
                          c0:c0 + c].astype(jnp.float32)
                if acc is None:
                    acc = v
                elif mode == "max":
                    acc = jnp.maximum(acc, v)
                else:
                    acc = acc + v
        if mode == "mean":
            acc = acc * (1.0 / (k * k))
        o_ref[0, r] = acc.astype(o_ref.dtype)
        return carry

    lax.fori_loop(0, oh, row_body, 0)


def pool2d_s2(x, k, pad, mode):
    """kxk, stride-2 max/mean pool of an NHWC map (direct, no patch copies)."""
    N, H, W, C = x.shape
    if pad:
        pv = -jnp.inf if mode == "max" else 0.0
        x = jnp.pad(x, ((0, 0), (pad, pad), (pad, pad), (0, 0)),
                    constant_values=pv)
    Hp, Wp = H + 2 * pad, W + 2 * pad
    OH = (Hp - k) // 2 + 1
    OW = (Wp - k) // 2 + 1
    assert Wp % 2 == 0, "even padded width required"  # TODO(synk): odd widths
    xr = x.reshape(N, Hp, Wp // 2, 2 * C)               # free, lane-dense

    kernel = functools.partial(_pool_kernel, k=k, oh=OH, ow=OW, c=C, mode=mode)
    return pl.pallas_call(
        kernel,
        out_shape=jax.ShapeDtypeStruct((N, OH, OW, C), x.dtype),
        grid=(N,),
        in_specs=[pl.BlockSpec((1, Hp, Wp // 2, 2 * C),
                               lambda n: (n, 0, 0, 0))],
        out_specs=pl.BlockSpec((1, OH, OW, C), lambda n: (n, 0, 0, 0)),
        compiler_params=pltpu.CompilerParams(
            dimension_semantics=("parallel",), vmem_limit_bytes=_VMEM_LIMIT),
    )(xr)


# ----------------------------------------------------------------------------
# norm5 + class ReLU + global average pool, one kernel launch per image.
# ----------------------------------------------------------------------------
def _gap_kernel(x_ref, s_ref, b_ref, o_ref):
    v = x_ref[0].astype(jnp.float32) * s_ref[...] + b_ref[...]
    v = jnp.maximum(v, 0.0)
    o_ref[0] = jnp.mean(v, axis=0, keepdims=True)


def gap_bn_relu(x3, scale, shift):
    """x3: (N, HW, Cp) bf16 -> (N, Cp) f32 = mean_HW(relu(x*scale+shift))."""
    N, HW, Cp = x3.shape
    s = jnp.pad(scale.astype(jnp.float32), (0, Cp - scale.shape[0])).reshape(1, Cp)
    b = jnp.pad(shift.astype(jnp.float32), (0, Cp - shift.shape[0])).reshape(1, Cp)
    out = pl.pallas_call(
        _gap_kernel,
        out_shape=jax.ShapeDtypeStruct((N, 1, Cp), jnp.float32),
        grid=(N,),
        in_specs=[pl.BlockSpec((1, HW, Cp), lambda n: (n, 0, 0)),
                  pl.BlockSpec((1, Cp), lambda n: (0, 0)),
                  pl.BlockSpec((1, Cp), lambda n: (0, 0))],
        out_specs=pl.BlockSpec((1, 1, Cp), lambda n: (n, 0, 0)),
        compiler_params=pltpu.CompilerParams(
            dimension_semantics=("parallel",), vmem_limit_bytes=_VMEM_LIMIT),
    )(x3, s, b)
    return out.reshape(N, Cp)


# ----------------------------------------------------------------------------
# Glue
# ----------------------------------------------------------------------------
def bn_scale_shift(bn, eps=1e-5):
    """Eval-mode BatchNorm folded into a per-channel affine."""
    gamma, beta, running_mean, running_var = bn
    scale = gamma / jnp.sqrt(running_var + eps)
    shift = beta - running_mean * scale
    return scale, shift


def _extract_conv_patches(x, kh, kw, stride, pad):
    """x: (N,H,W,C) -> (N, OH, OW, kh*kw, C), zero-padded.  Stem conv only."""
    N, H, W, C = x.shape
    xp = jnp.pad(x, ((0, 0), (pad, pad), (pad, pad), (0, 0)))
    OH = (H + 2 * pad - kh) // stride + 1
    OW = (W + 2 * pad - kw) // stride + 1
    cols = []
    for i in range(kh):
        for j in range(kw):
            cols.append(xp[:, i:i + stride * OH:stride,
                           j:j + stride * OW:stride, :])
    return jnp.stack(cols, axis=3), OH, OW


# ----------------------------------------------------------------------------
# Parameter init (mirrors the module's __init__ shapes, fresh BN stats)
# ----------------------------------------------------------------------------
def _kaiming_normal(key, shape):
    fan_in = shape[0] * shape[1] * shape[2]
    std = (2.0 / fan_in) ** 0.5
    return std * jax.random.normal(key, shape, jnp.float32)


def init_params(key, in_channels, out_channels, init_features, growth_rate,
                block_config, bn_size, feature_dim):
    cnt = [0]

    def nk():
        cnt[0] += 1
        return jax.random.fold_in(key, cnt[0])

    def bn(c):
        return (jnp.ones((c,), jnp.float32), jnp.zeros((c,), jnp.float32),
                jnp.zeros((c,), jnp.float32), jnp.ones((c,), jnp.float32))

    params = {
        "conv0_w": _kaiming_normal(nk(), (7, 7, in_channels, init_features)),
        "norm0": bn(init_features),
        "blocks": [],
    }
    channels = init_features
    for i, num_layers in enumerate(block_config):
        layers = []
        for _ in range(num_layers):
            mid = bn_size * growth_rate
            layers.append({
                "norm1": bn(channels),
                "conv1_w": _kaiming_normal(nk(), (1, 1, channels, mid)),
                "norm2": bn(mid),
                "conv2_w": _kaiming_normal(nk(), (3, 3, mid, growth_rate)),
            })
            channels += growth_rate
        block = {"layers": layers}
        if i == len(block_config) - 1:
            params["norm5"] = bn(channels)
        else:
            block["trans_norm"] = bn(channels)
            block["trans_conv_w"] = _kaiming_normal(
                nk(), (1, 1, channels, channels // 2))
            channels = channels // 2
        params["blocks"].append(block)

    lin_in = channels + feature_dim
    bound = 1.0 / (lin_in ** 0.5)
    params["final_w"] = jax.random.uniform(
        nk(), (lin_in, out_channels), jnp.float32, -bound, bound)
    params["final_b"] = jnp.zeros((out_channels,), jnp.float32)
    return params


# ----------------------------------------------------------------------------
# Forward pass (matches EnhancedDenseNet.forward, eval-mode BN, dropout=0)
# ----------------------------------------------------------------------------
def densenet_forward(params, x_nchw, feature_vector):
    x = jnp.transpose(x_nchw.astype(jnp.float32), (0, 2, 3, 1))  # NCHW -> NHWC
    N, _, _, Cin = x.shape

    # --- stem: conv0 (7x7 s2, im2col) + norm0 + relu0 fused, then 3x3 s2 max
    s0, b0 = bn_scale_shift(params["norm0"])
    patches, H, W = _extract_conv_patches(x.astype(jnp.bfloat16), 7, 7, 2, 3)
    a0 = patches.reshape(N * H * W, 7 * 7 * Cin)
    y0 = fused_matmul(a0, params["conv0_w"].reshape(7 * 7 * Cin, -1),
                      epi_scale=s0, epi_shift=b0, epi_relu=True,
                      out_dtype=jnp.bfloat16)
    x4 = y0[:N * H * W].reshape(N, H, W, -1)            # padded channels are 0
    x4 = pool2d_s2(x4, k=3, pad=1, mode="max")
    H, W = x4.shape[1], x4.shape[2]
    channels = params["conv0_w"].shape[-1]

    # --- dense blocks (+ transitions): channel slab instead of concats
    slab, M = None, 0
    for block in params["blocks"]:
        layers = block["layers"]
        growth = layers[0]["conv2_w"].shape[-1]
        M = N * H * W
        Mp = _round_up(M, 16)
        Cslab = _round_up(channels + len(layers) * growth, 128)
        base = x4.reshape(M, x4.shape[-1])
        slab = jnp.pad(base, ((0, Mp - M), (0, Cslab - base.shape[1])))

        for layer in layers:
            s1, b1 = bn_scale_shift(layer["norm1"])
            s2, b2 = bn_scale_shift(layer["norm2"])
            w1 = layer["conv1_w"].reshape(channels, -1)
            # norm1+relu as prologue, norm2+relu as epilogue of the 1x1 conv;
            # only the first round_up(channels,128) slab columns are reduced.
            y1 = fused_matmul(slab, w1, pro_scale=s1, pro_shift=b1,
                              epi_scale=s2, epi_shift=b2, epi_relu=True,
                              out_dtype=jnp.bfloat16)
            y1 = y1[:M].reshape(N, H, W, y1.shape[-1])
            y2 = conv3x3(y1, layer["conv2_w"])          # direct, no im2col
            y2 = y2.reshape(M, y2.shape[-1])[:, :growth]
            y2 = jnp.pad(y2, ((0, Mp - M), (0, 0)))
            slab = lax.dynamic_update_slice(slab, y2, (0, channels))
            channels += growth

        if "trans_conv_w" in block:
            st, bt = bn_scale_shift(block["trans_norm"])
            wt = block["trans_conv_w"].reshape(channels, -1)
            t = fused_matmul(slab, wt, pro_scale=st, pro_shift=bt,
                             out_dtype=jnp.bfloat16)
            t4 = t[:M].reshape(N, H, W, t.shape[-1])
            x4 = pool2d_s2(t4, k=2, pad=0, mode="mean")
            H, W = x4.shape[1], x4.shape[2]
            channels = wt.shape[-1]

    # --- norm5 + class ReLU + adaptive avg pool + flatten
    s5, b5 = bn_scale_shift(params["norm5"])
    feat = gap_bn_relu(slab[:M].reshape(N, H * W, slab.shape[-1]), s5, b5)
    feat = feat[:, :channels]

    # --- concat feature vector + final linear (bias-only epilogue)
    z = jnp.concatenate([feat, feature_vector.astype(jnp.float32)], axis=1)
    out = fused_matmul(z, params["final_w"], epi_shift=params["final_b"])
    return out[:N, :params["final_w"].shape[-1]]


if __name__ == "__main__":
    SPATIAL = 2
    IN_CH, OUT_CH = 4, 5
    INIT_FEATS, GROWTH, BLOCKS, BN_SIZE = 16, 8, (2, 2), 2
    FEATURE_DIM = 3
    B, H, W = 2, 16, 16

    key = jax.random.PRNGKey(0)
    kx, kf, kp = jax.random.split(key, 3)
    x = jax.random.normal(kx, (B, IN_CH, H, W), jnp.float32)      # NCHW input
    feature_vector = jax.random.normal(kf, (B, FEATURE_DIM), jnp.float32)

    params = init_params(kp, IN_CH, OUT_CH, INIT_FEATS, GROWTH,
                         BLOCKS, BN_SIZE, FEATURE_DIM)

    fwd = jax.jit(densenet_forward)
    out = fwd(params, x, feature_vector)
    jax.block_until_ready(out)
    assert out.shape == (B, OUT_CH), out.shape
    assert out.dtype == jnp.float32
    print("KERNEL_OK")
</pallas_src>

<mosaic_0001>
module attributes {stable_mosaic.version = 11 : i64} {
  func.func @_mm_kernel(%arg0: i32, %arg1: i32, %arg2: memref<128x256xbf16, #tpu.memory_space<vmem>>, %arg3: memref<256x128xbf16, #tpu.memory_space<vmem>>, %arg4: memref<1x128xf32, #tpu.memory_space<vmem>>, %arg5: memref<1x128xf32, #tpu.memory_space<vmem>>, %arg6: memref<128x128xbf16, #tpu.memory_space<vmem>>) attributes {dimension_semantics = [#tpu.dimension_semantics<parallel>, #tpu.dimension_semantics<parallel>], iteration_bounds = array<i64: 1, 1>, scalar_prefetch = 0 : i64, scratch_operands = 0 : i64, tpu.core_type = #tpu.core_type<tc>, window_params = [{transform_indices = @transform_0, window_bounds = array<i64: 128, 256>}, {transform_indices = @transform_1, window_bounds = array<i64: 256, 128>}, {transform_indices = @transform_2, window_bounds = array<i64: 1, 128>}, {transform_indices = @transform_3, window_bounds = array<i64: 1, 128>}, {transform_indices = @transform_4, window_bounds = array<i64: 128, 128>}]} {
    %c0 = arith.constant 0 : index
    %c0_0 = arith.constant 0 : index
    %0 = vector.load %arg2[%c0, %c0_0] : memref<128x256xbf16, #tpu.memory_space<vmem>>, vector<128x256xbf16>
    %c0_1 = arith.constant 0 : index
    %c0_2 = arith.constant 0 : index
    %1 = vector.load %arg3[%c0_1, %c0_2] : memref<256x128xbf16, #tpu.memory_space<vmem>>, vector<256x128xbf16>
    %cst = arith.constant dense<0.000000e+00> : vector<128x128xf32>
    %2 = tpu.matmul %0, %1, %cst {dimension_numbers = #tpu.dot_dimension_numbers<[1], [0], [0], [1], [0, 0, 1, 1], [], []>} : vector<128x256xbf16>, vector<256x128xbf16>, vector<128x128xf32> -> vector<128x128xf32>
    %c0_3 = arith.constant 0 : index
    %c0_4 = arith.constant 0 : index
    %3 = vector.load %arg4[%c0_3, %c0_4] : memref<1x128xf32, #tpu.memory_space<vmem>>, vector<1x128xf32>
    %4 = vector.broadcast %3 : vector<1x128xf32> to vector<128x128xf32>
    %5 = arith.mulf %2, %4 : vector<128x128xf32>
    %c0_5 = arith.constant 0 : index
    %c0_6 = arith.constant 0 : index
    %6 = vector.load %arg5[%c0_5, %c0_6] : memref<1x128xf32, #tpu.memory_space<vmem>>, vector<1x128xf32>
    %7 = vector.broadcast %6 : vector<1x128xf32> to vector<128x128xf32>
    %8 = arith.addf %5, %7 : vector<128x128xf32>
    %cst_7 = arith.constant 0.000000e+00 : f32
    %9 = vector.broadcast %cst_7 : f32 to vector<128x128xf32>
    %10 = arith.maximumf %8, %9 : vector<128x128xf32>
    %11 = arith.truncf %10 : vector<128x128xf32> to vector<128x128xbf16>
    %c0_8 = arith.constant 0 : index
    %c0_9 = arith.constant 0 : index
    %12 = vector.load %arg6[%c0_8, %c0_9] : memref<128x128xbf16, #tpu.memory_space<vmem>>, vector<128x128xbf16>
    tpu.vector_store %arg6[%c0_8, %c0_9], %11 {strides = array<i32>} : memref<128x128xbf16, #tpu.memory_space<vmem>>, vector<128x128xbf16>,
    return
  }
  func.func @transform_0(%arg0: i32, %arg1: i32) -> (i32, i32) {
    %c0_i32 = arith.constant 0 : i32
    %c0_i32_0 = arith.constant 0 : i32
    return %arg0, %c0_i32 : i32, i32
  }
  func.func @transform_1(%arg0: i32, %arg1: i32) -> (i32, i32) {
    %c0_i32 = arith.constant 0 : i32
    %c0_i32_0 = arith.constant 0 : i32
    return %c0_i32, %arg1 : i32, i32
  }
  func.func @transform_2(%arg0: i32, %arg1: i32) -> (i32, i32) {
    %c0_i32 = arith.constant 0 : i32
    %c0_i32_0 = arith.constant 0 : i32
    return %c0_i32, %arg1 : i32, i32
  }
  func.func @transform_3(%arg0: i32, %arg1: i32) -> (i32, i32) {
    %c0_i32 = arith.constant 0 : i32
    %c0_i32_0 = arith.constant 0 : i32
    return %c0_i32, %arg1 : i32, i32
  }
  func.func @transform_4(%arg0: i32, %arg1: i32) -> (i32, i32) {
    %c0_i32 = arith.constant 0 : i32
    return %arg0, %arg1 : i32, i32
  }
}

module attributes {stable_mosaic.version = 11 : i64} {
  func.func @_pool_kernel(%arg0: i32, %arg1: memref<1x10x5x256xbf16, #tpu.memory_space<vmem>>, %arg2: memref<1x4x4x128xbf16, #tpu.memory_space<vmem>>) attributes {dimension_semantics = [#tpu.dimension_semantics<parallel>], iteration_bounds = array<i64: 2>, scalar_prefetch = 0 : i64, scratch_operands = 0 : i64, tpu.core_type = #tpu.core_type<tc>, window_params = [{transform_indices = @transform_0, window_bounds = array<i64: 1, 10, 5, 256>}, {transform_indices = @transform_1, window_bounds = array<i64: 1, 4, 4, 128>}]} {
    %c0_i32 = arith.constant 0 : i32
    %c4_i32 = arith.constant 4 : i32
    %0 = arith.addi %c0_i32, %c4_i32 : i32
    %c1_i32 = arith.constant 1 : i32
    scf.for %arg3 = %c0_i32 to %0 step %c1_i32  : i32 {
      %c2_i32 = arith.constant 2 : i32
      %1 = arith.muli %c2_i32, %arg3 : i32
      %c0_i32_1 = arith.constant 0 : i32
      %2 = arith.addi %1, %c0_i32_1 : i32
      %c0 = arith.constant 0 : index
      %3 = arith.index_cast %2 : i32 to index
      %c0_2 = arith.constant 0 : index
      %c0_3 = arith.constant 0 : index
      %4 = vector.load %arg1[%c0, %3, %c0_2, %c0_3] : memref<1x10x5x256xbf16, #tpu.memory_space<vmem>>, vector<1x1x4x128xbf16>
      %5 = vector.shape_cast %4 : vector<1x1x4x128xbf16> to vector<4x128xbf16>
      %6 = arith.extf %5 : vector<4x128xbf16> to vector<4x128xf32>
      %c2_i32_4 = arith.constant 2 : i32
      %7 = arith.muli %c2_i32_4, %arg3 : i32
      %c0_i32_5 = arith.constant 0 : i32
      %8 = arith.addi %7, %c0_i32_5 : i32
      %c0_6 = arith.constant 0 : index
      %9 = arith.index_cast %8 : i32 to index
      %c0_7 = arith.constant 0 : index
      %c128 = arith.constant 128 : index
      %10 = vector.load %arg1[%c0_6, %9, %c0_7, %c128] : memref<1x10x5x256xbf16, #tpu.memory_space<vmem>>, vector<1x1x4x128xbf16>
      %11 = vector.shape_cast %10 : vector<1x1x4x128xbf16> to vector<4x128xbf16>
      %12 = arith.extf %11 : vector<4x128xbf16> to vector<4x128xf32>
      %13 = arith.maximumf %6, %12 : vector<4x128xf32>
      %c2_i32_8 = arith.constant 2 : i32
      %14 = arith.muli %c2_i32_8, %arg3 : i32
      %c0_i32_9 = arith.constant 0 : i32
      %15 = arith.addi %14, %c0_i32_9 : i32
      %c0_10 = arith.constant 0 : index
      %16 = arith.index_cast %15 : i32 to index
      %c1 = arith.constant 1 : index
      %c0_11 = arith.constant 0 : index
      %17 = vector.load %arg1[%c0_10, %16, %c1, %c0_11] : memref<1x10x5x256xbf16, #tpu.memory_space<vmem>>, vector<1x1x4x128xbf16>
      %18 = vector.shape_cast %17 : vector<1x1x4x128xbf16> to vector<4x128xbf16>
      %19 = arith.extf %18 : vector<4x128xbf16> to vector<4x128xf32>
      %20 = arith.maximumf %13, %19 : vector<4x128xf32>
      %c2_i32_12 = arith.constant 2 : i32
      %21 = arith.muli %c2_i32_12, %arg3 : i32
      %c1_i32_13 = arith.constant 1 : i32
      %22 = arith.addi %21, %c1_i32_13 : i32
      %c0_14 = arith.constant 0 : index
      %23 = arith.index_cast %22 : i32 to index
      %c0_15 = arith.constant 0 : index
      %c0_16 = arith.constant 0 : index
      %24 = vector.load %arg1[%c0_14, %23, %c0_15, %c0_16] : memref<1x10x5x256xbf16, #tpu.memory_space<vmem>>, vector<1x1x4x128xbf16>
      %25 = vector.shape_cast %24 : vector<1x1x4x128xbf16> to vector<4x128xbf16>
      %26 = arith.extf %25 : vector<4x128xbf16> to vector<4x128xf32>
      %27 = arith.maximumf %20, %26 : vector<4x128xf32>
      %c2_i32_17 = arith.constant 2 : i32
      %28 = arith.muli %c2_i32_17, %arg3 : i32
      %c1_i32_18 = arith.constant 1 : i32
      %29 = arith.addi %28, %c1_i32_18 : i32
      %c0_19 = arith.constant 0 : index
      %30 = arith.index_cast %29 : i32 to index
      %c0_20 = arith.constant 0 : index
      %c128_21 = arith.constant 128 : index
      %31 = vector.load %arg1[%c0_19, %30, %c0_20, %c128_21] : memref<1x10x5x256xbf16, #tpu.memory_space<vmem>>, vector<1x1x4x128xbf16>
      %32 = vector.shape_cast %31 : vector<1x1x4x128xbf16> to vector<4x128xbf16>
      %33 = arith.extf %32 : vector<4x128xbf16> to vector<4x128xf32>
      %34 = arith.maximumf %27, %33 : vector<4x128xf32>
      %c2_i32_22 = arith.constant 2 : i32
      %35 = arith.muli %c2_i32_22, %arg3 : i32
      %c1_i32_23 = arith.constant 1 : i32
      %36 = arith.addi %35, %c1_i32_23 : i32
      %c0_24 = arith.constant 0 : index
      %37 = arith.index_cast %36 : i32 to index
      %c1_25 = arith.constant 1 : index
      %c0_26 = arith.constant 0 : index
      %38 = vector.load %arg1[%c0_24, %37, %c1_25, %c0_26] : memref<1x10x5x256xbf16, #tpu.memory_space<vmem>>, vector<1x1x4x128xbf16>
      %39 = vector.shape_cast %38 : vector<1x1x4x128xbf16> to vector<4x128xbf16>
      %40 = arith.extf %39 : vector<4x128xbf16> to vector<4x128xf32>
      %41 = arith.maximumf %34, %40 : vector<4x128xf32>
      %c2_i32_27 = arith.constant 2 : i32
      %42 = arith.muli %c2_i32_27, %arg3 : i32
      %c2_i32_28 = arith.constant 2 : i32
      %43 = arith.addi %42, %c2_i32_28 : i32
      %c0_29 = arith.constant 0 : index
      %44 = arith.index_cast %43 : i32 to index
      %c0_30 = arith.constant 0 : index
      %c0_31 = arith.constant 0 : index
      %45 = vector.load %arg1[%c0_29, %44, %c0_30, %c0_31] : memref<1x10x5x256xbf16, #tpu.memory_space<vmem>>, vector<1x1x4x128xbf16>
      %46 = vector.shape_cast %45 : vector<1x1x4x128xbf16> to vector<4x128xbf16>
      %47 = arith.extf %46 : vector<4x128xbf16> to vector<4x128xf32>
      %48 = arith.maximumf %41, %47 : vector<4x128xf32>
      %c2_i32_32 = arith.constant 2 : i32
      %49 = arith.muli %c2_i32_32, %arg3 : i32
      %c2_i32_33 = arith.constant 2 : i32
      %50 = arith.addi %49, %c2_i32_33 : i32
      %c0_34 = arith.constant 0 : index
      %51 = arith.index_cast %50 : i32 to index
      %c0_35 = arith.constant 0 : index
      %c128_36 = arith.constant 128 : index
      %52 = vector.load %arg1[%c0_34, %51, %c0_35, %c128_36] : memref<1x10x5x256xbf16, #tpu.memory_space<vmem>>, vector<1x1x4x128xbf16>
      %53 = vector.shape_cast %52 : vector<1x1x4x128xbf16> to vector<4x128xbf16>
      %54 = arith.extf %53 : vector<4x128xbf16> to vector<4x128xf32>
      %55 = arith.maximumf %48, %54 : vector<4x128xf32>
      %c2_i32_37 = arith.constant 2 : i32
      %56 = arith.muli %c2_i32_37, %arg3 : i32
      %c2_i32_38 = arith.constant 2 : i32
      %57 = arith.addi %56, %c2_i32_38 : i32
      %c0_39 = arith.constant 0 : index
      %58 = arith.index_cast %57 : i32 to index
      %c1_40 = arith.constant 1 : index
      %c0_41 = arith.constant 0 : index
      %59 = vector.load %arg1[%c0_39, %58, %c1_40, %c0_41] : memref<1x10x5x256xbf16, #tpu.memory_space<vmem>>, vector<1x1x4x128xbf16>
      %60 = vector.shape_cast %59 : vector<1x1x4x128xbf16> to vector<4x128xbf16>
      %61 = arith.extf %60 : vector<4x128xbf16> to vector<4x128xf32>
      %62 = arith.maximumf %55, %61 : vector<4x128xf32>
      %63 = arith.truncf %62 : vector<4x128xf32> to vector<4x128xbf16>
      %c0_42 = arith.constant 0 : index
      %64 = arith.index_cast %arg3 : i32 to index
      %c0_43 = arith.constant 0 : index
      %c0_44 = arith.constant 0 : index
      %65 = vector.load %arg2[%c0_42, %64, %c0_43, %c0_44] : memref<1x4x4x128xbf16, #tpu.memory_space<vmem>>, vector<1x1x4x128xbf16>
      %66 = vector.shape_cast %65 : vector<1x1x4x128xbf16> to vector<4x128xbf16>
      %67 = vector.shape_cast %63 : vector<4x128xbf16> to vector<1x1x4x128xbf16>
      tpu.vector_store %arg2[%c0_42, %64, %c0_43, %c0_44], %67 {strides = array<i32>} : memref<1x4x4x128xbf16, #tpu.memory_space<vmem>>, vector<1x1x4x128xbf16>,
    }
    %c4_i32_0 = arith.constant 4 : i32
    return
  }
  func.func @transform_0(%arg0: i32) -> (i32, i32, i32, i32) {
    %c0_i32 = arith.constant 0 : i32
    %c0_i32_0 = arith.constant 0 : i32
    %c0_i32_1 = arith.constant 0 : i32
    %c0_i32_2 = arith.constant 0 : i32
    return %arg0, %c0_i32, %c0_i32_0, %c0_i32_1 : i32, i32, i32, i32
  }
  func.func @transform_1(%arg0: i32) -> (i32, i32, i32, i32) {
    %c0_i32 = arith.constant 0 : i32
    %c0_i32_0 = arith.constant 0 : i32
    %c0_i32_1 = arith.constant 0 : i32
    %c0_i32_2 = arith.constant 0 : i32
    return %arg0, %c0_i32, %c0_i32_0, %c0_i32_1 : i32, i32, i32, i32
  }
}

module attributes {stable_mosaic.version = 11 : i64} {
  func.func @_mm_kernel(%arg0: i32, %arg1: i32, %arg2: memref<32x128xbf16, #tpu.memory_space<vmem>>, %arg3: memref<128x128xbf16, #tpu.memory_space<vmem>>, %arg4: memref<1x128xf32, #tpu.memory_space<vmem>>, %arg5: memref<1x128xf32, #tpu.memory_space<vmem>>, %arg6: memref<1x128xf32, #tpu.memory_space<vmem>>, %arg7: memref<1x128xf32, #tpu.memory_space<vmem>>, %arg8: memref<32x128xbf16, #tpu.memory_space<vmem>>) attributes {dimension_semantics = [#tpu.dimension_semantics<parallel>, #tpu.dimension_semantics<parallel>], iteration_bounds = array<i64: 1, 1>, scalar_prefetch = 0 : i64, scratch_operands = 0 : i64, tpu.core_type = #tpu.core_type<tc>, window_params = [{transform_indices = @transform_0, window_bounds = array<i64: 32, 128>}, {transform_indices = @transform_1, window_bounds = array<i64: 128, 128>}, {pipeline_mode = #tpu.pipeline_mode<synchronous>, transform_indices = @transform_2, window_bounds = array<i64: 1, 128>}, {pipeline_mode = #tpu.pipeline_mode<synchronous>, transform_indices = @transform_3, window_bounds = array<i64: 1, 128>}, {transform_indices = @transform_4, window_bounds = array<i64: 1, 128>}, {transform_indices = @transform_5, window_bounds = array<i64: 1, 128>}, {transform_indices = @transform_6, window_bounds = array<i64: 32, 128>}]} {
    %c0 = arith.constant 0 : index
    %c0_0 = arith.constant 0 : index
    %0 = vector.load %arg2[%c0, %c0_0] : memref<32x128xbf16, #tpu.memory_space<vmem>>, vector<32x128xbf16>
    %1 = arith.extf %0 : vector<32x128xbf16> to vector<32x128xf32>
    %c0_1 = arith.constant 0 : index
    %c0_2 = arith.constant 0 : index
    %2 = vector.load %arg4[%c0_1, %c0_2] : memref<1x128xf32, #tpu.memory_space<vmem>>, vector<1x128xf32>
    %3 = vector.broadcast %2 : vector<1x128xf32> to vector<32x128xf32>
    %4 = arith.mulf %1, %3 : vector<32x128xf32>
    %c0_3 = arith.constant 0 : index
    %c0_4 = arith.constant 0 : index
    %5 = vector.load %arg5[%c0_3, %c0_4] : memref<1x128xf32, #tpu.memory_space<vmem>>, vector<1x128xf32>
    %6 = vector.broadcast %5 : vector<1x128xf32> to vector<32x128xf32>
    %7 = arith.addf %4, %6 : vector<32x128xf32>
    %cst = arith.constant 0.000000e+00 : f32
    %8 = vector.broadcast %cst : f32 to vector<32x128xf32>
    %9 = arith.maximumf %7, %8 : vector<32x128xf32>
    %10 = arith.truncf %9 : vector<32x128xf32> to vector<32x128xbf16>
    %c0_5 = arith.constant 0 : index
    %c0_6 = arith.constant 0 : index
    %11 = vector.load %arg3[%c0_5, %c0_6] : memref<128x128xbf16, #tpu.memory_space<vmem>>, vector<128x128xbf16>
    %cst_7 = arith.constant dense<0.000000e+00> : vector<32x128xf32>
    %12 = tpu.matmul %10, %11, %cst_7 {dimension_numbers = #tpu.dot_dimension_numbers<[1], [0], [0], [1], [0, 0, 1, 1], [], []>} : vector<32x128xbf16>, vector<128x128xbf16>, vector<32x128xf32> -> vector<32x128xf32>
    %c0_8 = arith.constant 0 : index
    %c0_9 = arith.constant 0 : index
    %13 = vector.load %arg6[%c0_8, %c0_9] : memref<1x128xf32, #tpu.memory_space<vmem>>, vector<1x128xf32>
    %14 = vector.broadcast %13 : vector<1x128xf32> to vector<32x128xf32>
    %15 = arith.mulf %12, %14 : vector<32x128xf32>
    %c0_10 = arith.constant 0 : index
    %c0_11 = arith.constant 0 : index
    %16 = vector.load %arg7[%c0_10, %c0_11] : memref<1x128xf32, #tpu.memory_space<vmem>>, vector<1x128xf32>
    %17 = vector.broadcast %16 : vector<1x128xf32> to vector<32x128xf32>
    %18 = arith.addf %15, %17 : vector<32x128xf32>
    %cst_12 = arith.constant 0.000000e+00 : f32
    %19 = vector.broadcast %cst_12 : f32 to vector<32x128xf32>
    %20 = arith.maximumf %18, %19 : vector<32x128xf32>
    %21 = arith.truncf %20 : vector<32x128xf32> to vector<32x128xbf16>
    %c0_13 = arith.constant 0 : index
    %c0_14 = arith.constant 0 : index
    %22 = vector.load %arg8[%c0_13, %c0_14] : memref<32x128xbf16, #tpu.memory_space<vmem>>, vector<32x128xbf16>
    tpu.vector_store %arg8[%c0_13, %c0_14], %21 {strides = array<i32>} : memref<32x128xbf16, #tpu.memory_space<vmem>>, vector<32x128xbf16>,
    return
  }
  func.func @transform_0(%arg0: i32, %arg1: i32) -> (i32, i32) {
    %c0_i32 = arith.constant 0 : i32
    %c0_i32_0 = arith.constant 0 : i32
    return %arg0, %c0_i32 : i32, i32
  }
  func.func @transform_1(%arg0: i32, %arg1: i32) -> (i32, i32) {
    %c0_i32 = arith.constant 0 : i32
    %c0_i32_0 = arith.constant 0 : i32
    return %c0_i32, %arg1 : i32, i32
  }
  func.func @transform_2(%arg0: i32, %arg1: i32) -> (i32, i32) {
    %c0_i32 = arith.constant 0 : i32
    %c0_i32_0 = arith.constant 0 : i32
    %c0_i32_1 = arith.constant 0 : i32
    return %c0_i32, %c0_i32_0 : i32, i32
  }
  func.func @transform_3(%arg0: i32, %arg1: i32) -> (i32, i32) {
    %c0_i32 = arith.constant 0 : i32
    %c0_i32_0 = arith.constant 0 : i32
    %c0_i32_1 = arith.constant 0 : i32
    return %c0_i32, %c0_i32_0 : i32, i32
  }
  func.func @transform_4(%arg0: i32, %arg1: i32) -> (i32, i32) {
    %c0_i32 = arith.constant 0 : i32
    %c0_i32_0 = arith.constant 0 : i32
    return %c0_i32, %arg1 : i32, i32
  }
  func.func @transform_5(%arg0: i32, %arg1: i32) -> (i32, i32) {
    %c0_i32 = arith.constant 0 : i32
    %c0_i32_0 = arith.constant 0 : i32
    return %c0_i32, %arg1 : i32, i32
  }
  func.func @transform_6(%arg0: i32, %arg1: i32) -> (i32, i32) {
    %c0_i32 = arith.constant 0 : i32
    return %arg0, %arg1 : i32, i32
  }
}

module attributes {stable_mosaic.version = 11 : i64} {
  func.func @_conv3x3_kernel(%arg0: i32, %arg1: i32, %arg2: memref<1x6x6x128xbf16, #tpu.memory_space<vmem>>, %arg3: memref<3x3x128x128xbf16, #tpu.memory_space<vmem>>, %arg4: memref<1x4x4x128xbf16, #tpu.memory_space<vmem>>) attributes {dimension_semantics = [#tpu.dimension_semantics<parallel>, #tpu.dimension_semantics<parallel>], iteration_bounds = array<i64: 2, 1>, scalar_prefetch = 0 : i64, scratch_operands = 0 : i64, tpu.core_type = #tpu.core_type<tc>, window_params = [{transform_indices = @transform_0, window_bounds = array<i64: 1, 6, 6, 128>}, {transform_indices = @transform_1, window_bounds = array<i64: 3, 3, 128, 128>}, {transform_indices = @transform_2, window_bounds = array<i64: 1, 4, 4, 128>}]} {
    %c0_i32 = arith.constant 0 : i32
    %c4_i32 = arith.constant 4 : i32
    %0 = arith.addi %c0_i32, %c4_i32 : i32
    %c1_i32 = arith.constant 1 : i32
    scf.for %arg5 = %c0_i32 to %0 step %c1_i32  : i32 {
      %cst = arith.constant 0.000000e+00 : f32
      %1 = vector.broadcast %cst : f32 to vector<4x128xf32>
      %c0_i32_1 = arith.constant 0 : i32
      %2 = arith.addi %arg5, %c0_i32_1 : i32
      %c0 = arith.constant 0 : index
      %3 = arith.index_cast %2 : i32 to index
      %c0_2 = arith.constant 0 : index
      %c0_3 = arith.constant 0 : index
      %4 = vector.load %arg2[%c0, %3, %c0_2, %c0_3] : memref<1x6x6x128xbf16, #tpu.memory_space<vmem>>, vector<1x1x4x128xbf16>
      %5 = vector.shape_cast %4 : vector<1x1x4x128xbf16> to vector<4x128xbf16>
      %c0_4 = arith.constant 0 : index
      %c0_5 = arith.constant 0 : index
      %c0_6 = arith.constant 0 : index
      %c0_7 = arith.constant 0 : index
      %6 = vector.load %arg3[%c0_4, %c0_5, %c0_6, %c0_7] : memref<3x3x128x128xbf16, #tpu.memory_space<vmem>>, vector<1x1x128x128xbf16>
      %7 = vector.shape_cast %6 : vector<1x1x128x128xbf16> to vector<128x128xbf16>
      %cst_8 = arith.constant dense<0.000000e+00> : vector<4x128xf32>
      %8 = tpu.matmul %5, %7, %cst_8 {dimension_numbers = #tpu.dot_dimension_numbers<[1], [0], [0], [1], [0, 0, 1, 1], [], []>} : vector<4x128xbf16>, vector<128x128xbf16>, vector<4x128xf32> -> vector<4x128xf32>
      %9 = arith.addf %1, %8 : vector<4x128xf32>
      %c0_i32_9 = arith.constant 0 : i32
      %10 = arith.addi %arg5, %c0_i32_9 : i32
      %c0_10 = arith.constant 0 : index
      %11 = arith.index_cast %10 : i32 to index
      %c1 = arith.constant 1 : index
      %c0_11 = arith.constant 0 : index
      %12 = vector.load %arg2[%c0_10, %11, %c1, %c0_11] : memref<1x6x6x128xbf16, #tpu.memory_space<vmem>>, vector<1x1x4x128xbf16>
      %13 = vector.shape_cast %12 : vector<1x1x4x128xbf16> to vector<4x128xbf16>
      %c0_12 = arith.constant 0 : index
      %c1_13 = arith.constant 1 : index
      %c0_14 = arith.constant 0 : index
      %c0_15 = arith.constant 0 : index
      %14 = vector.load %arg3[%c0_12, %c1_13, %c0_14, %c0_15] : memref<3x3x128x128xbf16, #tpu.memory_space<vmem>>, vector<1x1x128x128xbf16>
      %15 = vector.shape_cast %14 : vector<1x1x128x128xbf16> to vector<128x128xbf16>
      %cst_16 = arith.constant dense<0.000000e+00> : vector<4x128xf32>
      %16 = tpu.matmul %13, %15, %cst_16 {dimension_numbers = #tpu.dot_dimension_numbers<[1], [0], [0], [1], [0, 0, 1, 1], [], []>} : vector<4x128xbf16>, vector<128x128xbf16>, vector<4x128xf32> -> vector<4x128xf32>
      %17 = arith.addf %9, %16 : vector<4x128xf32>
      %c0_i32_17 = arith.constant 0 : i32
      %18 = arith.addi %arg5, %c0_i32_17 : i32
      %c0_18 = arith.constant 0 : index
      %19 = arith.index_cast %18 : i32 to index
      %c2 = arith.constant 2 : index
      %c0_19 = arith.constant 0 : index
      %20 = vector.load %arg2[%c0_18, %19, %c2, %c0_19] : memref<1x6x6x128xbf16, #tpu.memory_space<vmem>>, vector<1x1x4x128xbf16>
      %21 = vector.shape_cast %20 : vector<1x1x4x128xbf16> to vector<4x128xbf16>
      %c0_20 = arith.constant 0 : index
      %c2_21 = arith.constant 2 : index
      %c0_22 = arith.constant 0 : index
      %c0_23 = arith.constant 0 : index
      %22 = vector.load %arg3[%c0_20, %c2_21, %c0_22, %c0_23] : memref<3x3x128x128xbf16, #tpu.memory_space<vmem>>, vector<1x1x128x128xbf16>
      %23 = vector.shape_cast %22 : vector<1x1x128x128xbf16> to vector<128x128xbf16>
      %cst_24 = arith.constant dense<0.000000e+00> : vector<4x128xf32>
      %24 = tpu.matmul %21, %23, %cst_24 {dimension_numbers = #tpu.dot_dimension_numbers<[1], [0], [0], [1], [0, 0, 1, 1], [], []>} : vector<4x128xbf16>, vector<128x128xbf16>, vector<4x128xf32> -> vector<4x128xf32>
      %25 = arith.addf %17, %24 : vector<4x128xf32>
      %c1_i32_25 = arith.constant 1 : i32
      %26 = arith.addi %arg5, %c1_i32_25 : i32
      %c0_26 = arith.constant 0 : index
      %27 = arith.index_cast %26 : i32 to index
      %c0_27 = arith.constant 0 : index
      %c0_28 = arith.constant 0 : index
      %28 = vector.load %arg2[%c0_26, %27, %c0_27, %c0_28] : memref<1x6x6x128xbf16, #tpu.memory_space<vmem>>, vector<1x1x4x128xbf16>
      %29 = vector.shape_cast %28 : vector<1x1x4x128xbf16> to vector<4x128xbf16>
      %c1_29 = arith.constant 1 : index
      %c0_30 = arith.constant 0 : index
      %c0_31 = arith.constant 0 : index
      %c0_32 = arith.constant 0 : index
      %30 = vector.load %arg3[%c1_29, %c0_30, %c0_31, %c0_32] : memref<3x3x128x128xbf16, #tpu.memory_space<vmem>>, vector<1x1x128x128xbf16>
      %31 = vector.shape_cast %30 : vector<1x1x128x128xbf16> to vector<128x128xbf16>
      %cst_33 = arith.constant dense<0.000000e+00> : vector<4x128xf32>
      %32 = tpu.matmul %29, %31, %cst_33 {dimension_numbers = #tpu.dot_dimension_numbers<[1], [0], [0], [1], [0, 0, 1, 1], [], []>} : vector<4x128xbf16>, vector<128x128xbf16>, vector<4x128xf32> -> vector<4x128xf32>
      %33 = arith.addf %25, %32 : vector<4x128xf32>
      %c1_i32_34 = arith.constant 1 : i32
      %34 = arith.addi %arg5, %c1_i32_34 : i32
      %c0_35 = arith.constant 0 : index
      %35 = arith.index_cast %34 : i32 to index
      %c1_36 = arith.constant 1 : index
      %c0_37 = arith.constant 0 : index
      %36 = vector.load %arg2[%c0_35, %35, %c1_36, %c0_37] : memref<1x6x6x128xbf16, #tpu.memory_space<vmem>>, vector<1x1x4x128xbf16>
      %37 = vector.shape_cast %36 : vector<1x1x4x128xbf16> to vector<4x128xbf16>
      %c1_38 = arith.constant 1 : index
      %c1_39 = arith.constant 1 : index
      %c0_40 = arith.constant 0 : index
      %c0_41 = arith.constant 0 : index
      %38 = vector.load %arg3[%c1_38, %c1_39, %c0_40, %c0_41] : memref<3x3x128x128xbf16, #tpu.memory_space<vmem>>, vector<1x1x128x128xbf16>
      %39 = vector.shape_cast %38 : vector<1x1x128x128xbf16> to vector<128x128xbf16>
      %cst_42 = arith.constant dense<0.000000e+00> : vector<4x128xf32>
      %40 = tpu.matmul %37, %39, %cst_42 {dimension_numbers = #tpu.dot_dimension_numbers<[1], [0], [0], [1], [0, 0, 1, 1], [], []>} : vector<4x128xbf16>, vector<128x128xbf16>, vector<4x128xf32> -> vector<4x128xf32>
      %41 = arith.addf %33, %40 : vector<4x128xf32>
      %c1_i32_43 = arith.constant 1 : i32
      %42 = arith.addi %arg5, %c1_i32_43 : i32
      %c0_44 = arith.constant 0 : index
      %43 = arith.index_cast %42 : i32 to index
      %c2_45 = arith.constant 2 : index
      %c0_46 = arith.constant 0 : index
      %44 = vector.load %arg2[%c0_44, %43, %c2_45, %c0_46] : memref<1x6x6x128xbf16, #tpu.memory_space<vmem>>, vector<1x1x4x128xbf16>
      %45 = vector.shape_cast %44 : vector<1x1x4x128xbf16> to vector<4x128xbf16>
      %c1_47 = arith.constant 1 : index
      %c2_48 = arith.constant 2 : index
      %c0_49 = arith.constant 0 : index
      %c0_50 = arith.constant 0 : index
      %46 = vector.load %arg3[%c1_47, %c2_48, %c0_49, %c0_50] : memref<3x3x128x128xbf16, #tpu.memory_space<vmem>>, vector<1x1x128x128xbf16>
      %47 = vector.shape_cast %46 : vector<1x1x128x128xbf16> to vector<128x128xbf16>
      %cst_51 = arith.constant dense<0.000000e+00> : vector<4x128xf32>
      %48 = tpu.matmul %45, %47, %cst_51 {dimension_numbers = #tpu.dot_dimension_numbers<[1], [0], [0], [1], [0, 0, 1, 1], [], []>} : vector<4x128xbf16>, vector<128x128xbf16>, vector<4x128xf32> -> vector<4x128xf32>
      %49 = arith.addf %41, %48 : vector<4x128xf32>
      %c2_i32 = arith.constant 2 : i32
      %50 = arith.addi %arg5, %c2_i32 : i32
      %c0_52 = arith.constant 0 : index
      %51 = arith.index_cast %50 : i32 to index
      %c0_53 = arith.constant 0 : index
      %c0_54 = arith.constant 0 : index
      %52 = vector.load %arg2[%c0_52, %51, %c0_53, %c0_54] : memref<1x6x6x128xbf16, #tpu.memory_space<vmem>>, vector<1x1x4x128xbf16>
      %53 = vector.shape_cast %52 : vector<1x1x4x128xbf16> to vector<4x128xbf16>
      %c2_55 = arith.constant 2 : index
      %c0_56 = arith.constant 0 : index
      %c0_57 = arith.constant 0 : index
      %c0_58 = arith.constant 0 : index
      %54 = vector.load %arg3[%c2_55, %c0_56, %c0_57, %c0_58] : memref<3x3x128x128xbf16, #tpu.memory_space<vmem>>, vector<1x1x128x128xbf16>
      %55 = vector.shape_cast %54 : vector<1x1x128x128xbf16> to vector<128x128xbf16>
      %cst_59 = arith.constant dense<0.000000e+00> : vector<4x128xf32>
      %56 = tpu.matmul %53, %55, %cst_59 {dimension_numbers = #tpu.dot_dimension_numbers<[1], [0], [0], [1], [0, 0, 1, 1], [], []>} : vector<4x128xbf16>, vector<128x128xbf16>, vector<4x128xf32> -> vector<4x128xf32>
      %57 = arith.addf %49, %56 : vector<4x128xf32>
      %c2_i32_60 = arith.constant 2 : i32
      %58 = arith.addi %arg5, %c2_i32_60 : i32
      %c0_61 = arith.constant 0 : index
      %59 = arith.index_cast %58 : i32 to index
      %c1_62 = arith.constant 1 : index
      %c0_63 = arith.constant 0 : index
      %60 = vector.load %arg2[%c0_61, %59, %c1_62, %c0_63] : memref<1x6x6x128xbf16, #tpu.memory_space<vmem>>, vector<1x1x4x128xbf16>
      %61 = vector.shape_cast %60 : vector<1x1x4x128xbf16> to vector<4x128xbf16>
      %c2_64 = arith.constant 2 : index
      %c1_65 = arith.constant 1 : index
      %c0_66 = arith.constant 0 : index
      %c0_67 = arith.constant 0 : index
      %62 = vector.load %arg3[%c2_64, %c1_65, %c0_66, %c0_67] : memref<3x3x128x128xbf16, #tpu.memory_space<vmem>>, vector<1x1x128x128xbf16>
      %63 = vector.shape_cast %62 : vector<1x1x128x128xbf16> to vector<128x128xbf16>
      %cst_68 = arith.constant dense<0.000000e+00> : vector<4x128xf32>
      %64 = tpu.matmul %61, %63, %cst_68 {dimension_numbers = #tpu.dot_dimension_numbers<[1], [0], [0], [1], [0, 0, 1, 1], [], []>} : vector<4x128xbf16>, vector<128x128xbf16>, vector<4x128xf32> -> vector<4x128xf32>
      %65 = arith.addf %57, %64 : vector<4x128xf32>
      %c2_i32_69 = arith.constant 2 : i32
      %66 = arith.addi %arg5, %c2_i32_69 : i32
      %c0_70 = arith.constant 0 : index
      %67 = arith.index_cast %66 : i32 to index
      %c2_71 = arith.constant 2 : index
      %c0_72 = arith.constant 0 : index
      %68 = vector.load %arg2[%c0_70, %67, %c2_71, %c0_72] : memref<1x6x6x128xbf16, #tpu.memory_space<vmem>>, vector<1x1x4x128xbf16>
      %69 = vector.shape_cast %68 : vector<1x1x4x128xbf16> to vector<4x128xbf16>
      %c2_73 = arith.constant 2 : index
      %c2_74 = arith.constant 2 : index
      %c0_75 = arith.constant 0 : index
      %c0_76 = arith.constant 0 : index
      %70 = vector.load %arg3[%c2_73, %c2_74, %c0_75, %c0_76] : memref<3x3x128x128xbf16, #tpu.memory_space<vmem>>, vector<1x1x128x128xbf16>
      %71 = vector.shape_cast %70 : vector<1x1x128x128xbf16> to vector<128x128xbf16>
      %cst_77 = arith.constant dense<0.000000e+00> : vector<4x128xf32>
      %72 = tpu.matmul %69, %71, %cst_77 {dimension_numbers = #tpu.dot_dimension_numbers<[1], [0], [0], [1], [0, 0, 1, 1], [], []>} : vector<4x128xbf16>, vector<128x128xbf16>, vector<4x128xf32> -> vector<4x128xf32>
      %73 = arith.addf %65, %72 : vector<4x128xf32>
      %74 = arith.truncf %73 : vector<4x128xf32> to vector<4x128xbf16>
      %c0_78 = arith.constant 0 : index
      %75 = arith.index_cast %arg5 : i32 to index
      %c0_79 = arith.constant 0 : index
      %c0_80 = arith.constant 0 : index
      %76 = vector.load %arg4[%c0_78, %75, %c0_79, %c0_80] : memref<1x4x4x128xbf16, #tpu.memory_space<vmem>>, vector<1x1x4x128xbf16>
      %77 = vector.shape_cast %76 : vector<1x1x4x128xbf16> to vector<4x128xbf16>
      %78 = vector.shape_cast %74 : vector<4x128xbf16> to vector<1x1x4x128xbf16>
      tpu.vector_store %arg4[%c0_78, %75, %c0_79, %c0_80], %78 {strides = array<i32>} : memref<1x4x4x128xbf16, #tpu.memory_space<vmem>>, vector<1x1x4x128xbf16>,
    }
    %c4_i32_0 = arith.constant 4 : i32
    return
  }
  func.func @transform_0(%arg0: i32, %arg1: i32) -> (i32, i32, i32, i32) {
    %c0_i32 = arith.constant 0 : i32
    %c0_i32_0 = arith.constant 0 : i32
    %c0_i32_1 = arith.constant 0 : i32
    %c0_i32_2 = arith.constant 0 : i32
    return %arg0, %c0_i32, %c0_i32_0, %c0_i32_1 : i32, i32, i32, i32
  }
  func.func @transform_1(%arg0: i32, %arg1: i32) -> (i32, i32, i32, i32) {
    %c0_i32 = arith.constant 0 : i32
    %c0_i32_0 = arith.constant 0 : i32
    %c0_i32_1 = arith.constant 0 : i32
    %c0_i32_2 = arith.constant 0 : i32
    return %c0_i32, %c0_i32_0, %c0_i32_1, %arg1 : i32, i32, i32, i32
  }
  func.func @transform_2(%arg0: i32, %arg1: i32) -> (i32, i32, i32, i32) {
    %c0_i32 = arith.constant 0 : i32
    %c0_i32_0 = arith.constant 0 : i32
    %c0_i32_1 = arith.constant 0 : i32
    return %arg0, %c0_i32, %c0_i32_0, %arg1 : i32, i32, i32, i32
  }
}

module attributes {stable_mosaic.version = 11 : i64} {
  func.func @_mm_kernel(%arg0: i32, %arg1: i32, %arg2: memref<32x128xbf16, #tpu.memory_space<vmem>>, %arg3: memref<128x128xbf16, #tpu.memory_space<vmem>>, %arg4: memref<1x128xf32, #tpu.memory_space<vmem>>, %arg5: memref<1x128xf32, #tpu.memory_space<vmem>>, %arg6: memref<32x128xbf16, #tpu.memory_space<vmem>>) attributes {dimension_semantics = [#tpu.dimension_semantics<parallel>, #tpu.dimension_semantics<parallel>], iteration_bounds = array<i64: 1, 1>, scalar_prefetch = 0 : i64, scratch_operands = 0 : i64, tpu.core_type = #tpu.core_type<tc>, window_params = [{transform_indices = @transform_0, window_bounds = array<i64: 32, 128>}, {transform_indices = @transform_1, window_bounds = array<i64: 128, 128>}, {pipeline_mode = #tpu.pipeline_mode<synchronous>, transform_indices = @transform_2, window_bounds = array<i64: 1, 128>}, {pipeline_mode = #tpu.pipeline_mode<synchronous>, transform_indices = @transform_3, window_bounds = array<i64: 1, 128>}, {transform_indices = @transform_4, window_bounds = array<i64: 32, 128>}]} {
    %c0 = arith.constant 0 : index
    %c0_0 = arith.constant 0 : index
    %0 = vector.load %arg2[%c0, %c0_0] : memref<32x128xbf16, #tpu.memory_space<vmem>>, vector<32x128xbf16>
    %1 = arith.extf %0 : vector<32x128xbf16> to vector<32x128xf32>
    %c0_1 = arith.constant 0 : index
    %c0_2 = arith.constant 0 : index
    %2 = vector.load %arg4[%c0_1, %c0_2] : memref<1x128xf32, #tpu.memory_space<vmem>>, vector<1x128xf32>
    %3 = vector.broadcast %2 : vector<1x128xf32> to vector<32x128xf32>
    %4 = arith.mulf %1, %3 : vector<32x128xf32>
    %c0_3 = arith.constant 0 : index
    %c0_4 = arith.constant 0 : index
    %5 = vector.load %arg5[%c0_3, %c0_4] : memref<1x128xf32, #tpu.memory_space<vmem>>, vector<1x128xf32>
    %6 = vector.broadcast %5 : vector<1x128xf32> to vector<32x128xf32>
    %7 = arith.addf %4, %6 : vector<32x128xf32>
    %cst = arith.constant 0.000000e+00 : f32
    %8 = vector.broadcast %cst : f32 to vector<32x128xf32>
    %9 = arith.maximumf %7, %8 : vector<32x128xf32>
    %10 = arith.truncf %9 : vector<32x128xf32> to vector<32x128xbf16>
    %c0_5 = arith.constant 0 : index
    %c0_6 = arith.constant 0 : index
    %11 = vector.load %arg3[%c0_5, %c0_6] : memref<128x128xbf16, #tpu.memory_space<vmem>>, vector<128x128xbf16>
    %cst_7 = arith.constant dense<0.000000e+00> : vector<32x128xf32>
    %12 = tpu.matmul %10, %11, %cst_7 {dimension_numbers = #tpu.dot_dimension_numbers<[1], [0], [0], [1], [0, 0, 1, 1], [], []>} : vector<32x128xbf16>, vector<128x128xbf16>, vector<32x128xf32> -> vector<32x128xf32>
    %13 = arith.truncf %12 : vector<32x128xf32> to vector<32x128xbf16>
    %c0_8 = arith.constant 0 : index
    %c0_9 = arith.constant 0 : index
    %14 = vector.load %arg6[%c0_8, %c0_9] : memref<32x128xbf16, #tpu.memory_space<vmem>>, vector<32x128xbf16>
    tpu.vector_store %arg6[%c0_8, %c0_9], %13 {strides = array<i32>} : memref<32x128xbf16, #tpu.memory_space<vmem>>, vector<32x128xbf16>,
    return
  }
  func.func @transform_0(%arg0: i32, %arg1: i32) -> (i32, i32) {
    %c0_i32 = arith.constant 0 : i32
    %c0_i32_0 = arith.constant 0 : i32
    return %arg0, %c0_i32 : i32, i32
  }
  func.func @transform_1(%arg0: i32, %arg1: i32) -> (i32, i32) {
    %c0_i32 = arith.constant 0 : i32
    %c0_i32_0 = arith.constant 0 : i32
    return %c0_i32, %arg1 : i32, i32
  }
  func.func @transform_2(%arg0: i32, %arg1: i32) -> (i32, i32) {
    %c0_i32 = arith.constant 0 : i32
    %c0_i32_0 = arith.constant 0 : i32
    %c0_i32_1 = arith.constant 0 : i32
    return %c0_i32, %c0_i32_0 : i32, i32
  }
  func.func @transform_3(%arg0: i32, %arg1: i32) -> (i32, i32) {
    %c0_i32 = arith.constant 0 : i32
    %c0_i32_0 = arith.constant 0 : i32
    %c0_i32_1 = arith.constant 0 : i32
    return %c0_i32, %c0_i32_0 : i32, i32
  }
  func.func @transform_4(%arg0: i32, %arg1: i32) -> (i32, i32) {
    %c0_i32 = arith.constant 0 : i32
    return %arg0, %arg1 : i32, i32
  }
}

module attributes {stable_mosaic.version = 11 : i64} {
  func.func @_pool_kernel(%arg0: i32, %arg1: memref<1x4x2x256xbf16, #tpu.memory_space<vmem>>, %arg2: memref<1x2x2x128xbf16, #tpu.memory_space<vmem>>) attributes {dimension_semantics = [#tpu.dimension_semantics<parallel>], iteration_bounds = array<i64: 2>, scalar_prefetch = 0 : i64, scratch_operands = 0 : i64, tpu.core_type = #tpu.core_type<tc>, window_params = [{transform_indices = @transform_0, window_bounds = array<i64: 1, 4, 2, 256>}, {transform_indices = @transform_1, window_bounds = array<i64: 1, 2, 2, 128>}]} {
    %c0_i32 = arith.constant 0 : i32
    %c2_i32 = arith.constant 2 : i32
    %0 = arith.addi %c0_i32, %c2_i32 : i32
    %c1_i32 = arith.constant 1 : i32
    scf.for %arg3 = %c0_i32 to %0 step %c1_i32  : i32 {
      %c2_i32_1 = arith.constant 2 : i32
      %1 = arith.muli %c2_i32_1, %arg3 : i32
      %c0_i32_2 = arith.constant 0 : i32
      %2 = arith.addi %1, %c0_i32_2 : i32
      %c0 = arith.constant 0 : index
      %3 = arith.index_cast %2 : i32 to index
      %c0_3 = arith.constant 0 : index
      %c0_4 = arith.constant 0 : index
      %4 = vector.load %arg1[%c0, %3, %c0_3, %c0_4] : memref<1x4x2x256xbf16, #tpu.memory_space<vmem>>, vector<1x1x2x128xbf16>
      %5 = vector.shape_cast %4 : vector<1x1x2x128xbf16> to vector<2x128xbf16>
      %6 = arith.extf %5 : vector<2x128xbf16> to vector<2x128xf32>
      %c2_i32_5 = arith.constant 2 : i32
      %7 = arith.muli %c2_i32_5, %arg3 : i32
      %c0_i32_6 = arith.constant 0 : i32
      %8 = arith.addi %7, %c0_i32_6 : i32
      %c0_7 = arith.constant 0 : index
      %9 = arith.index_cast %8 : i32 to index
      %c0_8 = arith.constant 0 : index
      %c128 = arith.constant 128 : index
      %10 = vector.load %arg1[%c0_7, %9, %c0_8, %c128] : memref<1x4x2x256xbf16, #tpu.memory_space<vmem>>, vector<1x1x2x128xbf16>
      %11 = vector.shape_cast %10 : vector<1x1x2x128xbf16> to vector<2x128xbf16>
      %12 = arith.extf %11 : vector<2x128xbf16> to vector<2x128xf32>
      %13 = arith.addf %6, %12 : vector<2x128xf32>
      %c2_i32_9 = arith.constant 2 : i32
      %14 = arith.muli %c2_i32_9, %arg3 : i32
      %c1_i32_10 = arith.constant 1 : i32
      %15 = arith.addi %14, %c1_i32_10 : i32
      %c0_11 = arith.constant 0 : index
      %16 = arith.index_cast %15 : i32 to index
      %c0_12 = arith.constant 0 : index
      %c0_13 = arith.constant 0 : index
      %17 = vector.load %arg1[%c0_11, %16, %c0_12, %c0_13] : memref<1x4x2x256xbf16, #tpu.memory_space<vmem>>, vector<1x1x2x128xbf16>
      %18 = vector.shape_cast %17 : vector<1x1x2x128xbf16> to vector<2x128xbf16>
      %19 = arith.extf %18 : vector<2x128xbf16> to vector<2x128xf32>
      %20 = arith.addf %13, %19 : vector<2x128xf32>
      %c2_i32_14 = arith.constant 2 : i32
      %21 = arith.muli %c2_i32_14, %arg3 : i32
      %c1_i32_15 = arith.constant 1 : i32
      %22 = arith.addi %21, %c1_i32_15 : i32
      %c0_16 = arith.constant 0 : index
      %23 = arith.index_cast %22 : i32 to index
      %c0_17 = arith.constant 0 : index
      %c128_18 = arith.constant 128 : index
      %24 = vector.load %arg1[%c0_16, %23, %c0_17, %c128_18] : memref<1x4x2x256xbf16, #tpu.memory_space<vmem>>, vector<1x1x2x128xbf16>
      %25 = vector.shape_cast %24 : vector<1x1x2x128xbf16> to vector<2x128xbf16>
      %26 = arith.extf %25 : vector<2x128xbf16> to vector<2x128xf32>
      %27 = arith.addf %20, %26 : vector<2x128xf32>
      %cst = arith.constant 2.500000e-01 : f32
      %28 = vector.broadcast %cst : f32 to vector<2x128xf32>
      %29 = arith.mulf %27, %28 : vector<2x128xf32>
      %30 = arith.truncf %29 : vector<2x128xf32> to vector<2x128xbf16>
      %c0_19 = arith.constant 0 : index
      %31 = arith.index_cast %arg3 : i32 to index
      %c0_20 = arith.constant 0 : index
      %c0_21 = arith.constant 0 : index
      %32 = vector.load %arg2[%c0_19, %31, %c0_20, %c0_21] : memref<1x2x2x128xbf16, #tpu.memory_space<vmem>>, vector<1x1x2x128xbf16>
      %33 = vector.shape_cast %32 : vector<1x1x2x128xbf16> to vector<2x128xbf16>
      %34 = vector.shape_cast %30 : vector<2x128xbf16> to vector<1x1x2x128xbf16>
      tpu.vector_store %arg2[%c0_19, %31, %c0_20, %c0_21], %34 {strides = array<i32>} : memref<1x2x2x128xbf16, #tpu.memory_space<vmem>>, vector<1x1x2x128xbf16>,
    }
    %c2_i32_0 = arith.constant 2 : i32
    return
  }
  func.func @transform_0(%arg0: i32) -> (i32, i32, i32, i32) {
    %c0_i32 = arith.constant 0 : i32
    %c0_i32_0 = arith.constant 0 : i32
    %c0_i32_1 = arith.constant 0 : i32
    %c0_i32_2 = arith.constant 0 : i32
    return %arg0, %c0_i32, %c0_i32_0, %c0_i32_1 : i32, i32, i32, i32
  }
  func.func @transform_1(%arg0: i32) -> (i32, i32, i32, i32) {
    %c0_i32 = arith.constant 0 : i32
    %c0_i32_0 = arith.constant 0 : i32
    %c0_i32_1 = arith.constant 0 : i32
    %c0_i32_2 = arith.constant 0 : i32
    return %arg0, %c0_i32, %c0_i32_0, %c0_i32_1 : i32, i32, i32, i32
  }
}

module attributes {stable_mosaic.version = 11 : i64} {
  func.func @_mm_kernel(%arg0: i32, %arg1: i32, %arg2: memref<16x128xbf16, #tpu.memory_space<vmem>>, %arg3: memref<128x128xbf16, #tpu.memory_space<vmem>>, %arg4: memref<1x128xf32, #tpu.memory_space<vmem>>, %arg5: memref<1x128xf32, #tpu.memory_space<vmem>>, %arg6: memref<1x128xf32, #tpu.memory_space<vmem>>, %arg7: memref<1x128xf32, #tpu.memory_space<vmem>>, %arg8: memref<16x128xbf16, #tpu.memory_space<vmem>>) attributes {dimension_semantics = [#tpu.dimension_semantics<parallel>, #tpu.dimension_semantics<parallel>], iteration_bounds = array<i64: 1, 1>, scalar_prefetch = 0 : i64, scratch_operands = 0 : i64, tpu.core_type = #tpu.core_type<tc>, window_params = [{transform_indices = @transform_0, window_bounds = array<i64: 16, 128>}, {transform_indices = @transform_1, window_bounds = array<i64: 128, 128>}, {pipeline_mode = #tpu.pipeline_mode<synchronous>, transform_indices = @transform_2, window_bounds = array<i64: 1, 128>}, {pipeline_mode = #tpu.pipeline_mode<synchronous>, transform_indices = @transform_3, window_bounds = array<i64: 1, 128>}, {transform_indices = @transform_4, window_bounds = array<i64: 1, 128>}, {transform_indices = @transform_5, window_bounds = array<i64: 1, 128>}, {transform_indices = @transform_6, window_bounds = array<i64: 16, 128>}]} {
    %c0 = arith.constant 0 : index
    %c0_0 = arith.constant 0 : index
    %0 = vector.load %arg2[%c0, %c0_0] : memref<16x128xbf16, #tpu.memory_space<vmem>>, vector<16x128xbf16>
    %1 = arith.extf %0 : vector<16x128xbf16> to vector<16x128xf32>
    %c0_1 = arith.constant 0 : index
    %c0_2 = arith.constant 0 : index
    %2 = vector.load %arg4[%c0_1, %c0_2] : memref<1x128xf32, #tpu.memory_space<vmem>>, vector<1x128xf32>
    %3 = vector.broadcast %2 : vector<1x128xf32> to vector<16x128xf32>
    %4 = arith.mulf %1, %3 : vector<16x128xf32>
    %c0_3 = arith.constant 0 : index
    %c0_4 = arith.constant 0 : index
    %5 = vector.load %arg5[%c0_3, %c0_4] : memref<1x128xf32, #tpu.memory_space<vmem>>, vector<1x128xf32>
    %6 = vector.broadcast %5 : vector<1x128xf32> to vector<16x128xf32>
    %7 = arith.addf %4, %6 : vector<16x128xf32>
    %cst = arith.constant 0.000000e+00 : f32
    %8 = vector.broadcast %cst : f32 to vector<16x128xf32>
    %9 = arith.maximumf %7, %8 : vector<16x128xf32>
    %10 = arith.truncf %9 : vector<16x128xf32> to vector<16x128xbf16>
    %c0_5 = arith.constant 0 : index
    %c0_6 = arith.constant 0 : index
    %11 = vector.load %arg3[%c0_5, %c0_6] : memref<128x128xbf16, #tpu.memory_space<vmem>>, vector<128x128xbf16>
    %cst_7 = arith.constant dense<0.000000e+00> : vector<16x128xf32>
    %12 = tpu.matmul %10, %11, %cst_7 {dimension_numbers = #tpu.dot_dimension_numbers<[1], [0], [0], [1], [0, 0, 1, 1], [], []>} : vector<16x128xbf16>, vector<128x128xbf16>, vector<16x128xf32> -> vector<16x128xf32>
    %c0_8 = arith.constant 0 : index
    %c0_9 = arith.constant 0 : index
    %13 = vector.load %arg6[%c0_8, %c0_9] : memref<1x128xf32, #tpu.memory_space<vmem>>, vector<1x128xf32>
    %14 = vector.broadcast %13 : vector<1x128xf32> to vector<16x128xf32>
    %15 = arith.mulf %12, %14 : vector<16x128xf32>
    %c0_10 = arith.constant 0 : index
    %c0_11 = arith.constant 0 : index
    %16 = vector.load %arg7[%c0_10, %c0_11] : memref<1x128xf32, #tpu.memory_space<vmem>>, vector<1x128xf32>
    %17 = vector.broadcast %16 : vector<1x128xf32> to vector<16x128xf32>
    %18 = arith.addf %15, %17 : vector<16x128xf32>
    %cst_12 = arith.constant 0.000000e+00 : f32
    %19 = vector.broadcast %cst_12 : f32 to vector<16x128xf32>
    %20 = arith.maximumf %18, %19 : vector<16x128xf32>
    %21 = arith.truncf %20 : vector<16x128xf32> to vector<16x128xbf16>
    %c0_13 = arith.constant 0 : index
    %c0_14 = arith.constant 0 : index
    %22 = vector.load %arg8[%c0_13, %c0_14] : memref<16x128xbf16, #tpu.memory_space<vmem>>, vector<16x128xbf16>
    tpu.vector_store %arg8[%c0_13, %c0_14], %21 {strides = array<i32>} : memref<16x128xbf16, #tpu.memory_space<vmem>>, vector<16x128xbf16>,
    return
  }
  func.func @transform_0(%arg0: i32, %arg1: i32) -> (i32, i32) {
    %c0_i32 = arith.constant 0 : i32
    %c0_i32_0 = arith.constant 0 : i32
    return %arg0, %c0_i32 : i32, i32
  }
  func.func @transform_1(%arg0: i32, %arg1: i32) -> (i32, i32) {
    %c0_i32 = arith.constant 0 : i32
    %c0_i32_0 = arith.constant 0 : i32
    return %c0_i32, %arg1 : i32, i32
  }
  func.func @transform_2(%arg0: i32, %arg1: i32) -> (i32, i32) {
    %c0_i32 = arith.constant 0 : i32
    %c0_i32_0 = arith.constant 0 : i32
    %c0_i32_1 = arith.constant 0 : i32
    return %c0_i32, %c0_i32_0 : i32, i32
  }
  func.func @transform_3(%arg0: i32, %arg1: i32) -> (i32, i32) {
    %c0_i32 = arith.constant 0 : i32
    %c0_i32_0 = arith.constant 0 : i32
    %c0_i32_1 = arith.constant 0 : i32
    return %c0_i32, %c0_i32_0 : i32, i32
  }
  func.func @transform_4(%arg0: i32, %arg1: i32) -> (i32, i32) {
    %c0_i32 = arith.constant 0 : i32
    %c0_i32_0 = arith.constant 0 : i32
    return %c0_i32, %arg1 : i32, i32
  }
  func.func @transform_5(%arg0: i32, %arg1: i32) -> (i32, i32) {
    %c0_i32 = arith.constant 0 : i32
    %c0_i32_0 = arith.constant 0 : i32
    return %c0_i32, %arg1 : i32, i32
  }
  func.func @transform_6(%arg0: i32, %arg1: i32) -> (i32, i32) {
    %c0_i32 = arith.constant 0 : i32
    return %arg0, %arg1 : i32, i32
  }
}

module attributes {stable_mosaic.version = 11 : i64} {
  func.func @_conv3x3_kernel(%arg0: i32, %arg1: i32, %arg2: memref<1x4x4x128xbf16, #tpu.memory_space<vmem>>, %arg3: memref<3x3x128x128xbf16, #tpu.memory_space<vmem>>, %arg4: memref<1x2x2x128xbf16, #tpu.memory_space<vmem>>) attributes {dimension_semantics = [#tpu.dimension_semantics<parallel>, #tpu.dimension_semantics<parallel>], iteration_bounds = array<i64: 2, 1>, scalar_prefetch = 0 : i64, scratch_operands = 0 : i64, tpu.core_type = #tpu.core_type<tc>, window_params = [{transform_indices = @transform_0, window_bounds = array<i64: 1, 4, 4, 128>}, {transform_indices = @transform_1, window_bounds = array<i64: 3, 3, 128, 128>}, {transform_indices = @transform_2, window_bounds = array<i64: 1, 2, 2, 128>}]} {
    %c0_i32 = arith.constant 0 : i32
    %c2_i32 = arith.constant 2 : i32
    %0 = arith.addi %c0_i32, %c2_i32 : i32
    %c1_i32 = arith.constant 1 : i32
    scf.for %arg5 = %c0_i32 to %0 step %c1_i32  : i32 {
      %cst = arith.constant 0.000000e+00 : f32
      %1 = vector.broadcast %cst : f32 to vector<2x128xf32>
      %c0_i32_1 = arith.constant 0 : i32
      %2 = arith.addi %arg5, %c0_i32_1 : i32
      %c0 = arith.constant 0 : index
      %3 = arith.index_cast %2 : i32 to index
      %c0_2 = arith.constant 0 : index
      %c0_3 = arith.constant 0 : index
      %4 = vector.load %arg2[%c0, %3, %c0_2, %c0_3] : memref<1x4x4x128xbf16, #tpu.memory_space<vmem>>, vector<1x1x2x128xbf16>
      %5 = vector.shape_cast %4 : vector<1x1x2x128xbf16> to vector<2x128xbf16>
      %c0_4 = arith.constant 0 : index
      %c0_5 = arith.constant 0 : index
      %c0_6 = arith.constant 0 : index
      %c0_7 = arith.constant 0 : index
      %6 = vector.load %arg3[%c0_4, %c0_5, %c0_6, %c0_7] : memref<3x3x128x128xbf16, #tpu.memory_space<vmem>>, vector<1x1x128x128xbf16>
      %7 = vector.shape_cast %6 : vector<1x1x128x128xbf16> to vector<128x128xbf16>
      %cst_8 = arith.constant dense<0.000000e+00> : vector<2x128xf32>
      %8 = tpu.matmul %5, %7, %cst_8 {dimension_numbers = #tpu.dot_dimension_numbers<[1], [0], [0], [1], [0, 0, 1, 1], [], []>} : vector<2x128xbf16>, vector<128x128xbf16>, vector<2x128xf32> -> vector<2x128xf32>
      %9 = arith.addf %1, %8 : vector<2x128xf32>
      %c0_i32_9 = arith.constant 0 : i32
      %10 = arith.addi %arg5, %c0_i32_9 : i32
      %c0_10 = arith.constant 0 : index
      %11 = arith.index_cast %10 : i32 to index
      %c1 = arith.constant 1 : index
      %c0_11 = arith.constant 0 : index
      %12 = vector.load %arg2[%c0_10, %11, %c1, %c0_11] : memref<1x4x4x128xbf16, #tpu.memory_space<vmem>>, vector<1x1x2x128xbf16>
      %13 = vector.shape_cast %12 : vector<1x1x2x128xbf16> to vector<2x128xbf16>
      %c0_12 = arith.constant 0 : index
      %c1_13 = arith.constant 1 : index
      %c0_14 = arith.constant 0 : index
      %c0_15 = arith.constant 0 : index
      %14 = vector.load %arg3[%c0_12, %c1_13, %c0_14, %c0_15] : memref<3x3x128x128xbf16, #tpu.memory_space<vmem>>, vector<1x1x128x128xbf16>
      %15 = vector.shape_cast %14 : vector<1x1x128x128xbf16> to vector<128x128xbf16>
      %cst_16 = arith.constant dense<0.000000e+00> : vector<2x128xf32>
      %16 = tpu.matmul %13, %15, %cst_16 {dimension_numbers = #tpu.dot_dimension_numbers<[1], [0], [0], [1], [0, 0, 1, 1], [], []>} : vector<2x128xbf16>, vector<128x128xbf16>, vector<2x128xf32> -> vector<2x128xf32>
      %17 = arith.addf %9, %16 : vector<2x128xf32>
      %c0_i32_17 = arith.constant 0 : i32
      %18 = arith.addi %arg5, %c0_i32_17 : i32
      %c0_18 = arith.constant 0 : index
      %19 = arith.index_cast %18 : i32 to index
      %c2 = arith.constant 2 : index
      %c0_19 = arith.constant 0 : index
      %20 = vector.load %arg2[%c0_18, %19, %c2, %c0_19] : memref<1x4x4x128xbf16, #tpu.memory_space<vmem>>, vector<1x1x2x128xbf16>
      %21 = vector.shape_cast %20 : vector<1x1x2x128xbf16> to vector<2x128xbf16>
      %c0_20 = arith.constant 0 : index
      %c2_21 = arith.constant 2 : index
      %c0_22 = arith.constant 0 : index
      %c0_23 = arith.constant 0 : index
      %22 = vector.load %arg3[%c0_20, %c2_21, %c0_22, %c0_23] : memref<3x3x128x128xbf16, #tpu.memory_space<vmem>>, vector<1x1x128x128xbf16>
      %23 = vector.shape_cast %22 : vector<1x1x128x128xbf16> to vector<128x128xbf16>
      %cst_24 = arith.constant dense<0.000000e+00> : vector<2x128xf32>
      %24 = tpu.matmul %21, %23, %cst_24 {dimension_numbers = #tpu.dot_dimension_numbers<[1], [0], [0], [1], [0, 0, 1, 1], [], []>} : vector<2x128xbf16>, vector<128x128xbf16>, vector<2x128xf32> -> vector<2x128xf32>
      %25 = arith.addf %17, %24 : vector<2x128xf32>
      %c1_i32_25 = arith.constant 1 : i32
      %26 = arith.addi %arg5, %c1_i32_25 : i32
      %c0_26 = arith.constant 0 : index
      %27 = arith.index_cast %26 : i32 to index
      %c0_27 = arith.constant 0 : index
      %c0_28 = arith.constant 0 : index
      %28 = vector.load %arg2[%c0_26, %27, %c0_27, %c0_28] : memref<1x4x4x128xbf16, #tpu.memory_space<vmem>>, vector<1x1x2x128xbf16>
      %29 = vector.shape_cast %28 : vector<1x1x2x128xbf16> to vector<2x128xbf16>
      %c1_29 = arith.constant 1 : index
      %c0_30 = arith.constant 0 : index
      %c0_31 = arith.constant 0 : index
      %c0_32 = arith.constant 0 : index
      %30 = vector.load %arg3[%c1_29, %c0_30, %c0_31, %c0_32] : memref<3x3x128x128xbf16, #tpu.memory_space<vmem>>, vector<1x1x128x128xbf16>
      %31 = vector.shape_cast %30 : vector<1x1x128x128xbf16> to vector<128x128xbf16>
      %cst_33 = arith.constant dense<0.000000e+00> : vector<2x128xf32>
      %32 = tpu.matmul %29, %31, %cst_33 {dimension_numbers = #tpu.dot_dimension_numbers<[1], [0], [0], [1], [0, 0, 1, 1], [], []>} : vector<2x128xbf16>, vector<128x128xbf16>, vector<2x128xf32> -> vector<2x128xf32>
      %33 = arith.addf %25, %32 : vector<2x128xf32>
      %c1_i32_34 = arith.constant 1 : i32
      %34 = arith.addi %arg5, %c1_i32_34 : i32
      %c0_35 = arith.constant 0 : index
      %35 = arith.index_cast %34 : i32 to index
      %c1_36 = arith.constant 1 : index
      %c0_37 = arith.constant 0 : index
      %36 = vector.load %arg2[%c0_35, %35, %c1_36, %c0_37] : memref<1x4x4x128xbf16, #tpu.memory_space<vmem>>, vector<1x1x2x128xbf16>
      %37 = vector.shape_cast %36 : vector<1x1x2x128xbf16> to vector<2x128xbf16>
      %c1_38 = arith.constant 1 : index
      %c1_39 = arith.constant 1 : index
      %c0_40 = arith.constant 0 : index
      %c0_41 = arith.constant 0 : index
      %38 = vector.load %arg3[%c1_38, %c1_39, %c0_40, %c0_41] : memref<3x3x128x128xbf16, #tpu.memory_space<vmem>>, vector<1x1x128x128xbf16>
      %39 = vector.shape_cast %38 : vector<1x1x128x128xbf16> to vector<128x128xbf16>
      %cst_42 = arith.constant dense<0.000000e+00> : vector<2x128xf32>
      %40 = tpu.matmul %37, %39, %cst_42 {dimension_numbers = #tpu.dot_dimension_numbers<[1], [0], [0], [1], [0, 0, 1, 1], [], []>} : vector<2x128xbf16>, vector<128x128xbf16>, vector<2x128xf32> -> vector<2x128xf32>
      %41 = arith.addf %33, %40 : vector<2x128xf32>
      %c1_i32_43 = arith.constant 1 : i32
      %42 = arith.addi %arg5, %c1_i32_43 : i32
      %c0_44 = arith.constant 0 : index
      %43 = arith.index_cast %42 : i32 to index
      %c2_45 = arith.constant 2 : index
      %c0_46 = arith.constant 0 : index
      %44 = vector.load %arg2[%c0_44, %43, %c2_45, %c0_46] : memref<1x4x4x128xbf16, #tpu.memory_space<vmem>>, vector<1x1x2x128xbf16>
      %45 = vector.shape_cast %44 : vector<1x1x2x128xbf16> to vector<2x128xbf16>
      %c1_47 = arith.constant 1 : index
      %c2_48 = arith.constant 2 : index
      %c0_49 = arith.constant 0 : index
      %c0_50 = arith.constant 0 : index
      %46 = vector.load %arg3[%c1_47, %c2_48, %c0_49, %c0_50] : memref<3x3x128x128xbf16, #tpu.memory_space<vmem>>, vector<1x1x128x128xbf16>
      %47 = vector.shape_cast %46 : vector<1x1x128x128xbf16> to vector<128x128xbf16>
      %cst_51 = arith.constant dense<0.000000e+00> : vector<2x128xf32>
      %48 = tpu.matmul %45, %47, %cst_51 {dimension_numbers = #tpu.dot_dimension_numbers<[1], [0], [0], [1], [0, 0, 1, 1], [], []>} : vector<2x128xbf16>, vector<128x128xbf16>, vector<2x128xf32> -> vector<2x128xf32>
      %49 = arith.addf %41, %48 : vector<2x128xf32>
      %c2_i32_52 = arith.constant 2 : i32
      %50 = arith.addi %arg5, %c2_i32_52 : i32
      %c0_53 = arith.constant 0 : index
      %51 = arith.index_cast %50 : i32 to index
      %c0_54 = arith.constant 0 : index
      %c0_55 = arith.constant 0 : index
      %52 = vector.load %arg2[%c0_53, %51, %c0_54, %c0_55] : memref<1x4x4x128xbf16, #tpu.memory_space<vmem>>, vector<1x1x2x128xbf16>
      %53 = vector.shape_cast %52 : vector<1x1x2x128xbf16> to vector<2x128xbf16>
      %c2_56 = arith.constant 2 : index
      %c0_57 = arith.constant 0 : index
      %c0_58 = arith.constant 0 : index
      %c0_59 = arith.constant 0 : index
      %54 = vector.load %arg3[%c2_56, %c0_57, %c0_58, %c0_59] : memref<3x3x128x128xbf16, #tpu.memory_space<vmem>>, vector<1x1x128x128xbf16>
      %55 = vector.shape_cast %54 : vector<1x1x128x128xbf16> to vector<128x128xbf16>
      %cst_60 = arith.constant dense<0.000000e+00> : vector<2x128xf32>
      %56 = tpu.matmul %53, %55, %cst_60 {dimension_numbers = #tpu.dot_dimension_numbers<[1], [0], [0], [1], [0, 0, 1, 1], [], []>} : vector<2x128xbf16>, vector<128x128xbf16>, vector<2x128xf32> -> vector<2x128xf32>
      %57 = arith.addf %49, %56 : vector<2x128xf32>
      %c2_i32_61 = arith.constant 2 : i32
      %58 = arith.addi %arg5, %c2_i32_61 : i32
      %c0_62 = arith.constant 0 : index
      %59 = arith.index_cast %58 : i32 to index
      %c1_63 = arith.constant 1 : index
      %c0_64 = arith.constant 0 : index
      %60 = vector.load %arg2[%c0_62, %59, %c1_63, %c0_64] : memref<1x4x4x128xbf16, #tpu.memory_space<vmem>>, vector<1x1x2x128xbf16>
      %61 = vector.shape_cast %60 : vector<1x1x2x128xbf16> to vector<2x128xbf16>
      %c2_65 = arith.constant 2 : index
      %c1_66 = arith.constant 1 : index
      %c0_67 = arith.constant 0 : index
      %c0_68 = arith.constant 0 : index
      %62 = vector.load %arg3[%c2_65, %c1_66, %c0_67, %c0_68] : memref<3x3x128x128xbf16, #tpu.memory_space<vmem>>, vector<1x1x128x128xbf16>
      %63 = vector.shape_cast %62 : vector<1x1x128x128xbf16> to vector<128x128xbf16>
      %cst_69 = arith.constant dense<0.000000e+00> : vector<2x128xf32>
      %64 = tpu.matmul %61, %63, %cst_69 {dimension_numbers = #tpu.dot_dimension_numbers<[1], [0], [0], [1], [0, 0, 1, 1], [], []>} : vector<2x128xbf16>, vector<128x128xbf16>, vector<2x128xf32> -> vector<2x128xf32>
      %65 = arith.addf %57, %64 : vector<2x128xf32>
      %c2_i32_70 = arith.constant 2 : i32
      %66 = arith.addi %arg5, %c2_i32_70 : i32
      %c0_71 = arith.constant 0 : index
      %67 = arith.index_cast %66 : i32 to index
      %c2_72 = arith.constant 2 : index
      %c0_73 = arith.constant 0 : index
      %68 = vector.load %arg2[%c0_71, %67, %c2_72, %c0_73] : memref<1x4x4x128xbf16, #tpu.memory_space<vmem>>, vector<1x1x2x128xbf16>
      %69 = vector.shape_cast %68 : vector<1x1x2x128xbf16> to vector<2x128xbf16>
      %c2_74 = arith.constant 2 : index
      %c2_75 = arith.constant 2 : index
      %c0_76 = arith.constant 0 : index
      %c0_77 = arith.constant 0 : index
      %70 = vector.load %arg3[%c2_74, %c2_75, %c0_76, %c0_77] : memref<3x3x128x128xbf16, #tpu.memory_space<vmem>>, vector<1x1x128x128xbf16>
      %71 = vector.shape_cast %70 : vector<1x1x128x128xbf16> to vector<128x128xbf16>
      %cst_78 = arith.constant dense<0.000000e+00> : vector<2x128xf32>
      %72 = tpu.matmul %69, %71, %cst_78 {dimension_numbers = #tpu.dot_dimension_numbers<[1], [0], [0], [1], [0, 0, 1, 1], [], []>} : vector<2x128xbf16>, vector<128x128xbf16>, vector<2x128xf32> -> vector<2x128xf32>
      %73 = arith.addf %65, %72 : vector<2x128xf32>
      %74 = arith.truncf %73 : vector<2x128xf32> to vector<2x128xbf16>
      %c0_79 = arith.constant 0 : index
      %75 = arith.index_cast %arg5 : i32 to index
      %c0_80 = arith.constant 0 : index
      %c0_81 = arith.constant 0 : index
      %76 = vector.load %arg4[%c0_79, %75, %c0_80, %c0_81] : memref<1x2x2x128xbf16, #tpu.memory_space<vmem>>, vector<1x1x2x128xbf16>
      %77 = vector.shape_cast %76 : vector<1x1x2x128xbf16> to vector<2x128xbf16>
      %78 = vector.shape_cast %74 : vector<2x128xbf16> to vector<1x1x2x128xbf16>
      tpu.vector_store %arg4[%c0_79, %75, %c0_80, %c0_81], %78 {strides = array<i32>} : memref<1x2x2x128xbf16, #tpu.memory_space<vmem>>, vector<1x1x2x128xbf16>,
    }
    %c2_i32_0 = arith.constant 2 : i32
    return
  }
  func.func @transform_0(%arg0: i32, %arg1: i32) -> (i32, i32, i32, i32) {
    %c0_i32 = arith.constant 0 : i32
    %c0_i32_0 = arith.constant 0 : i32
    %c0_i32_1 = arith.constant 0 : i32
    %c0_i32_2 = arith.constant 0 : i32
    return %arg0, %c0_i32, %c0_i32_0, %c0_i32_1 : i32, i32, i32, i32
  }
  func.func @transform_1(%arg0: i32, %arg1: i32) -> (i32, i32, i32, i32) {
    %c0_i32 = arith.constant 0 : i32
    %c0_i32_0 = arith.constant 0 : i32
    %c0_i32_1 = arith.constant 0 : i32
    %c0_i32_2 = arith.constant 0 : i32
    return %c0_i32, %c0_i32_0, %c0_i32_1, %arg1 : i32, i32, i32, i32
  }
  func.func @transform_2(%arg0: i32, %arg1: i32) -> (i32, i32, i32, i32) {
    %c0_i32 = arith.constant 0 : i32
    %c0_i32_0 = arith.constant 0 : i32
    %c0_i32_1 = arith.constant 0 : i32
    return %arg0, %c0_i32, %c0_i32_0, %arg1 : i32, i32, i32, i32
  }
}

module attributes {stable_mosaic.version = 11 : i64} {
  func.func @_gap_kernel(%arg0: i32, %arg1: memref<1x4x128xbf16, #tpu.memory_space<vmem>>, %arg2: memref<1x128xf32, #tpu.memory_space<vmem>>, %arg3: memref<1x128xf32, #tpu.memory_space<vmem>>, %arg4: memref<1x1x128xf32, #tpu.memory_space<vmem>>) attributes {dimension_semantics = [#tpu.dimension_semantics<parallel>], iteration_bounds = array<i64: 2>, scalar_prefetch = 0 : i64, scratch_operands = 0 : i64, tpu.core_type = #tpu.core_type<tc>, window_params = [{transform_indices = @transform_0, window_bounds = array<i64: 1, 4, 128>}, {pipeline_mode = #tpu.pipeline_mode<synchronous>, transform_indices = @transform_1, window_bounds = array<i64: 1, 128>}, {pipeline_mode = #tpu.pipeline_mode<synchronous>, transform_indices = @transform_2, window_bounds = array<i64: 1, 128>}, {transform_indices = @transform_3, window_bounds = array<i64: 1, 1, 128>}]} {
    %c0 = arith.constant 0 : index
    %c0_0 = arith.constant 0 : index
    %c0_1 = arith.constant 0 : index
    %0 = vector.load %arg1[%c0, %c0_0, %c0_1] : memref<1x4x128xbf16, #tpu.memory_space<vmem>>, vector<1x4x128xbf16>
    %1 = vector.shape_cast %0 : vector<1x4x128xbf16> to vector<4x128xbf16>
    %2 = arith.extf %1 : vector<4x128xbf16> to vector<4x128xf32>
    %c0_2 = arith.constant 0 : index
    %c0_3 = arith.constant 0 : index
    %3 = vector.load %arg2[%c0_2, %c0_3] : memref<1x128xf32, #tpu.memory_space<vmem>>, vector<1x128xf32>
    %4 = vector.broadcast %3 : vector<1x128xf32> to vector<4x128xf32>
    %5 = arith.mulf %2, %4 : vector<4x128xf32>
    %c0_4 = arith.constant 0 : index
    %c0_5 = arith.constant 0 : index
    %6 = vector.load %arg3[%c0_4, %c0_5] : memref<1x128xf32, #tpu.memory_space<vmem>>, vector<1x128xf32>
    %7 = vector.broadcast %6 : vector<1x128xf32> to vector<4x128xf32>
    %8 = arith.addf %5, %7 : vector<4x128xf32>
    %cst = arith.constant 0.000000e+00 : f32
    %9 = vector.broadcast %cst : f32 to vector<4x128xf32>
    %10 = arith.maximumf %8, %9 : vector<4x128xf32>
    %cst_6 = arith.constant dense<0.000000e+00> : vector<128xf32>
    %11 = vector.multi_reduction <add>, %10, %cst_6 [0] : vector<4x128xf32> to vector<128xf32>
    %12 = vector.shape_cast %11 : vector<128xf32> to vector<1x128xf32>
    %cst_7 = arith.constant 4.000000e+00 : f32
    %13 = vector.broadcast %cst_7 : f32 to vector<1x128xf32>
    %14 = arith.divf %12, %13 : vector<1x128xf32>
    %c0_8 = arith.constant 0 : index
    %c0_9 = arith.constant 0 : index
    %c0_10 = arith.constant 0 : index
    %15 = vector.load %arg4[%c0_8, %c0_9, %c0_10] : memref<1x1x128xf32, #tpu.memory_space<vmem>>, vector<1x1x128xf32>
    %16 = vector.shape_cast %15 : vector<1x1x128xf32> to vector<1x128xf32>
    %17 = vector.shape_cast %14 : vector<1x128xf32> to vector<1x1x128xf32>
    tpu.vector_store %arg4[%c0_8, %c0_9, %c0_10], %17 {strides = array<i32>} : memref<1x1x128xf32, #tpu.memory_space<vmem>>, vector<1x1x128xf32>,
    return
  }
  func.func @transform_0(%arg0: i32) -> (i32, i32, i32) {
    %c0_i32 = arith.constant 0 : i32
    %c0_i32_0 = arith.constant 0 : i32
    %c0_i32_1 = arith.constant 0 : i32
    return %arg0, %c0_i32, %c0_i32_0 : i32, i32, i32
  }
  func.func @transform_1(%arg0: i32) -> (i32, i32) {
    %c0_i32 = arith.constant 0 : i32
    %c0_i32_0 = arith.constant 0 : i32
    %c0_i32_1 = arith.constant 0 : i32
    return %c0_i32, %c0_i32_0 : i32, i32
  }
  func.func @transform_2(%arg0: i32) -> (i32, i32) {
    %c0_i32 = arith.constant 0 : i32
    %c0_i32_0 = arith.constant 0 : i32
    %c0_i32_1 = arith.constant 0 : i32
    return %c0_i32, %c0_i32_0 : i32, i32
  }
  func.func @transform_3(%arg0: i32) -> (i32, i32, i32) {
    %c0_i32 = arith.constant 0 : i32
    %c0_i32_0 = arith.constant 0 : i32
    %c0_i32_1 = arith.constant 0 : i32
    return %arg0, %c0_i32, %c0_i32_0 : i32, i32, i32
  }
}

module attributes {stable_mosaic.version = 11 : i64} {
  func.func @_mm_kernel(%arg0: i32, %arg1: i32, %arg2: memref<16x128xf32, #tpu.memory_space<vmem>>, %arg3: memref<128x128xbf16, #tpu.memory_space<vmem>>, %arg4: memref<1x128xf32, #tpu.memory_space<vmem>>, %arg5: memref<16x128xf32, #tpu.memory_space<vmem>>) attributes {dimension_semantics = [#tpu.dimension_semantics<parallel>, #tpu.dimension_semantics<parallel>], iteration_bounds = array<i64: 1, 1>, scalar_prefetch = 0 : i64, scratch_operands = 0 : i64, tpu.core_type = #tpu.core_type<tc>, window_params = [{transform_indices = @transform_0, window_bounds = array<i64: 16, 128>}, {transform_indices = @transform_1, window_bounds = array<i64: 128, 128>}, {transform_indices = @transform_2, window_bounds = array<i64: 1, 128>}, {transform_indices = @transform_3, window_bounds = array<i64: 16, 128>}]} {
    %c0 = arith.constant 0 : index
    %c0_0 = arith.constant 0 : index
    %0 = vector.load %arg2[%c0, %c0_0] : memref<16x128xf32, #tpu.memory_space<vmem>>, vector<16x128xf32>
    %1 = arith.truncf %0 : vector<16x128xf32> to vector<16x128xbf16>
    %c0_1 = arith.constant 0 : index
    %c0_2 = arith.constant 0 : index
    %2 = vector.load %arg3[%c0_1, %c0_2] : memref<128x128xbf16, #tpu.memory_space<vmem>>, vector<128x128xbf16>
    %cst = arith.constant dense<0.000000e+00> : vector<16x128xf32>
    %3 = tpu.matmul %1, %2, %cst {dimension_numbers = #tpu.dot_dimension_numbers<[1], [0], [0], [1], [0, 0, 1, 1], [], []>} : vector<16x128xbf16>, vector<128x128xbf16>, vector<16x128xf32> -> vector<16x128xf32>
    %c0_3 = arith.constant 0 : index
    %c0_4 = arith.constant 0 : index
    %4 = vector.load %arg4[%c0_3, %c0_4] : memref<1x128xf32, #tpu.memory_space<vmem>>, vector<1x128xf32>
    %5 = vector.broadcast %4 : vector<1x128xf32> to vector<16x128xf32>
    %6 = arith.addf %3, %5 : vector<16x128xf32>
    %c0_5 = arith.constant 0 : index
    %c0_6 = arith.constant 0 : index
    %7 = vector.load %arg5[%c0_5, %c0_6] : memref<16x128xf32, #tpu.memory_space<vmem>>, vector<16x128xf32>
    tpu.vector_store %arg5[%c0_5, %c0_6], %6 {strides = array<i32>} : memref<16x128xf32, #tpu.memory_space<vmem>>, vector<16x128xf32>,
    return
  }
  func.func @transform_0(%arg0: i32, %arg1: i32) -> (i32, i32) {
    %c0_i32 = arith.constant 0 : i32
    %c0_i32_0 = arith.constant 0 : i32
    return %arg0, %c0_i32 : i32, i32
  }
  func.func @transform_1(%arg0: i32, %arg1: i32) -> (i32, i32) {
    %c0_i32 = arith.constant 0 : i32
    %c0_i32_0 = arith.constant 0 : i32
    return %c0_i32, %arg1 : i32, i32
  }
  func.func @transform_2(%arg0: i32, %arg1: i32) -> (i32, i32) {
    %c0_i32 = arith.constant 0 : i32
    %c0_i32_0 = arith.constant 0 : i32
    return %c0_i32, %arg1 : i32, i32
  }
  func.func @transform_3(%arg0: i32, %arg1: i32) -> (i32, i32) {
    %c0_i32 = arith.constant 0 : i32
    return %arg0, %arg1 : i32, i32
  }
}

</mosaic_0001>

<llo_original>
// kernel: densenet_forward.15
$region0: #{densenet_forward.15}
  #allocation0 [shape = 'u32[]', space=smem, size = 0x4, offset = 0x4, fixed_abs, tag = 'smem constant byte address 0x4 - core index']
  #allocation1 [shape = 'u32[144,128]{1,0:T(1,128)}', space=vmem, size = 0x12000, scoped, tag = 'internal scratch']
  %s0 = inlined_call_operand.vmem [shape: bf16[2,10,5,256], index: 0, kind: input, shape index: {}]
  %s1 = inlined_call_operand.vmem [shape: bf16[2,4,4,128], index: 1, kind: output, shape index: {}]
  %s2 = sld [smem:[#allocation0]]
  $region44: #{densenet_forward.15} parent=0
    _
  %s4 = ssub.s32 1, %s2
  %s5 = scalar_select 0, %s4, %s2
  loop: start=0, step=1, limit=4
  $region2: #{densenet_forward.15} parent=0 // loop_pre_header
    _
  $region3: #{densenet_forward.15} parent=0 // loop_header
    %s7 = sphi 0, %s11
    %p8 = scmp.ge.s32.totalorder %s7, 4
    %s17 = sphi 0, %s19
    %s20 = sphi 0, %s17
    %s21 = sphi 0, %s20
    %s37 = sphi 0, %s21
    %s43 = sphi 0, %s45
    %s46 = sphi 0, %s43
    %s47 = sphi 0, %s46
    %s63 = sphi 0, %s47
  $region4: #{densenet_forward.15} parent=0 // loop_header_branch
    %10 = sbr.rel (%p8) target = $region8
  $region5: #{densenet_forward.15} parent=0 // loop_body
    %s12 = ssub.s32 %s7, 1
    %s13 = ssub.s32 %s7, 2
    %s14 = sadd.s32 %s7, 1
    %s15 = ssub.s32 %s7, %s14
    %p16 = scmp.eq.s32.totalorder %s15, 0
    %s18 = sadd.s32 %s17, 1
    %s19 = scalar_select %p16, %s17, %s18
    %p22 = pneg %p16
    %p23 = scmp.eq.s32.totalorder %s7, 1
    %p24 = por %p22, %p23
    %p25 = scmp.ne.s32.totalorder %s17, %s20
    %p26 = scmp.eq.s32.totalorder %s7, 0
    %p27 = por %p25, %p26
    %p28 = scmp.ne.s32.totalorder %s17, %s20
    %p29 = scmp.eq.s32.totalorder %s12, 1
    %p30 = por %p28, %p29
    %p31 = scmp.ne.s32.totalorder %s20, %s21
    %p32 = scmp.eq.s32.totalorder %s12, 0
    %p33 = por %p31, %p32
    %p34 = scmp.ne.s32.totalorder %s20, %s21
    %p35 = scmp.eq.s32.totalorder %s13, 1
    %p36 = por %p34, %p35
    %p38 = scmp.ne.s32.totalorder %s21, %s37
    %p39 = scmp.eq.s32.totalorder %s13, 0
    %p40 = por %p38, %p39
    %s41 = ssub.s32 %s7, %s14
    %p42 = scmp.eq.s32.totalorder %s41, 0
    %s44 = sadd.s32 %s43, 1
    %s45 = scalar_select %p42, %s43, %s44
    %p48 = pneg %p42
    %p49 = scmp.eq.s32.totalorder %s7, 1
    %p50 = por %p48, %p49
    %p51 = scmp.ne.s32.totalorder %s43, %s46
    %p52 = scmp.eq.s32.totalorder %s7, 0
    %p53 = por %p51, %p52
    %p54 = scmp.ne.s32.totalorder %s43, %s46
    %p55 = scmp.eq.s32.totalorder %s12, 1
    %p56 = por %p54, %p55
    %p57 = scmp.ne.s32.totalorder %s46, %s47
    %p58 = scmp.eq.s32.totalorder %s12, 0
    %p59 = por %p57, %p58
    %p60 = scmp.ne.s32.totalorder %s46, %s47
    %p61 = scmp.eq.s32.totalorder %s13, 1
    %p62 = por %p60, %p61
    %p64 = scmp.ne.s32.totalorder %s47, %s63
    %p65 = scmp.eq.s32.totalorder %s13, 0
    %p66 = por %p64, %p65
    %p67 = scmp.le.s32.totalorder 1, %s7
    %p68 = scmp.lt.s32.totalorder %s7, 3
    %p69 = pnand %p67, %p68
    %p70 = pneg %p69
    // Predicated region
    $region9: #{densenet_forward.15} parent=5 // pred_check
      _
    $region10: #{densenet_forward.15} parent=5 // pred_check_branch
      %72 = sbr.rel (%p69) target = $region12
    $region11: #{densenet_forward.15} parent=5 // pred_region
      %s73 = ssub.s32 %s7, 1
    $region12: #{densenet_forward.15} parent=5 // pred_fallthru
      _
    %p74 = scmp.lt.s32.totalorder %s7, 2
    // Predicated region
    $region13: #{densenet_forward.15} parent=5 // pred_check
      %p75 = pneg %p74
    $region14: #{densenet_forward.15} parent=5 // pred_check_branch
      %77 = sbr.rel (%p75) target = $region16
    $region15: #{densenet_forward.15} parent=5 // pred_region
      // Predicated region
      $region17: #{densenet_forward.15} parent=15 // pred_check
        %p78 = pneg %p27
      $region18: #{densenet_forward.15} parent=15 // pred_check_branch
        %80 = sbr.rel (%p78) target = $region20
      $region19: #{densenet_forward.15} parent=15 // pred_region
        %p81 = scmp.lt.s32.totalorder %s7, 1
        %s82 = scalar_select %p81, %s7, 1
        %s83 = smul.addr %s82, 20
        %s84 = smul.addr %s83, 4
        %s85 = scalar_lea.vmem %s0, %s84
      $region20: #{densenet_forward.15} parent=15 // pred_fallthru
        _
    $region16: #{densenet_forward.15} parent=5 // pred_fallthru
      _
    %p86 = scmp.le.s32.totalorder 1, %s7
    %p87 = scmp.lt.s32.totalorder %s7, 3
    %p88 = pnand %p86, %p87
    %p89 = pneg %p88
    // Predicated region
    $region21: #{densenet_forward.15} parent=5 // pred_check
      _
    $region22: #{densenet_forward.15} parent=5 // pred_check_branch
      %91 = sbr.rel (%p88) target = $region24
    $region23: #{densenet_forward.15} parent=5 // pred_region
      %s92 = ssub.s32 %s7, 1
      %p93 = scmp.lt.s32.totalorder %s12, 1
      %s94 = scalar_select %p93, %s12, 1
      %s95 = smul.addr %s94, 20
      %s96 = smul.addr %s95, 4
      %s97 = scalar_lea.vmem %s0, %s96
      %p98 = pneg %p33
      %p99 = pneg %p30
      %p100 = pneg %p59
      %p101 = pneg %p56
      %p102 = scmp.lt.s32.totalorder %s12, 1
      %s103 = scalar_select %p102, %s12, 1
      %s104 = smul.addr %s103, 4
      %s105 = smul.addr %s104, 2
      %s106 = scalar_lea.vmem %s1, %s105
      %p107 = scmp.lt.s32.totalorder %s12, 1
      %s108 = scalar_select %p107, %s12, 1
      %s109 = smul.addr %s108, 20
      %s110 = smul.addr %s109, 4
      %s111 = scalar_lea.vmem %s0, %s110
      %p112 = scmp.lt.s32.totalorder %s12, 1
      %s113 = scalar_select %p112, %s12, 1
      %s114 = smul.addr %s113, 4
      %s115 = smul.addr %s114, 2
      %s116 = scalar_lea.vmem %s1, %s115
      loop: start=0, step=1, limit=4
      $region25: #{densenet_forward.15} parent=23 // loop_pre_header
        _
      $region26: #{densenet_forward.15} parent=23 // loop_header
        %s118 = sphi 0, %s122
        %p119 = scmp.ge.s32.totalorder %s118, 4
      $region27: #{densenet_forward.15} parent=23 // loop_header_branch
        %121 = sbr.rel (%p119) target = $region31
      $region28: #{densenet_forward.15} parent=23 // loop_body
        %s123 = smul.u32 %s118, 2
        %s124 = smul.u32 %s123, 2
        %s125 = smul.addr %s124, 4
        %s126 = scalar_lea.vmem %s111, %s125
        %v127 = vld [vmem:[%s126] sm:$0x3]
        %v128 = vunpack.c.l.bf16 %v127
        %v129 = vld [vmem:[%s126 + $0x4] sm:$0x3]
        %v130 = vunpack.c.l.bf16 %v129
        %v131 = vmax.f32 %v128, %v130
        %v132 = vld [vmem:[%s126] sm:$0x7]
        %v133 = vunpack.c.l.bf16 %v132
        %v135 = vrot.slane %v133, 1
        %v137 = vmax.f32 %v131, %v135
        %s138 = sadd.s32 %s123, 1
        %s139 = smul.u32 %s138, 2
        %s140 = smul.addr %s139, 4
        %s141 = scalar_lea.vmem %s111, %s140
        %v142 = vld [vmem:[%s141] sm:$0x3]
        %v143 = vunpack.c.l.bf16 %v142
        %v144 = vmax.f32 %v137, %v143
        %v145 = vld [vmem:[%s141 + $0x4] sm:$0x3]
        %v146 = vunpack.c.l.bf16 %v145
        %v147 = vmax.f32 %v144, %v146
        %v148 = vld [vmem:[%s141] sm:$0x7]
        %v149 = vunpack.c.l.bf16 %v148
        %v151 = vrot.slane %v149, 1
        %v153 = vmax.f32 %v147, %v151
        %s154 = sadd.s32 %s123, 2
        %s155 = smul.u32 %s154, 2
        %s156 = smul.addr %s155, 4
        %s157 = scalar_lea.vmem %s111, %s156
        %v158 = vld [vmem:[%s157] sm:$0x3]
        %v159 = vunpack.c.l.bf16 %v158
        %v160 = vmax.f32 %v153, %v159
        %v161 = vld [vmem:[%s157 + $0x4] sm:$0x3]
        %v162 = vunpack.c.l.bf16 %v161
        %v163 = vmax.f32 %v160, %v162
        %v164 = vld [vmem:[%s157] sm:$0x7]
        %v165 = vunpack.c.l.bf16 %v164
        %v167 = vrot.slane %v165, 1
        %v169 = vmax.f32 %v163, %v167
        %v170 = vpack.c.bf16 %v169, %v169
        %s171 = smul.addr %s118, 2
        %s172 = scalar_lea.vmem %s116, %s171
        %173 = vst [vmem:[%s172] sm:$0x3] %v170
      $region29: #{densenet_forward.15} parent=23 // loop_footer
        %s122 = sadd.s32 1, %s118
      $region30: #{densenet_forward.15} parent=23 // loop_footer_branch
        %117 = sbr.rel target = $region26
      $region31: #{densenet_forward.15} parent=23 // loop_exit
        _
      %p174 = scmp.lt.s32.totalorder %s12, 1
      %s175 = scalar_select %p174, %s12, 1
      %s176 = smul.addr %s175, 4
      %s177 = smul.addr %s176, 2
      %s178 = scalar_lea.vmem %s1, %s177
      // Predicated region
      $region32: #{densenet_forward.15} parent=23 // pred_check
        %p179 = pneg %p56
      $region33: #{densenet_forward.15} parent=23 // pred_check_branch
        %181 = sbr.rel (%p179) target = $region35
      $region34: #{densenet_forward.15} parent=23 // pred_region
        _
      $region35: #{densenet_forward.15} parent=23 // pred_fallthru
        _
    $region24: #{densenet_forward.15} parent=5 // pred_fallthru
      _
    %p182 = scmp.le.s32.totalorder 2, %s7
    // Predicated region
    $region36: #{densenet_forward.15} parent=5 // pred_check
      %p183 = pneg %p182
    $region37: #{densenet_forward.15} parent=5 // pred_check_branch
      %185 = sbr.rel (%p183) target = $region39
    $region38: #{densenet_forward.15} parent=5 // pred_region
      %s186 = ssub.s32 %s7, 2
      // Predicated region
      $region40: #{densenet_forward.15} parent=38 // pred_check
        %p187 = pneg %p62
      $region41: #{densenet_forward.15} parent=38 // pred_check_branch
        %189 = sbr.rel (%p187) target = $region43
      $region42: #{densenet_forward.15} parent=38 // pred_region
        %p190 = scmp.lt.s32.totalorder %s13, 1
        %s191 = scalar_select %p190, %s13, 1
        %s192 = smul.addr %s191, 4
        %s193 = smul.addr %s192, 2
        %s194 = scalar_lea.vmem %s1, %s193
      $region43: #{densenet_forward.15} parent=38 // pred_fallthru
        _
    $region39: #{densenet_forward.15} parent=5 // pred_fallthru
      _
  $region6: #{densenet_forward.15} parent=0 // loop_footer
    %s11 = sadd.s32 1, %s7
  $region7: #{densenet_forward.15} parent=0 // loop_footer_branch
    %6 = sbr.rel target = $region3
  $region8: #{densenet_forward.15} parent=0 // loop_exit
    _

// kernel: densenet_forward.14
$region0: #{densenet_forward.14}
  #allocation0 [shape = 'u32[]', space=smem, size = 0x4, offset = 0x4, fixed_abs, tag = 'smem constant byte address 0x4 - core index']
  #allocation1 [shape = 'u32[144,128]{1,0:T(1,128)}', space=vmem, size = 0x12000, scoped, tag = 'internal scratch']
  %s0 = inlined_call_operand.vmem [shape: bf16[128,256], index: 0, kind: input, shape index: {}]
  %s1 = inlined_call_operand.vmem [shape: bf16[256,128], index: 1, kind: input, shape index: {}]
  %s2 = inlined_call_operand.vmem [shape: f32[1,128], index: 2, kind: input, shape index: {}]
  %s3 = inlined_call_operand.vmem [shape: f32[1,128], index: 3, kind: input, shape index: {}]
  %s4 = inlined_call_operand.vmem [shape: bf16[128,128], index: 4, kind: output, shape index: {}]
  %s5 = sld [smem:[#allocation0]]
  $region26: #{densenet_forward.14} parent=0
    _
  %s7 = ssub.s32 1, %s5
  %s8 = scalar_select 0, %s7, %s5
  // Predicated region
  $region2: #{densenet_forward.14} parent=0 // pred_check
    _
  $region3: #{densenet_forward.14} parent=0 // pred_check_branch
    %10 = sbr.rel (0) target = $region5
  $region4: #{densenet_forward.14} parent=0 // pred_region
    _
  $region5: #{densenet_forward.14} parent=0 // pred_fallthru
    _
  // Predicated region
  $region6: #{densenet_forward.14} parent=0 // pred_check
    _
  $region7: #{densenet_forward.14} parent=0 // pred_check_branch
    %12 = sbr.rel (0) target = $region9
  $region8: #{densenet_forward.14} parent=0 // pred_region
    _
  $region9: #{densenet_forward.14} parent=0 // pred_fallthru
    _
  // Predicated region
  $region10: #{densenet_forward.14} parent=0 // pred_check
    _
  $region11: #{densenet_forward.14} parent=0 // pred_check_branch
    %14 = sbr.rel (0) target = $region13
  $region12: #{densenet_forward.14} parent=0 // pred_region
    _
  $region13: #{densenet_forward.14} parent=0 // pred_fallthru
    _
  // Predicated region
  $region14: #{densenet_forward.14} parent=0 // pred_check
    _
  $region15: #{densenet_forward.14} parent=0 // pred_check_branch
    %16 = sbr.rel (0) target = $region17
  $region16: #{densenet_forward.14} parent=0 // pred_region
    _
  $region17: #{densenet_forward.14} parent=0 // pred_fallthru
    _
  %v18 = vld [vmem:[%s0] sm:$0xff]
  %v19 = vld [vmem:[%s0 + $0x8] sm:$0xff]
  %v20 = vld [vmem:[%s0 + $0x10] sm:$0xff]
  %v21 = vld [vmem:[%s0 + $0x18] sm:$0xff]
  %v22 = vld [vmem:[%s0 + $0x20] sm:$0xff]
  %v23 = vld [vmem:[%s0 + $0x28] sm:$0xff]
  %v24 = vld [vmem:[%s0 + $0x30] sm:$0xff]
  %v25 = vld [vmem:[%s0 + $0x38] sm:$0xff]
  %v26 = vld [vmem:[%s0 + $0x40] sm:$0xff]
  %v27 = vld [vmem:[%s0 + $0x48] sm:$0xff]
  %v28 = vld [vmem:[%s0 + $0x50] sm:$0xff]
  %v29 = vld [vmem:[%s0 + $0x58] sm:$0xff]
  %v30 = vld [vmem:[%s0 + $0x60] sm:$0xff]
  %v31 = vld [vmem:[%s0 + $0x68] sm:$0xff]
  %v32 = vld [vmem:[%s0 + $0x70] sm:$0xff]
  %v33 = vld [vmem:[%s0 + $0x78] sm:$0xff]
  %v34 = vld [vmem:[%s1] sm:$0xf]
  %v35 = vld [vmem:[%s1 + $0x4] sm:$0xf]
  %v36 = vld [vmem:[%s1 + $0x8] sm:$0xf]
  %v37 = vld [vmem:[%s1 + $0xc] sm:$0xf]
  %v38 = vld [vmem:[%s1 + $0x10] sm:$0xf]
  %v39 = vld [vmem:[%s1 + $0x14] sm:$0xf]
  %v40 = vld [vmem:[%s1 + $0x18] sm:$0xf]
  %v41 = vld [vmem:[%s1 + $0x1c] sm:$0xf]
  %v42 = vld [vmem:[%s1 + $0x20] sm:$0xf]
  %v43 = vld [vmem:[%s1 + $0x24] sm:$0xf]
  %v44 = vld [vmem:[%s1 + $0x28] sm:$0xf]
  %v45 = vld [vmem:[%s1 + $0x2c] sm:$0xf]
  %v46 = vld [vmem:[%s1 + $0x30] sm:$0xf]
  %v47 = vld [vmem:[%s1 + $0x34] sm:$0xf]
  %v48 = vld [vmem:[%s1 + $0x38] sm:$0xf]
  %v49 = vld [vmem:[%s1 + $0x3c] sm:$0xf]
  %v50 = vld [vmem:[%s1 + $0x40] sm:$0xf]
  %v51 = vld [vmem:[%s1 + $0x44] sm:$0xf]
  %v52 = vld [vmem:[%s1 + $0x48] sm:$0xf]
  %v53 = vld [vmem:[%s1 + $0x4c] sm:$0xf]
  %v54 = vld [vmem:[%s1 + $0x50] sm:$0xf]
  %v55 = vld [vmem:[%s1 + $0x54] sm:$0xf]
  %v56 = vld [vmem:[%s1 + $0x58] sm:$0xf]
  %v57 = vld [vmem:[%s1 + $0x5c] sm:$0xf]
  %v58 = vld [vmem:[%s1 + $0x60] sm:$0xf]
  %v59 = vld [vmem:[%s1 + $0x64] sm:$0xf]
  %v60 = vld [vmem:[%s1 + $0x68] sm:$0xf]
  %v61 = vld [vmem:[%s1 + $0x6c] sm:$0xf]
  %v62 = vld [vmem:[%s1 + $0x70] sm:$0xf]
  %v63 = vld [vmem:[%s1 + $0x74] sm:$0xf]
  %v64 = vld [vmem:[%s1 + $0x78] sm:$0xf]
  %v65 = vld [vmem:[%s1 + $0x7c] sm:$0xf]
  %v82 = vunpack.c.l.b16 %v18
  %v83 = vunpack.c.h.b16 %v18
  %v84 = vunpack.c.l.b16 %v19
  %v85 = vunpack.c.h.b16 %v19
  %v86 = vunpack.c.l.b16 %v20
  %v87 = vunpack.c.h.b16 %v20
  %v88 = vunpack.c.l.b16 %v21
  %v89 = vunpack.c.h.b16 %v21
  %v90 = vunpack.c.l.b16 %v22
  %v91 = vunpack.c.h.b16 %v22
  %v92 = vunpack.c.l.b16 %v23
  %v93 = vunpack.c.h.b16 %v23
  %v94 = vunpack.c.l.b16 %v24
  %v95 = vunpack.c.h.b16 %v24
  %v96 = vunpack.c.l.b16 %v25
  %v97 = vunpack.c.h.b16 %v25
  %v98 = vunpack.c.l.b16 %v26
  %v99 = vunpack.c.h.b16 %v26
  %v100 = vunpack.c.l.b16 %v27
  %v101 = vunpack.c.h.b16 %v27
  %v102 = vunpack.c.l.b16 %v28
  %v103 = vunpack.c.h.b16 %v28
  %v104 = vunpack.c.l.b16 %v29
  %v105 = vunpack.c.h.b16 %v29
  %v106 = vunpack.c.l.b16 %v30
  %v107 = vunpack.c.h.b16 %v30
  %v108 = vunpack.c.l.b16 %v31
  %v109 = vunpack.c.h.b16 %v31
  %v110 = vunpack.c.l.b16 %v32
  %v111 = vunpack.c.h.b16 %v32
  %v112 = vunpack.c.l.b16 %v33
  %v113 = vunpack.c.h.b16 %v33
  %v114 = vpack.c.b16 %v84, %v82
  %v115 = vpack.c.b16 %v85, %v83
  %v116 = vpack.c.b16 %v88, %v86
  %v117 = vpack.c.b16 %v89, %v87
  %v118 = vpack.c.b16 %v92, %v90
  %v119 = vpack.c.b16 %v93, %v91
  %v120 = vpack.c.b16 %v96, %v94
  %v121 = vpack.c.b16 %v97, %v95
  %v122 = vpack.c.b16 %v100, %v98
  %v123 = vpack.c.b16 %v101, %v99
  %v124 = vpack.c.b16 %v104, %v102
  %v125 = vpack.c.b16 %v105, %v103
  %v126 = vpack.c.b16 %v108, %v106
  %v127 = vpack.c.b16 %v109, %v107
  %v128 = vpack.c.b16 %v112, %v110
  %v129 = vpack.c.b16 %v113, %v111
  %v178 = vunpack.c.l.b16 %v34
  %v179 = vunpack.c.l.b16 %v35
  %v180 = vunpack.c.l.b16 %v36
  %v181 = vunpack.c.l.b16 %v37
  %v182 = vunpack.c.l.b16 %v38
  %v183 = vunpack.c.l.b16 %v39
  %v184 = vunpack.c.l.b16 %v40
  %v185 = vunpack.c.l.b16 %v41
  %v186 = vunpack.c.l.b16 %v42
  %v187 = vunpack.c.l.b16 %v43
  %v188 = vunpack.c.l.b16 %v44
  %v189 = vunpack.c.l.b16 %v45
  %v190 = vunpack.c.l.b16 %v46
  %v191 = vunpack.c.l.b16 %v47
  %v192 = vunpack.c.l.b16 %v48
  %v193 = vunpack.c.l.b16 %v49
  %v194 = vunpack.c.l.b16 %v50
  %v195 = vunpack.c.l.b16 %v51
  %v196 = vunpack.c.l.b16 %v52
  %v197 = vunpack.c.l.b16 %v53
  %v198 = vunpack.c.l.b16 %v54
  %v199 = vunpack.c.l.b16 %v55
  %v200 = vunpack.c.l.b16 %v56
  %v201 = vunpack.c.l.b16 %v57
  %v202 = vunpack.c.l.b16 %v58
  %v203 = vunpack.c.l.b16 %v59
  %v204 = vunpack.c.l.b16 %v60
  %v205 = vunpack.c.l.b16 %v61
  %v206 = vunpack.c.l.b16 %v62
  %v207 = vunpack.c.l.b16 %v63
  %v208 = vunpack.c.l.b16 %v64
  %v209 = vunpack.c.l.b16 %v65
  %v210 = vpack.c.b16 %v179, %v178
  %v211 = vpack.c.b16 %v181, %v180
  %v212 = vpack.c.b16 %v183, %v182
  %v213 = vpack.c.b16 %v185, %v184
  %v214 = vpack.c.b16 %v187, %v186
  %v215 = vpack.c.b16 %v189, %v188
  %v216 = vpack.c.b16 %v191, %v190
  %v217 = vpack.c.b16 %v193, %v192
  %v218 = vpack.c.b16 %v195, %v194
  %v219 = vpack.c.b16 %v197, %v196
  %v220 = vpack.c.b16 %v199, %v198
  %v221 = vpack.c.b16 %v201, %v200
  %v222 = vpack.c.b16 %v203, %v202
  %v223 = vpack.c.b16 %v205, %v204
  %v224 = vpack.c.b16 %v207, %v206
  %v225 = vpack.c.b16 %v209, %v208
  %242 = vmatprep.subr.bf16.mxu0 0
  %243 = vmatpush1.bf16.msra.mxu0 %v210
  %244 = vmatprep.subr.bf16.mxu0 0
  %245 = vmatpush1.bf16.msra.mxu0 %v211
  %246 = vmatprep.subr.bf16.mxu0 0
  %247 = vmatpush1.bf16.msra.mxu0 %v212
  %248 = vmatprep.subr.bf16.mxu0 0
  %249 = vmatpush1.bf16.msra.mxu0 %v213
  %250 = vmatprep.subr.bf16.mxu0 0
  %251 = vmatpush1.bf16.msra.mxu0 %v214
  %252 = vmatprep.subr.bf16.mxu0 0
  %253 = vmatpush1.bf16.msra.mxu0 %v215
  %254 = vmatprep.subr.bf16.mxu0 0
  %255 = vmatpush1.bf16.msra.mxu0 %v216
  %256 = vmatprep.subr.bf16.mxu0 0
  %257 = vmatpush1.bf16.msra.mxu0 %v217
  %258 = vmatprep.subr.bf16.mxu0 0
  %259 = vmatpush1.bf16.msra.mxu0 %v218
  %260 = vmatprep.subr.bf16.mxu0 0
  %261 = vmatpush1.bf16.msra.mxu0 %v219
  %262 = vmatprep.subr.bf16.mxu0 0
  %263 = vmatpush1.bf16.msra.mxu0 %v220
  %264 = vmatprep.subr.bf16.mxu0 0
  %265 = vmatpush1.bf16.msra.mxu0 %v221
  %266 = vmatprep.subr.bf16.mxu0 0
  %267 = vmatpush1.bf16.msra.mxu0 %v222
  %268 = vmatprep.subr.bf16.mxu0 0
  %269 = vmatpush1.bf16.msra.mxu0 %v223
  %270 = vmatprep.subr.bf16.mxu0 0
  %271 = vmatpush1.bf16.msra.mxu0 %v224
  %272 = vmatprep.subr.bf16.mxu0 0
  %273 = vmatpush1.bf16.msra.mxu0 %v225
  %274 = vmatprep.mubr.bf16.mxu0 %v115
  %275 = vmatmul.mubr.bf16.gmra.mrb[0].mxu0 %v114
  %v276 = vpop.f32.mrb[0].mxu0
  %v277 = vadd.f32 0.0, %v276
  %v278 = vpop.f32.mrb[0].mxu0
  %v279 = vpop.f32.mrb[0].mxu0
  %v280 = vadd.f32 0.0, %v279
  %v281 = vpop.f32.mrb[0].mxu0
  %282 = vmatprep.mubr.bf16.mxu0 %v117
  %283 = vmatmul.mubr.bf16.gmra.mrb[0].mxu0 %v116
  %v284 = vpop.f32.mrb[0].mxu0
  %v285 = vadd.f32 0.0, %v284
  %v286 = vpop.f32.mrb[0].mxu0
  %v287 = vpop.f32.mrb[0].mxu0
  %v288 = vadd.f32 0.0, %v287
  %v289 = vpop.f32.mrb[0].mxu0
  %290 = vmatprep.mubr.bf16.mxu0 %v119
  %291 = vmatmul.mubr.bf16.gmra.mrb[0].mxu0 %v118
  %v292 = vpop.f32.mrb[0].mxu0
  %v293 = vadd.f32 0.0, %v292
  %v294 = vpop.f32.mrb[0].mxu0
  %v295 = vpop.f32.mrb[0].mxu0
  %v296 = vadd.f32 0.0, %v295
  %v297 = vpop.f32.mrb[0].mxu0
  %298 = vmatprep.mubr.bf16.mxu0 %v121
  %299 = vmatmul.mubr.bf16.gmra.mrb[0].mxu0 %v120
  %v300 = vpop.f32.mrb[0].mxu0
  %v301 = vadd.f32 0.0, %v300
  %v302 = vpop.f32.mrb[0].mxu0
  %v303 = vpop.f32.mrb[0].mxu0
  %v304 = vadd.f32 0.0, %v303
  %v305 = vpop.f32.mrb[0].mxu0
  %306 = vmatprep.mubr.bf16.mxu0 %v123
  %307 = vmatmul.mubr.bf16.gmra.mrb[0].mxu0 %v122
  %v308 = vpop.f32.mrb[0].mxu0
  %v309 = vadd.f32 0.0, %v308
  %v310 = vpop.f32.mrb[0].mxu0
  %v311 = vpop.f32.mrb[0].mxu0
  %v312 = vadd.f32 0.0, %v311
  %v313 = vpop.f32.mrb[0].mxu0
  %314 = vmatprep.mubr.bf16.mxu0 %v125
  %315 = vmatmul.mubr.bf16.gmra.mrb[0].mxu0 %v124
  %v316 = vpop.f32.mrb[0].mxu0
  %v317 = vadd.f32 0.0, %v316
  %v318 = vpop.f32.mrb[0].mxu0
  %v319 = vpop.f32.mrb[0].mxu0
  %v320 = vadd.f32 0.0, %v319
  %v321 = vpop.f32.mrb[0].mxu0
  %322 = vmatprep.mubr.bf16.mxu0 %v127
  %323 = vmatmul.mubr.bf16.gmra.mrb[0].mxu0 %v126
  %v324 = vpop.f32.mrb[0].mxu0
  %v325 = vadd.f32 0.0, %v324
  %v326 = vpop.f32.mrb[0].mxu0
  %v327 = vpop.f32.mrb[0].mxu0
  %v328 = vadd.f32 0.0, %v327
  %v329 = vpop.f32.mrb[0].mxu0
  %330 = vmatprep.mubr.bf16.mxu0 %v129
  %331 = vmatmul.mubr.bf16.gmra.mrb[0].mxu0 %v128
  %v332 = vpop.f32.mrb[0].mxu0
  %v333 = vadd.f32 0.0, %v332
  %v334 = vpop.f32.mrb[0].mxu0
  %v335 = vpop.f32.mrb[0].mxu0
  %v336 = vadd.f32 0.0, %v335
  %v337 = vpop.f32.mrb[0].mxu0
  %338 = vdwg.mxu0
  %v339 = vld [vmem:[%s2] sm:$0x1]
  %v341 = vlaneseq
  %v342 = vshrl.u32 %v341, 7
  %v343 = vsub.s32 0, %v342
  %v344 = vrot.slane %v339, %v343
  %v346 = vmul.f32 %v277, %v344
  %v347 = vmul.f32 %v280, %v344
  %v348 = vmul.f32 %v285, %v344
  %v349 = vmul.f32 %v288, %v344
  %v350 = vmul.f32 %v293, %v344
  %v351 = vmul.f32 %v296, %v344
  %v352 = vmul.f32 %v301, %v344
  %v353 = vmul.f32 %v304, %v344
  %v354 = vmul.f32 %v309, %v344
  %v355 = vmul.f32 %v312, %v344
  %v356 = vmul.f32 %v317, %v344
  %v357 = vmul.f32 %v320, %v344
  %v358 = vmul.f32 %v325, %v344
  %v359 = vmul.f32 %v328, %v344
  %v360 = vmul.f32 %v333, %v344
  %v361 = vmul.f32 %v336, %v344
  %v362 = vld [vmem:[%s3] sm:$0x1]
  %v364 = vlaneseq
  %v365 = vshrl.u32 %v364, 7
  %v366 = vsub.s32 0, %v365
  %v367 = vrot.slane %v362, %v366
  %v369 = vadd.f32 %v346, %v367
  %v370 = vadd.f32 %v347, %v367
  %v371 = vadd.f32 %v348, %v367
  %v372 = vadd.f32 %v349, %v367
  %v373 = vadd.f32 %v350, %v367
  %v374 = vadd.f32 %v351, %v367
  %v375 = vadd.f32 %v352, %v367
  %v376 = vadd.f32 %v353, %v367
  %v377 = vadd.f32 %v354, %v367
  %v378 = vadd.f32 %v355, %v367
  %v379 = vadd.f32 %v356, %v367
  %v380 = vadd.f32 %v357, %v367
  %v381 = vadd.f32 %v358, %v367
  %v382 = vadd.f32 %v359, %v367
  %v383 = vadd.f32 %v360, %v367
  %v384 = vadd.f32 %v361, %v367
  %v385 = vmax.f32 %v369, 0.0
  %v386 = vmax.f32 %v370, 0.0
  %v387 = vmax.f32 %v371, 0.0
  %v388 = vmax.f32 %v372, 0.0
  %v389 = vmax.f32 %v373, 0.0
  %v390 = vmax.f32 %v374, 0.0
  %v391 = vmax.f32 %v375, 0.0
  %v392 = vmax.f32 %v376, 0.0
  %v393 = vmax.f32 %v377, 0.0
  %v394 = vmax.f32 %v378, 0.0
  %v395 = vmax.f32 %v379, 0.0
  %v396 = vmax.f32 %v380, 0.0
  %v397 = vmax.f32 %v381, 0.0
  %v398 = vmax.f32 %v382, 0.0
  %v399 = vmax.f32 %v383, 0.0
  %v400 = vmax.f32 %v384, 0.0
  %v401 = vpack.c.bf16 %v386, %v385
  %v402 = vpack.c.bf16 %v388, %v387
  %v403 = vpack.c.bf16 %v390, %v389
  %v404 = vpack.c.bf16 %v392, %v391
  %v405 = vpack.c.bf16 %v394, %v393
  %v406 = vpack.c.bf16 %v396, %v395
  %v407 = vpack.c.bf16 %v398, %v397
  %v408 = vpack.c.bf16 %v400, %v399
  %v417 = vunpack.c.l.b16 %v401
  %v418 = vunpack.c.h.b16 %v401
  %v419 = vunpack.c.l.b16 %v402
  %v420 = vunpack.c.h.b16 %v402
  %v421 = vunpack.c.l.b16 %v403
  %v422 = vunpack.c.h.b16 %v403
  %v423 = vunpack.c.l.b16 %v404
  %v424 = vunpack.c.h.b16 %v404
  %v425 = vunpack.c.l.b16 %v405
  %v426 = vunpack.c.h.b16 %v405
  %v427 = vunpack.c.l.b16 %v406
  %v428 = vunpack.c.h.b16 %v406
  %v429 = vunpack.c.l.b16 %v407
  %v430 = vunpack.c.h.b16 %v407
  %v431 = vunpack.c.l.b16 %v408
  %v432 = vunpack.c.h.b16 %v408
  %v433 = vpack.c.b16 %v417, %v417
  %v434 = vpack.c.b16 %v418, %v418
  %v435 = vpack.c.b16 %v419, %v419
  %v436 = vpack.c.b16 %v420, %v420
  %v437 = vpack.c.b16 %v421, %v421
  %v438 = vpack.c.b16 %v422, %v422
  %v439 = vpack.c.b16 %v423, %v423
  %v440 = vpack.c.b16 %v424, %v424
  %v441 = vpack.c.b16 %v425, %v425
  %v442 = vpack.c.b16 %v426, %v426
  %v443 = vpack.c.b16 %v427, %v427
  %v444 = vpack.c.b16 %v428, %v428
  %v445 = vpack.c.b16 %v429, %v429
  %v446 = vpack.c.b16 %v430, %v430
  %v447 = vpack.c.b16 %v431, %v431
  %v448 = vpack.c.b16 %v432, %v432
  %465 = vst [vmem:[%s4] sm:$0xf] %v433
  %466 = vst [vmem:[%s4 + $0x4] sm:$0xf] %v434
  %467 = vst [vmem:[%s4 + $0x8] sm:$0xf] %v435
  %468 = vst [vmem:[%s4 + $0xc] sm:$0xf] %v436
  %469 = vst [vmem:[%s4 + $0x10] sm:$0xf] %v437
  %470 = vst [vmem:[%s4 + $0x14] sm:$0xf] %v438
  %471 = vst [vmem:[%s4 + $0x18] sm:$0xf] %v439
  %472 = vst [vmem:[%s4 + $0x1c] sm:$0xf] %v440
  %473 = vst [vmem:[%s4 + $0x20] sm:$0xf] %v441
  %474 = vst [vmem:[%s4 + $0x24] sm:$0xf] %v442
  %475 = vst [vmem:[%s4 + $0x28] sm:$0xf] %v443
  %476 = vst [vmem:[%s4 + $0x2c] sm:$0xf] %v444
  %477 = vst [vmem:[%s4 + $0x30] sm:$0xf] %v445
  %478 = vst [vmem:[%s4 + $0x34] sm:$0xf] %v446
  %479 = vst [vmem:[%s4 + $0x38] sm:$0xf] %v447
  %480 = vst [vmem:[%s4 + $0x3c] sm:$0xf] %v448
  // Predicated region
  $region18: #{densenet_forward.14} parent=0 // pred_check
    _
  $region19: #{densenet_forward.14} parent=0 // pred_check_branch
    %482 = sbr.rel (0) target = $region21
  $region20: #{densenet_forward.14} parent=0 // pred_region
    _
  $region21: #{densenet_forward.14} parent=0 // pred_fallthru
    _
  // Predicated region
  $region22: #{densenet_forward.14} parent=0 // pred_check
    _
  $region23: #{densenet_forward.14} parent=0 // pred_check_branch
    %484 = sbr.rel (0) target = $region25
  $region24: #{densenet_forward.14} parent=0 // pred_region
    _
  $region25: #{densenet_forward.14} parent=0 // pred_fallthru
    _

// kernel: densenet_forward.16
$region0: #{densenet_forward.16}
  #allocation0 [shape = 'u32[]', space=smem, size = 0x4, offset = 0x4, fixed_abs, tag = 'smem constant byte address 0x4 - core index']
  #allocation1 [shape = 'u32[144,128]{1,0:T(1,128)}', space=vmem, size = 0x12000, scoped, tag = 'internal scratch']
  %s0 = inlined_call_operand.vmem [shape: bf16[32,128], index: 0, kind: input, shape index: {}]
  %s1 = inlined_call_operand.vmem [shape: bf16[128,128], index: 1, kind: input, shape index: {}]
  %s2 = inlined_call_operand.vmem [shape: f32[1,128], index: 2, kind: input, shape index: {}]
  %s3 = inlined_call_operand.vmem [shape: f32[1,128], index: 3, kind: input, shape index: {}]
  %s4 = inlined_call_operand.vmem [shape: f32[1,128], index: 4, kind: input, shape index: {}]
  %s5 = inlined_call_operand.vmem [shape: f32[1,128], index: 5, kind: input, shape index: {}]
  %s6 = inlined_call_operand.vmem [shape: bf16[32,128], index: 6, kind: output, shape index: {}]
  %s7 = sld [smem:[#allocation0]]
  $region34: #{densenet_forward.16} parent=0
    _
  %s9 = ssub.s32 1, %s7
  %s10 = scalar_select 0, %s9, %s7
  // Predicated region
  $region2: #{densenet_forward.16} parent=0 // pred_check
    _
  $region3: #{densenet_forward.16} parent=0 // pred_check_branch
    %12 = sbr.rel (0) target = $region5
  $region4: #{densenet_forward.16} parent=0 // pred_region
    _
  $region5: #{densenet_forward.16} parent=0 // pred_fallthru
    _
  // Predicated region
  $region6: #{densenet_forward.16} parent=0 // pred_check
    _
  $region7: #{densenet_forward.16} parent=0 // pred_check_branch
    %14 = sbr.rel (0) target = $region9
  $region8: #{densenet_forward.16} parent=0 // pred_region
    _
  $region9: #{densenet_forward.16} parent=0 // pred_fallthru
    _
  // Predicated region
  $region10: #{densenet_forward.16} parent=0 // pred_check
    _
  $region11: #{densenet_forward.16} parent=0 // pred_check_branch
    %16 = sbr.rel (0) target = $region13
  $region12: #{densenet_forward.16} parent=0 // pred_region
    _
  $region13: #{densenet_forward.16} parent=0 // pred_fallthru
    _
  // Predicated region
  $region14: #{densenet_forward.16} parent=0 // pred_check
    _
  $region15: #{densenet_forward.16} parent=0 // pred_check_branch
    %18 = sbr.rel (0) target = $region17
  $region16: #{densenet_forward.16} parent=0 // pred_region
    _
  $region17: #{densenet_forward.16} parent=0 // pred_fallthru
    _
  // Predicated region
  $region18: #{densenet_forward.16} parent=0 // pred_check
    _
  $region19: #{densenet_forward.16} parent=0 // pred_check_branch
    %20 = sbr.rel (0) target = $region21
  $region20: #{densenet_forward.16} parent=0 // pred_region
    _
  $region21: #{densenet_forward.16} parent=0 // pred_fallthru
    _
  // Predicated region
  $region22: #{densenet_forward.16} parent=0 // pred_check
    _
  $region23: #{densenet_forward.16} parent=0 // pred_check_branch
    %22 = sbr.rel (0) target = $region25
  $region24: #{densenet_forward.16} parent=0 // pred_region
    _
  $region25: #{densenet_forward.16} parent=0 // pred_fallthru
    _
  %v24 = vld [vmem:[%s0] sm:$0xf]
  %v25 = vld [vmem:[%s0 + $0x4] sm:$0xf]
  %v26 = vld [vmem:[%s0 + $0x8] sm:$0xf]
  %v27 = vld [vmem:[%s0 + $0xc] sm:$0xf]
  %v28 = vunpack.c.l.bf16 %v24
  %v29 = vunpack.c.l.bf16 %v25
  %v30 = vunpack.c.l.bf16 %v26
  %v31 = vunpack.c.l.bf16 %v27
  %v32 = vld [vmem:[%s2] sm:$0x1]
  %v34 = vlaneseq
  %v35 = vshrl.u32 %v34, 7
  %v36 = vsub.s32 0, %v35
  %v37 = vrot.slane %v32, %v36
  %v39 = vmul.f32 %v28, %v37
  %v40 = vmul.f32 %v29, %v37
  %v41 = vmul.f32 %v30, %v37
  %v42 = vmul.f32 %v31, %v37
  %v43 = vld [vmem:[%s3] sm:$0x1]
  %v45 = vlaneseq
  %v46 = vshrl.u32 %v45, 7
  %v47 = vsub.s32 0, %v46
  %v48 = vrot.slane %v43, %v47
  %v50 = vadd.f32 %v39, %v48
  %v51 = vadd.f32 %v40, %v48
  %v52 = vadd.f32 %v41, %v48
  %v53 = vadd.f32 %v42, %v48
  %v54 = vmax.f32 %v50, 0.0
  %v55 = vmax.f32 %v51, 0.0
  %v56 = vmax.f32 %v52, 0.0
  %v57 = vmax.f32 %v53, 0.0
  %v58 = vpack.c.bf16 %v55, %v54
  %v59 = vpack.c.bf16 %v57, %v56
  %v60 = vld [vmem:[%s1] sm:$0xf]
  %v61 = vld [vmem:[%s1 + $0x4] sm:$0xf]
  %v62 = vld [vmem:[%s1 + $0x8] sm:$0xf]
  %v63 = vld [vmem:[%s1 + $0xc] sm:$0xf]
  %v64 = vld [vmem:[%s1 + $0x10] sm:$0xf]
  %v65 = vld [vmem:[%s1 + $0x14] sm:$0xf]
  %v66 = vld [vmem:[%s1 + $0x18] sm:$0xf]
  %v67 = vld [vmem:[%s1 + $0x1c] sm:$0xf]
  %v68 = vld [vmem:[%s1 + $0x20] sm:$0xf]
  %v69 = vld [vmem:[%s1 + $0x24] sm:$0xf]
  %v70 = vld [vmem:[%s1 + $0x28] sm:$0xf]
  %v71 = vld [vmem:[%s1 + $0x2c] sm:$0xf]
  %v72 = vld [vmem:[%s1 + $0x30] sm:$0xf]
  %v73 = vld [vmem:[%s1 + $0x34] sm:$0xf]
  %v74 = vld [vmem:[%s1 + $0x38] sm:$0xf]
  %v75 = vld [vmem:[%s1 + $0x3c] sm:$0xf]
  %v92 = vunpack.c.l.b16 %v60
  %v93 = vunpack.c.l.b16 %v61
  %v94 = vunpack.c.l.b16 %v62
  %v95 = vunpack.c.l.b16 %v63
  %v96 = vunpack.c.l.b16 %v64
  %v97 = vunpack.c.l.b16 %v65
  %v98 = vunpack.c.l.b16 %v66
  %v99 = vunpack.c.l.b16 %v67
  %v100 = vunpack.c.l.b16 %v68
  %v101 = vunpack.c.l.b16 %v69
  %v102 = vunpack.c.l.b16 %v70
  %v103 = vunpack.c.l.b16 %v71
  %v104 = vunpack.c.l.b16 %v72
  %v105 = vunpack.c.l.b16 %v73
  %v106 = vunpack.c.l.b16 %v74
  %v107 = vunpack.c.l.b16 %v75
  %v108 = vpack.c.b16 %v93, %v92
  %v109 = vpack.c.b16 %v95, %v94
  %v110 = vpack.c.b16 %v97, %v96
  %v111 = vpack.c.b16 %v99, %v98
  %v112 = vpack.c.b16 %v101, %v100
  %v113 = vpack.c.b16 %v103, %v102
  %v114 = vpack.c.b16 %v105, %v104
  %v115 = vpack.c.b16 %v107, %v106
  %124 = vmatprep.subr.bf16.mxu0 0
  %125 = vmatpush1.bf16.msra.mxu0 %v108
  %126 = vmatprep.subr.bf16.mxu0 0
  %127 = vmatpush1.bf16.msra.mxu0 %v109
  %128 = vmatprep.subr.bf16.mxu0 0
  %129 = vmatpush1.bf16.msra.mxu0 %v110
  %130 = vmatprep.subr.bf16.mxu0 0
  %131 = vmatpush1.bf16.msra.mxu0 %v111
  %132 = vmatprep.subr.bf16.mxu0 0
  %133 = vmatpush1.bf16.msra.mxu0 %v112
  %134 = vmatprep.subr.bf16.mxu0 0
  %135 = vmatpush1.bf16.msra.mxu0 %v113
  %136 = vmatprep.subr.bf16.mxu0 0
  %137 = vmatpush1.bf16.msra.mxu0 %v114
  %138 = vmatprep.subr.bf16.mxu0 0
  %139 = vmatpush1.bf16.msra.mxu0 %v115
  %140 = vmatprep.subr.bf16.mxu0 0
  %141 = vmatpush1.bf16.msra.mxu0 0
  %142 = vmatprep.subr.bf16.mxu0 0
  %143 = vmatpush1.bf16.msra.mxu0 0
  %144 = vmatprep.subr.bf16.mxu0 0
  %145 = vmatpush1.bf16.msra.mxu0 0
  %146 = vmatprep.subr.bf16.mxu0 0
  %147 = vmatpush1.bf16.msra.mxu0 0
  %148 = vmatprep.subr.bf16.mxu0 0
  %149 = vmatpush1.bf16.msra.mxu0 0
  %150 = vmatprep.subr.bf16.mxu0 0
  %151 = vmatpush1.bf16.msra.mxu0 0
  %152 = vmatprep.subr.bf16.mxu0 0
  %153 = vmatpush1.bf16.msra.mxu0 0
  %154 = vmatprep.subr.bf16.mxu0 0
  %155 = vmatpush1.bf16.msra.mxu0 0
  %156 = vmatprep.mubr.bf16.mxu0 0
  %157 = vmatmul.mubr.bf16.gmra.mrb[0].mxu0 %v58
  %v158 = vpop.f32.mrb[0].mxu0
  %v159 = vadd.f32 0.0, %v158
  %v160 = vpop.f32.mrb[0].mxu0
  %v161 = vpop.f32.mrb[0].mxu0
  %v162 = vadd.f32 0.0, %v161
  %v163 = vpop.f32.mrb[0].mxu0
  %164 = vmatprep.mubr.bf16.mxu0 0
  %165 = vmatmul.mubr.bf16.gmra.mrb[0].mxu0 %v59
  %v166 = vpop.f32.mrb[0].mxu0
  %v167 = vadd.f32 0.0, %v166
  %v168 = vpop.f32.mrb[0].mxu0
  %v169 = vpop.f32.mrb[0].mxu0
  %v170 = vadd.f32 0.0, %v169
  %v171 = vpop.f32.mrb[0].mxu0
  %172 = vdwg.mxu0
  %v173 = vld [vmem:[%s4] sm:$0x1]
  %v175 = vlaneseq
  %v176 = vshrl.u32 %v175, 7
  %v177 = vsub.s32 0, %v176
  %v178 = vrot.slane %v173, %v177
  %v180 = vmul.f32 %v159, %v178
  %v181 = vmul.f32 %v162, %v178
  %v182 = vmul.f32 %v167, %v178
  %v183 = vmul.f32 %v170, %v178
  %v184 = vld [vmem:[%s5] sm:$0x1]
  %v186 = vlaneseq
  %v187 = vshrl.u32 %v186, 7
  %v188 = vsub.s32 0, %v187
  %v189 = vrot.slane %v184, %v188
  %v191 = vadd.f32 %v180, %v189
  %v192 = vadd.f32 %v181, %v189
  %v193 = vadd.f32 %v182, %v189
  %v194 = vadd.f32 %v183, %v189
  %v195 = vmax.f32 %v191, 0.0
  %v196 = vmax.f32 %v192, 0.0
  %v197 = vmax.f32 %v193, 0.0
  %v198 = vmax.f32 %v194, 0.0
  %v199 = vpack.c.bf16 %v196, %v195
  %v200 = vpack.c.bf16 %v198, %v197
  %v203 = vunpack.c.l.b16 %v199
  %v204 = vunpack.c.h.b16 %v199
  %v205 = vunpack.c.l.b16 %v200
  %v206 = vunpack.c.h.b16 %v200
  %v207 = vpack.c.b16 %v203, %v203
  %v208 = vpack.c.b16 %v204, %v204
  %v209 = vpack.c.b16 %v205, %v205
  %v210 = vpack.c.b16 %v206, %v206
  %215 = vst [vmem:[%s6] sm:$0xf] %v207
  %216 = vst [vmem:[%s6 + $0x4] sm:$0xf] %v208
  %217 = vst [vmem:[%s6 + $0x8] sm:$0xf] %v209
  %218 = vst [vmem:[%s6 + $0xc] sm:$0xf] %v210
  // Predicated region
  $region26: #{densenet_forward.16} parent=0 // pred_check
    _
  $region27: #{densenet_forward.16} parent=0 // pred_check_branch
    %220 = sbr.rel (0) target = $region29
  $region28: #{densenet_forward.16} parent=0 // pred_region
    _
  $region29: #{densenet_forward.16} parent=0 // pred_fallthru
    _
  // Predicated region
  $region30: #{densenet_forward.16} parent=0 // pred_check
    _
  $region31: #{densenet_forward.16} parent=0 // pred_check_branch
    %222 = sbr.rel (0) target = $region33
  $region32: #{densenet_forward.16} parent=0 // pred_region
    _
  $region33: #{densenet_forward.16} parent=0 // pred_fallthru
    _

// kernel: densenet_forward.17
$region0: #{densenet_forward.17}
  #allocation0 [shape = 'u32[]', space=smem, size = 0x4, offset = 0x4, fixed_abs, tag = 'smem constant byte address 0x4 - core index']
  #allocation1 [shape = 'u32[144,128]{1,0:T(1,128)}', space=vmem, size = 0x12000, scoped, tag = 'internal scratch']
  %s0 = inlined_call_operand.vmem [shape: bf16[2,6,6,128], index: 0, kind: input, shape index: {}]
  %s1 = inlined_call_operand.vmem [shape: bf16[3,3,128,128], index: 1, kind: input, shape index: {}]
  %s2 = inlined_call_operand.vmem [shape: bf16[2,4,4,128], index: 2, kind: output, shape index: {}]
  %s3 = sld [smem:[#allocation0]]
  $region48: #{densenet_forward.17} parent=0
    _
  %s5 = ssub.s32 1, %s3
  %s6 = scalar_select 0, %s5, %s3
  loop: start=0, step=1, limit=4
  $region2: #{densenet_forward.17} parent=0 // loop_pre_header
    _
  $region3: #{densenet_forward.17} parent=0 // loop_header
    %s8 = sphi 0, %s12
    %p9 = scmp.ge.s32.totalorder %s8, 4
    %s15 = sphi 0, %s27
    %s16 = sphi 0, %s23
    %s17 = sphi 0, %s15
    %s18 = sphi 0, %s16
    %s19 = sphi 0, %s17
    %s20 = sphi 0, %s18
    %s30 = sphi 0, %s32
    %s33 = sphi 0, %s30
    %s34 = sphi 0, %s33
    %s50 = sphi 0, %s34
    %s56 = sphi 0, %s58
    %s59 = sphi 0, %s56
    %s60 = sphi 0, %s59
    %s76 = sphi 0, %s60
    %s84 = sphi 0, %s86
    %s87 = sphi 0, %s84
    %s88 = sphi 0, %s87
    %s104 = sphi 0, %s88
  $region4: #{densenet_forward.17} parent=0 // loop_header_branch
    %11 = sbr.rel (%p9) target = $region8
  $region5: #{densenet_forward.17} parent=0 // loop_body
    %s13 = ssub.s32 %s8, 1
    %s14 = ssub.s32 %s8, 2
    %s21 = sadd.s32 1, %s16
    %p22 = scmp.ge.s32.totalorder %s21, 1
    %s23 = scalar_select %p22, 0, %s21
    %s24 = sadd.s32 1, %s15
    %s25 = scalar_select %p22, %s24, %s15
    %p26 = scmp.ge.s32.totalorder %s25, 2
    %s27 = scalar_select %p26, 0, %s25
    %s28 = ssub.s32 %s15, %s27
    %p29 = scmp.eq.s32.totalorder %s28, 0
    %s31 = sadd.s32 %s30, 1
    %s32 = scalar_select %p29, %s30, %s31
    %p35 = pneg %p29
    %p36 = scmp.eq.s32.totalorder %s8, 1
    %p37 = por %p35, %p36
    %p38 = scmp.ne.s32.totalorder %s30, %s33
    %p39 = scmp.eq.s32.totalorder %s8, 0
    %p40 = por %p38, %p39
    %p41 = scmp.ne.s32.totalorder %s30, %s33
    %p42 = scmp.eq.s32.totalorder %s13, 1
    %p43 = por %p41, %p42
    %p44 = scmp.ne.s32.totalorder %s33, %s34
    %p45 = scmp.eq.s32.totalorder %s13, 0
    %p46 = por %p44, %p45
    %p47 = scmp.ne.s32.totalorder %s33, %s34
    %p48 = scmp.eq.s32.totalorder %s14, 1
    %p49 = por %p47, %p48
    %p51 = scmp.ne.s32.totalorder %s34, %s50
    %p52 = scmp.eq.s32.totalorder %s14, 0
    %p53 = por %p51, %p52
    %s54 = ssub.s32 %s16, %s23
    %p55 = scmp.eq.s32.totalorder %s54, 0
    %s57 = sadd.s32 %s56, 1
    %s58 = scalar_select %p55, %s56, %s57
    %p61 = pneg %p55
    %p62 = scmp.eq.s32.totalorder %s8, 1
    %p63 = por %p61, %p62
    %p64 = scmp.ne.s32.totalorder %s56, %s59
    %p65 = scmp.eq.s32.totalorder %s8, 0
    %p66 = por %p64, %p65
    %p67 = scmp.ne.s32.totalorder %s56, %s59
    %p68 = scmp.eq.s32.totalorder %s13, 1
    %p69 = por %p67, %p68
    %p70 = scmp.ne.s32.totalorder %s59, %s60
    %p71 = scmp.eq.s32.totalorder %s13, 0
    %p72 = por %p70, %p71
    %p73 = scmp.ne.s32.totalorder %s59, %s60
    %p74 = scmp.eq.s32.totalorder %s14, 1
    %p75 = por %p73, %p74
    %p77 = scmp.ne.s32.totalorder %s60, %s76
    %p78 = scmp.eq.s32.totalorder %s14, 0
    %p79 = por %p77, %p78
    %s80 = ssub.s32 %s15, %s27
    %s81 = ssub.s32 %s16, %s23
    %s82 = sor.u32 %s80, %s81
    %p83 = scmp.eq.s32.totalorder %s82, 0
    %s85 = sadd.s32 %s84, 1
    %s86 = scalar_select %p83, %s84, %s85
    %p89 = pneg %p83
    %p90 = scmp.eq.s32.totalorder %s8, 1
    %p91 = por %p89, %p90
    %p92 = scmp.ne.s32.totalorder %s84, %s87
    %p93 = scmp.eq.s32.totalorder %s8, 0
    %p94 = por %p92, %p93
    %p95 = scmp.ne.s32.totalorder %s84, %s87
    %p96 = scmp.eq.s32.totalorder %s13, 1
    %p97 = por %p95, %p96
    %p98 = scmp.ne.s32.totalorder %s87, %s88
    %p99 = scmp.eq.s32.totalorder %s13, 0
    %p100 = por %p98, %p99
    %p101 = scmp.ne.s32.totalorder %s87, %s88
    %p102 = scmp.eq.s32.totalorder %s14, 1
    %p103 = por %p101, %p102
    %p105 = scmp.ne.s32.totalorder %s88, %s104
    %p106 = scmp.eq.s32.totalorder %s14, 0
    %p107 = por %p105, %p106
    %p108 = scmp.le.s32.totalorder 1, %s8
    %p109 = scmp.lt.s32.totalorder %s8, 3
    %p110 = pnand %p108, %p109
    %p111 = pneg %p110
    // Predicated region
    $region9: #{densenet_forward.17} parent=5 // pred_check
      _
    $region10: #{densenet_forward.17} parent=5 // pred_check_branch
      %113 = sbr.rel (%p110) target = $region12
    $region11: #{densenet_forward.17} parent=5 // pred_region
      %s114 = ssub.s32 %s8, 1
      // Predicated region
      $region13: #{densenet_forward.17} parent=11 // pred_check
        %p115 = pneg %p72
      $region14: #{densenet_forward.17} parent=11 // pred_check_branch
        %117 = sbr.rel (%p115) target = $region16
      $region15: #{densenet_forward.17} parent=11 // pred_region
        %p118 = scmp.lt.s32.totalorder %s18, 0
        %s119 = scalar_select %p118, %s18, 0
        %s120 = smul.addr %s119, 4
        %s121 = scalar_lea.vmem %s1, %s120
      $region16: #{densenet_forward.17} parent=11 // pred_fallthru
        _
    $region12: #{densenet_forward.17} parent=5 // pred_fallthru
      _
    %p122 = scmp.lt.s32.totalorder %s8, 2
    // Predicated region
    $region17: #{densenet_forward.17} parent=5 // pred_check
      %p123 = pneg %p122
    $region18: #{densenet_forward.17} parent=5 // pred_check_branch
      %125 = sbr.rel (%p123) target = $region20
    $region19: #{densenet_forward.17} parent=5 // pred_region
      // Predicated region
      $region21: #{densenet_forward.17} parent=19 // pred_check
        %p126 = pneg %p40
      $region22: #{densenet_forward.17} parent=19 // pred_check_branch
        %128 = sbr.rel (%p126) target = $region24
      $region23: #{densenet_forward.17} parent=19 // pred_region
        %p129 = scmp.lt.s32.totalorder %s15, 1
        %s130 = scalar_select %p129, %s15, 1
        %s131 = smul.addr %s130, 6
        %s132 = smul.addr %s131, 4
        %s133 = scalar_lea.vmem %s0, %s132
      $region24: #{densenet_forward.17} parent=19 // pred_fallthru
        _
    $region20: #{densenet_forward.17} parent=5 // pred_fallthru
      _
    %p134 = scmp.le.s32.totalorder 1, %s8
    %p135 = scmp.lt.s32.totalorder %s8, 3
    %p136 = pnand %p134, %p135
    %p137 = pneg %p136
    // Predicated region
    $region25: #{densenet_forward.17} parent=5 // pred_check
      _
    $region26: #{densenet_forward.17} parent=5 // pred_check_branch
      %139 = sbr.rel (%p136) target = $region28
    $region27: #{densenet_forward.17} parent=5 // pred_region
      %s140 = ssub.s32 %s8, 1
      %p141 = scmp.lt.s32.totalorder %s17, 1
      %s142 = scalar_select %p141, %s17, 1
      %s143 = smul.addr %s142, 6
      %s144 = smul.addr %s143, 4
      %s145 = scalar_lea.vmem %s0, %s144
      %p146 = pneg %p46
      %p147 = pneg %p43
      %p148 = scmp.lt.s32.totalorder %s18, 0
      %s149 = scalar_select %p148, %s18, 0
      %s150 = smul.addr %s149, 4
      %s151 = scalar_lea.vmem %s1, %s150
      %p152 = pneg %p72
      %p153 = pneg %p69
      %p154 = pneg %p100
      %p155 = pneg %p97
      %p156 = scmp.lt.s32.totalorder %s17, 1
      %s157 = scalar_select %p156, %s17, 1
      %p158 = scmp.lt.s32.totalorder %s18, 0
      %s159 = scalar_select %p158, %s18, 0
      %s160 = smul.addr %s157, 4
      %s161 = sadd.s32 %s159, %s160
      %s162 = smul.addr %s161, 2
      %s163 = scalar_lea.vmem %s2, %s162
      %p164 = scmp.lt.s32.totalorder %s17, 1
      %s165 = scalar_select %p164, %s17, 1
      %s166 = smul.addr %s165, 6
      %s167 = smul.addr %s166, 4
      %s168 = scalar_lea.vmem %s0, %s167
      %p169 = scmp.lt.s32.totalorder %s18, 0
      %s170 = scalar_select %p169, %s18, 0
      %s171 = smul.addr %s170, 4
      %s172 = scalar_lea.vmem %s1, %s171
      %p173 = scmp.lt.s32.totalorder %s17, 1
      %s174 = scalar_select %p173, %s17, 1
      %p175 = scmp.lt.s32.totalorder %s18, 0
      %s176 = scalar_select %p175, %s18, 0
      %s177 = smul.addr %s174, 4
      %s178 = sadd.s32 %s176, %s177
      %s179 = smul.addr %s178, 2
      %s180 = scalar_lea.vmem %s2, %s179
      loop: start=0, step=1, limit=4
      $region29: #{densenet_forward.17} parent=27 // loop_pre_header
        _
      $region30: #{densenet_forward.17} parent=27 // loop_header
        %s183 = sphi 0, %s187
        %p184 = scmp.ge.s32.totalorder %s183, 4
      $region31: #{densenet_forward.17} parent=27 // loop_header_branch
        %186 = sbr.rel (%p184) target = $region35
      $region32: #{densenet_forward.17} parent=27 // loop_body
        %s188 = smul.addr %s183, 4
        %s189 = scalar_lea.vmem %s168, %s188
        %v190 = vld [vmem:[%s189] sm:$0x3]
        %v191 = vld [vmem:[%s172] sm:$0xf]
        %v192 = vld [vmem:[%s172 + $0x4] sm:$0xf]
        %v193 = vld [vmem:[%s172 + $0x8] sm:$0xf]
        %v194 = vld [vmem:[%s172 + $0xc] sm:$0xf]
        %v195 = vld [vmem:[%s172 + $0x10] sm:$0xf]
        %v196 = vld [vmem:[%s172 + $0x14] sm:$0xf]
        %v197 = vld [vmem:[%s172 + $0x18] sm:$0xf]
        %v198 = vld [vmem:[%s172 + $0x1c] sm:$0xf]
        %v199 = vld [vmem:[%s172 + $0x20] sm:$0xf]
        %v200 = vld [vmem:[%s172 + $0x24] sm:$0xf]
        %v201 = vld [vmem:[%s172 + $0x28] sm:$0xf]
        %v202 = vld [vmem:[%s172 + $0x2c] sm:$0xf]
        %v203 = vld [vmem:[%s172 + $0x30] sm:$0xf]
        %v204 = vld [vmem:[%s172 + $0x34] sm:$0xf]
        %v205 = vld [vmem:[%s172 + $0x38] sm:$0xf]
        %v206 = vld [vmem:[%s172 + $0x3c] sm:$0xf]
        %v207 = vld [vmem:[%s189] sm:$0x7]
        %s208 = scalar_lea.vmem %s172, 64
        %v209 = vld [vmem:[%s208] sm:$0xf]
        %v210 = vld [vmem:[%s208 + $0x4] sm:$0xf]
        %v211 = vld [vmem:[%s208 + $0x8] sm:$0xf]
        %v212 = vld [vmem:[%s208 + $0xc] sm:$0xf]
        %v213 = vld [vmem:[%s208 + $0x10] sm:$0xf]
        %v214 = vld [vmem:[%s208 + $0x14] sm:$0xf]
        %v215 = vld [vmem:[%s208 + $0x18] sm:$0xf]
        %v216 = vld [vmem:[%s208 + $0x1c] sm:$0xf]
        %v217 = vld [vmem:[%s208 + $0x20] sm:$0xf]
        %v218 = vld [vmem:[%s208 + $0x24] sm:$0xf]
        %v219 = vld [vmem:[%s208 + $0x28] sm:$0xf]
        %v220 = vld [vmem:[%s208 + $0x2c] sm:$0xf]
        %v221 = vld [vmem:[%s208 + $0x30] sm:$0xf]
        %v222 = vld [vmem:[%s208 + $0x34] sm:$0xf]
        %v223 = vld [vmem:[%s208 + $0x38] sm:$0xf]
        %v224 = vld [vmem:[%s208 + $0x3c] sm:$0xf]
        %v226 = vunpack.c.l.b16 %v207
        %v227 = vpack.c.b16 %v226, %v226
        %v229 = vshrl.u32 %v227, 16
        %v231 = vshll.u32 %v227, 16
        %v233 = vrot.slane %v231, 1
        %v234 = vor.u32 %v229, %v233
        %v252 = vunpack.c.l.b16 %v209
        %v253 = vunpack.c.l.b16 %v210
        %v254 = vunpack.c.l.b16 %v211
        %v255 = vunpack.c.l.b16 %v212
        %v256 = vunpack.c.l.b16 %v213
        %v257 = vunpack.c.l.b16 %v214
        %v258 = vunpack.c.l.b16 %v215
        %v259 = vunpack.c.l.b16 %v216
        %v260 = vunpack.c.l.b16 %v217
        %v261 = vunpack.c.l.b16 %v218
        %v262 = vunpack.c.l.b16 %v219
        %v263 = vunpack.c.l.b16 %v220
        %v264 = vunpack.c.l.b16 %v221
        %v265 = vunpack.c.l.b16 %v222
        %v266 = vunpack.c.l.b16 %v223
        %v267 = vunpack.c.l.b16 %v224
        %v268 = vpack.c.b16 %v253, %v252
        %v269 = vpack.c.b16 %v255, %v254
        %v270 = vpack.c.b16 %v257, %v256
        %v271 = vpack.c.b16 %v259, %v258
        %v272 = vpack.c.b16 %v261, %v260
        %v273 = vpack.c.b16 %v263, %v262
        %v274 = vpack.c.b16 %v265, %v264
        %v275 = vpack.c.b16 %v267, %v266
        %284 = vmatprep.subr.bf16.mxu0 0
        %285 = vmatpush1.bf16.msra.mxu0 %v268
        %286 = vmatprep.subr.bf16.mxu0 0
        %287 = vmatpush1.bf16.msra.mxu0 %v269
        %288 = vmatprep.subr.bf16.mxu0 0
        %289 = vmatpush1.bf16.msra.mxu0 %v270
        %290 = vmatprep.subr.bf16.mxu0 0
        %291 = vmatpush1.bf16.msra.mxu0 %v271
        %292 = vmatprep.subr.bf16.mxu0 0
        %293 = vmatpush1.bf16.msra.mxu0 %v272
        %294 = vmatprep.subr.bf16.mxu0 0
        %295 = vmatpush1.bf16.msra.mxu0 %v273
        %296 = vmatprep.subr.bf16.mxu0 0
        %297 = vmatpush1.bf16.msra.mxu0 %v274
        %298 = vmatprep.subr.bf16.mxu0 0
        %299 = vmatpush1.bf16.msra.mxu0 %v275
        %300 = vmatprep.subr.bf16.mxu0 0
        %301 = vmatpush1.bf16.msra.mxu0 0
        %302 = vmatprep.subr.bf16.mxu0 0
        %303 = vmatpush1.bf16.msra.mxu0 0
        %304 = vmatprep.subr.bf16.mxu0 0
        %305 = vmatpush1.bf16.msra.mxu0 0
        %306 = vmatprep.subr.bf16.mxu0 0
        %307 = vmatpush1.bf16.msra.mxu0 0
        %308 = vmatprep.subr.bf16.mxu0 0
        %309 = vmatpush1.bf16.msra.mxu0 0
        %310 = vmatprep.subr.bf16.mxu0 0
        %311 = vmatpush1.bf16.msra.mxu0 0
        %312 = vmatprep.subr.bf16.mxu0 0
        %313 = vmatpush1.bf16.msra.mxu0 0
        %314 = vmatprep.subr.bf16.mxu0 0
        %315 = vmatpush1.bf16.msra.mxu0 0
        %316 = vmatprep.mubr.bf16.mxu0 0
        %317 = vmatmul.mubr.bf16.gmra.mrb[0].mxu0 %v234
        %v318 = vpop.f32.mrb[0].mxu0
        %v319 = vadd.f32 0.0, %v318
        %v320 = vpop.f32.mrb[0].mxu0
        %v321 = vpop.f32.mrb[0].mxu0
        %v322 = vpop.f32.mrb[0].mxu0
        %323 = vdwg.mxu0
        %v340 = vunpack.c.l.b16 %v191
        %v341 = vunpack.c.l.b16 %v192
        %v342 = vunpack.c.l.b16 %v193
        %v343 = vunpack.c.l.b16 %v194
        %v344 = vunpack.c.l.b16 %v195
        %v345 = vunpack.c.l.b16 %v196
        %v346 = vunpack.c.l.b16 %v197
        %v347 = vunpack.c.l.b16 %v198
        %v348 = vunpack.c.l.b16 %v199
        %v349 = vunpack.c.l.b16 %v200
        %v350 = vunpack.c.l.b16 %v201
        %v351 = vunpack.c.l.b16 %v202
        %v352 = vunpack.c.l.b16 %v203
        %v353 = vunpack.c.l.b16 %v204
        %v354 = vunpack.c.l.b16 %v205
        %v355 = vunpack.c.l.b16 %v206
        %v356 = vpack.c.b16 %v341, %v340
        %v357 = vpack.c.b16 %v343, %v342
        %v358 = vpack.c.b16 %v345, %v344
        %v359 = vpack.c.b16 %v347, %v346
        %v360 = vpack.c.b16 %v349, %v348
        %v361 = vpack.c.b16 %v351, %v350
        %v362 = vpack.c.b16 %v353, %v352
        %v363 = vpack.c.b16 %v355, %v354
        %372 = vmatprep.subr.bf16.mxu0 0
        %373 = vmatpush1.bf16.msra.mxu0 %v356
        %374 = vmatprep.subr.bf16.mxu0 0
        %375 = vmatpush1.bf16.msra.mxu0 %v357
        %376 = vmatprep.subr.bf16.mxu0 0
        %377 = vmatpush1.bf16.msra.mxu0 %v358
        %378 = vmatprep.subr.bf16.mxu0 0
        %379 = vmatpush1.bf16.msra.mxu0 %v359
        %380 = vmatprep.subr.bf16.mxu0 0
        %381 = vmatpush1.bf16.msra.mxu0 %v360
        %382 = vmatprep.subr.bf16.mxu0 0
        %383 = vmatpush1.bf16.msra.mxu0 %v361
        %384 = vmatprep.subr.bf16.mxu0 0
        %385 = vmatpush1.bf16.msra.mxu0 %v362
        %386 = vmatprep.subr.bf16.mxu0 0
        %387 = vmatpush1.bf16.msra.mxu0 %v363
        %388 = vmatprep.subr.bf16.mxu0 0
        %389 = vmatpush1.bf16.msra.mxu0 0
        %390 = vmatprep.subr.bf16.mxu0 0
        %391 = vmatpush1.bf16.msra.mxu0 0
        %392 = vmatprep.subr.bf16.mxu0 0
        %393 = vmatpush1.bf16.msra.mxu0 0
        %394 = vmatprep.subr.bf16.mxu0 0
        %395 = vmatpush1.bf16.msra.mxu0 0
        %396 = vmatprep.subr.bf16.mxu0 0
        %397 = vmatpush1.bf16.msra.mxu0 0
        %398 = vmatprep.subr.bf16.mxu0 0
        %399 = vmatpush1.bf16.msra.mxu0 0
        %400 = vmatprep.subr.bf16.mxu0 0
        %401 = vmatpush1.bf16.msra.mxu0 0
        %402 = vmatprep.subr.bf16.mxu0 0
        %403 = vmatpush1.bf16.msra.mxu0 0
        %404 = vmatprep.mubr.bf16.mxu0 0
        %405 = vmatmul.mubr.bf16.gmra.mrb[0].mxu0 %v190
        %v406 = vpop.f32.mrb[0].mxu0
        %v407 = vadd.f32 %v319, %v406
        %v408 = vpop.f32.mrb[0].mxu0
        %v409 = vpop.f32.mrb[0].mxu0
        %v410 = vpop.f32.mrb[0].mxu0
        %411 = vdwg.mxu0
        %v412 = vld [vmem:[%s189] sm:$0x6]
        %s413 = scalar_lea.vmem %s172, 128
        %v414 = vld [vmem:[%s413] sm:$0xf]
        %v415 = vld [vmem:[%s413 + $0x4] sm:$0xf]
        %v416 = vld [vmem:[%s413 + $0x8] sm:$0xf]
        %v417 = vld [vmem:[%s413 + $0xc] sm:$0xf]
        %v418 = vld [vmem:[%s413 + $0x10] sm:$0xf]
        %v419 = vld [vmem:[%s413 + $0x14] sm:$0xf]
        %v420 = vld [vmem:[%s413 + $0x18] sm:$0xf]
        %v421 = vld [vmem:[%s413 + $0x1c] sm:$0xf]
        %v422 = vld [vmem:[%s413 + $0x20] sm:$0xf]
        %v423 = vld [vmem:[%s413 + $0x24] sm:$0xf]
        %v424 = vld [vmem:[%s413 + $0x28] sm:$0xf]
        %v425 = vld [vmem:[%s413 + $0x2c] sm:$0xf]
        %v426 = vld [vmem:[%s413 + $0x30] sm:$0xf]
        %v427 = vld [vmem:[%s413 + $0x34] sm:$0xf]
        %v428 = vld [vmem:[%s413 + $0x38] sm:$0xf]
        %v429 = vld [vmem:[%s413 + $0x3c] sm:$0xf]
        %v431 = vunpack.c.l.b16 %v412
        %v432 = vpack.c.b16 %v431, %v431
        %v433 = vrot.slane %v432, 1
        %v451 = vunpack.c.l.b16 %v414
        %v452 = vunpack.c.l.b16 %v415
        %v453 = vunpack.c.l.b16 %v416
        %v454 = vunpack.c.l.b16 %v417
        %v455 = vunpack.c.l.b16 %v418
        %v456 = vunpack.c.l.b16 %v419
        %v457 = vunpack.c.l.b16 %v420
        %v458 = vunpack.c.l.b16 %v421
        %v459 = vunpack.c.l.b16 %v422
        %v460 = vunpack.c.l.b16 %v423
        %v461 = vunpack.c.l.b16 %v424
        %v462 = vunpack.c.l.b16 %v425
        %v463 = vunpack.c.l.b16 %v426
        %v464 = vunpack.c.l.b16 %v427
        %v465 = vunpack.c.l.b16 %v428
        %v466 = vunpack.c.l.b16 %v429
        %v467 = vpack.c.b16 %v452, %v451
        %v468 = vpack.c.b16 %v454, %v453
        %v469 = vpack.c.b16 %v456, %v455
        %v470 = vpack.c.b16 %v458, %v457
        %v471 = vpack.c.b16 %v460, %v459
        %v472 = vpack.c.b16 %v462, %v461
        %v473 = vpack.c.b16 %v464, %v463
        %v474 = vpack.c.b16 %v466, %v465
        %483 = vmatprep.subr.bf16.mxu0 0
        %484 = vmatpush1.bf16.msra.mxu0 %v467
        %485 = vmatprep.subr.bf16.mxu0 0
        %486 = vmatpush1.bf16.msra.mxu0 %v468
        %487 = vmatprep.subr.bf16.mxu0 0
        %488 = vmatpush1.bf16.msra.mxu0 %v469
        %489 = vmatprep.subr.bf16.mxu0 0
        %490 = vmatpush1.bf16.msra.mxu0 %v470
        %491 = vmatprep.subr.bf16.mxu0 0
        %492 = vmatpush1.bf16.msra.mxu0 %v471
        %493 = vmatprep.subr.bf16.mxu0 0
        %494 = vmatpush1.bf16.msra.mxu0 %v472
        %495 = vmatprep.subr.bf16.mxu0 0
        %496 = vmatpush1.bf16.msra.mxu0 %v473
        %497 = vmatprep.subr.bf16.mxu0 0
        %498 = vmatpush1.bf16.msra.mxu0 %v474
        %499 = vmatprep.subr.bf16.mxu0 0
        %500 = vmatpush1.bf16.msra.mxu0 0
        %501 = vmatprep.subr.bf16.mxu0 0
        %502 = vmatpush1.bf16.msra.mxu0 0
        %503 = vmatprep.subr.bf16.mxu0 0
        %504 = vmatpush1.bf16.msra.mxu0 0
        %505 = vmatprep.subr.bf16.mxu0 0
        %506 = vmatpush1.bf16.msra.mxu0 0
        %507 = vmatprep.subr.bf16.mxu0 0
        %508 = vmatpush1.bf16.msra.mxu0 0
        %509 = vmatprep.subr.bf16.mxu0 0
        %510 = vmatpush1.bf16.msra.mxu0 0
        %511 = vmatprep.subr.bf16.mxu0 0
        %512 = vmatpush1.bf16.msra.mxu0 0
        %513 = vmatprep.subr.bf16.mxu0 0
        %514 = vmatpush1.bf16.msra.mxu0 0
        %515 = vmatprep.mubr.bf16.mxu0 0
        %516 = vmatmul.mubr.bf16.gmra.mrb[0].mxu0 %v433
        %v517 = vpop.f32.mrb[0].mxu0
        %v518 = vadd.f32 0.0, %v517
        %v519 = vpop.f32.mrb[0].mxu0
        %v520 = vpop.f32.mrb[0].mxu0
        %v521 = vpop.f32.mrb[0].mxu0
        %522 = vdwg.mxu0
        %v523 = vadd.f32 %v407, %v518
        %s524 = sadd.s32 %s183, 1
        %s525 = smul.addr %s524, 4
        %s526 = scalar_lea.vmem %s168, %s525
        %v527 = vld [vmem:[%s526] sm:$0x3]
        %s528 = scalar_lea.vmem %s172, 192
        %v529 = vld [vmem:[%s528] sm:$0xf]
        %v530 = vld [vmem:[%s528 + $0x4] sm:$0xf]
        %v531 = vld [vmem:[%s528 + $0x8] sm:$0xf]
        %v532 = vld [vmem:[%s528 + $0xc] sm:$0xf]
        %v533 = vld [vmem:[%s528 + $0x10] sm:$0xf]
        %v534 = vld [vmem:[%s528 + $0x14] sm:$0xf]
        %v535 = vld [vmem:[%s528 + $0x18] sm:$0xf]
        %v536 = vld [vmem:[%s528 + $0x1c] sm:$0xf]
        %v537 = vld [vmem:[%s528 + $0x20] sm:$0xf]
        %v538 = vld [vmem:[%s528 + $0x24] sm:$0xf]
        %v539 = vld [vmem:[%s528 + $0x28] sm:$0xf]
        %v540 = vld [vmem:[%s528 + $0x2c] sm:$0xf]
        %v541 = vld [vmem:[%s528 + $0x30] sm:$0xf]
        %v542 = vld [vmem:[%s528 + $0x34] sm:$0xf]
        %v543 = vld [vmem:[%s528 + $0x38] sm:$0xf]
        %v544 = vld [vmem:[%s528 + $0x3c] sm:$0xf]
        %v561 = vunpack.c.l.b16 %v529
        %v562 = vunpack.c.l.b16 %v530
        %v563 = vunpack.c.l.b16 %v531
        %v564 = vunpack.c.l.b16 %v532
        %v565 = vunpack.c.l.b16 %v533
        %v566 = vunpack.c.l.b16 %v534
        %v567 = vunpack.c.l.b16 %v535
        %v568 = vunpack.c.l.b16 %v536
        %v569 = vunpack.c.l.b16 %v537
        %v570 = vunpack.c.l.b16 %v538
        %v571 = vunpack.c.l.b16 %v539
        %v572 = vunpack.c.l.b16 %v540
        %v573 = vunpack.c.l.b16 %v541
        %v574 = vunpack.c.l.b16 %v542
        %v575 = vunpack.c.l.b16 %v543
        %v576 = vunpack.c.l.b16 %v544
        %v577 = vpack.c.b16 %v562, %v561
        %v578 = vpack.c.b16 %v564, %v563
        %v579 = vpack.c.b16 %v566, %v565
        %v580 = vpack.c.b16 %v568, %v567
        %v581 = vpack.c.b16 %v570, %v569
        %v582 = vpack.c.b16 %v572, %v571
        %v583 = vpack.c.b16 %v574, %v573
        %v584 = vpack.c.b16 %v576, %v575
        %593 = vmatprep.subr.bf16.mxu0 0
        %594 = vmatpush1.bf16.msra.mxu0 %v577
        %595 = vmatprep.subr.bf16.mxu0 0
        %596 = vmatpush1.bf16.msra.mxu0 %v578
        %597 = vmatprep.subr.bf16.mxu0 0
        %598 = vmatpush1.bf16.msra.mxu0 %v579
        %599 = vmatprep.subr.bf16.mxu0 0
        %600 = vmatpush1.bf16.msra.mxu0 %v580
        %601 = vmatprep.subr.bf16.mxu0 0
        %602 = vmatpush1.bf16.msra.mxu0 %v581
        %603 = vmatprep.subr.bf16.mxu0 0
        %604 = vmatpush1.bf16.msra.mxu0 %v582
        %605 = vmatprep.subr.bf16.mxu0 0
        %606 = vmatpush1.bf16.msra.mxu0 %v583
        %607 = vmatprep.subr.bf16.mxu0 0
        %608 = vmatpush1.bf16.msra.mxu0 %v584
        %609 = vmatprep.subr.bf16.mxu0 0
        %610 = vmatpush1.bf16.msra.mxu0 0
        %611 = vmatprep.subr.bf16.mxu0 0
        %612 = vmatpush1.bf16.msra.mxu0 0
        %613 = vmatprep.subr.bf16.mxu0 0
        %614 = vmatpush1.bf16.msra.mxu0 0
        %615 = vmatprep.subr.bf16.mxu0 0
        %616 = vmatpush1.bf16.msra.mxu0 0
        %617 = vmatprep.subr.bf16.mxu0 0
        %618 = vmatpush1.bf16.msra.mxu0 0
        %619 = vmatprep.subr.bf16.mxu0 0
        %620 = vmatpush1.bf16.msra.mxu0 0
        %621 = vmatprep.subr.bf16.mxu0 0
        %622 = vmatpush1.bf16.msra.mxu0 0
        %623 = vmatprep.subr.bf16.mxu0 0
        %624 = vmatpush1.bf16.msra.mxu0 0
        %625 = vmatprep.mubr.bf16.mxu0 0
        %626 = vmatmul.mubr.bf16.gmra.mrb[0].mxu0 %v527
        %v627 = vpop.f32.mrb[0].mxu0
        %v628 = vadd.f32 0.0, %v627
        %v629 = vpop.f32.mrb[0].mxu0
        %v630 = vpop.f32.mrb[0].mxu0
        %v631 = vpop.f32.mrb[0].mxu0
        %632 = vdwg.mxu0
        %v633 = vadd.f32 %v523, %v628
        %v634 = vld [vmem:[%s526] sm:$0x7]
        %s635 = scalar_lea.vmem %s172, 256
        %v636 = vld [vmem:[%s635] sm:$0xf]
        %v637 = vld [vmem:[%s635 + $0x4] sm:$0xf]
        %v638 = vld [vmem:[%s635 + $0x8] sm:$0xf]
        %v639 = vld [vmem:[%s635 + $0xc] sm:$0xf]
        %v640 = vld [vmem:[%s635 + $0x10] sm:$0xf]
        %v641 = vld [vmem:[%s635 + $0x14] sm:$0xf]
        %v642 = vld [vmem:[%s635 + $0x18] sm:$0xf]
        %v643 = vld [vmem:[%s635 + $0x1c] sm:$0xf]
        %v644 = vld [vmem:[%s635 + $0x20] sm:$0xf]
        %v645 = vld [vmem:[%s635 + $0x24] sm:$0xf]
        %v646 = vld [vmem:[%s635 + $0x28] sm:$0xf]
        %v647 = vld [vmem:[%s635 + $0x2c] sm:$0xf]
        %v648 = vld [vmem:[%s635 + $0x30] sm:$0xf]
        %v649 = vld [vmem:[%s635 + $0x34] sm:$0xf]
        %v650 = vld [vmem:[%s635 + $0x38] sm:$0xf]
        %v651 = vld [vmem:[%s635 + $0x3c] sm:$0xf]
        %v653 = vunpack.c.l.b16 %v634
        %v654 = vpack.c.b16 %v653, %v653
        %v656 = vshrl.u32 %v654, 16
        %v658 = vshll.u32 %v654, 16
        %v660 = vrot.slane %v658, 1
        %v661 = vor.u32 %v656, %v660
        %v679 = vunpack.c.l.b16 %v636
        %v680 = vunpack.c.l.b16 %v637
        %v681 = vunpack.c.l.b16 %v638
        %v682 = vunpack.c.l.b16 %v639
        %v683 = vunpack.c.l.b16 %v640
        %v684 = vunpack.c.l.b16 %v641
        %v685 = vunpack.c.l.b16 %v642
        %v686 = vunpack.c.l.b16 %v643
        %v687 = vunpack.c.l.b16 %v644
        %v688 = vunpack.c.l.b16 %v645
        %v689 = vunpack.c.l.b16 %v646
        %v690 = vunpack.c.l.b16 %v647
        %v691 = vunpack.c.l.b16 %v648
        %v692 = vunpack.c.l.b16 %v649
        %v693 = vunpack.c.l.b16 %v650
        %v694 = vunpack.c.l.b16 %v651
        %v695 = vpack.c.b16 %v680, %v679
        %v696 = vpack.c.b16 %v682, %v681
        %v697 = vpack.c.b16 %v684, %v683
        %v698 = vpack.c.b16 %v686, %v685
        %v699 = vpack.c.b16 %v688, %v687
        %v700 = vpack.c.b16 %v690, %v689
        %v701 = vpack.c.b16 %v692, %v691
        %v702 = vpack.c.b16 %v694, %v693
        %711 = vmatprep.subr.bf16.mxu0 0
        %712 = vmatpush1.bf16.msra.mxu0 %v695
        %713 = vmatprep.subr.bf16.mxu0 0
        %714 = vmatpush1.bf16.msra.mxu0 %v696
        %715 = vmatprep.subr.bf16.mxu0 0
        %716 = vmatpush1.bf16.msra.mxu0 %v697
        %717 = vmatprep.subr.bf16.mxu0 0
        %718 = vmatpush1.bf16.msra.mxu0 %v698
        %719 = vmatprep.subr.bf16.mxu0 0
        %720 = vmatpush1.bf16.msra.mxu0 %v699
        %721 = vmatprep.subr.bf16.mxu0 0
        %722 = vmatpush1.bf16.msra.mxu0 %v700
        %723 = vmatprep.subr.bf16.mxu0 0
        %724 = vmatpush1.bf16.msra.mxu0 %v701
        %725 = vmatprep.subr.bf16.mxu0 0
        %726 = vmatpush1.bf16.msra.mxu0 %v702
        %727 = vmatprep.subr.bf16.mxu0 0
        %728 = vmatpush1.bf16.msra.mxu0 0
        %729 = vmatprep.subr.bf16.mxu0 0
        %730 = vmatpush1.bf16.msra.mxu0 0
        %731 = vmatprep.subr.bf16.mxu0 0
        %732 = vmatpush1.bf16.msra.mxu0 0
        %733 = vmatprep.subr.bf16.mxu0 0
        %734 = vmatpush1.bf16.msra.mxu0 0
        %735 = vmatprep.subr.bf16.mxu0 0
        %736 = vmatpush1.bf16.msra.mxu0 0
        %737 = vmatprep.subr.bf16.mxu0 0
        %738 = vmatpush1.bf16.msra.mxu0 0
        %739 = vmatprep.subr.bf16.mxu0 0
        %740 = vmatpush1.bf16.msra.mxu0 0
        %741 = vmatprep.subr.bf16.mxu0 0
        %742 = vmatpush1.bf16.msra.mxu0 0
        %743 = vmatprep.mubr.bf16.mxu0 0
        %744 = vmatmul.mubr.bf16.gmra.mrb[0].mxu0 %v661
        %v745 = vpop.f32.mrb[0].mxu0
        %v746 = vadd.f32 0.0, %v745
        %v747 = vpop.f32.mrb[0].mxu0
        %v748 = vpop.f32.mrb[0].mxu0
        %v749 = vpop.f32.mrb[0].mxu0
        %750 = vdwg.mxu0
        %v751 = vadd.f32 %v633, %v746
        %v752 = vld [vmem:[%s526] sm:$0x6]
        %s753 = scalar_lea.vmem %s172, 320
        %v754 = vld [vmem:[%s753] sm:$0xf]
        %v755 = vld [vmem:[%s753 + $0x4] sm:$0xf]
        %v756 = vld [vmem:[%s753 + $0x8] sm:$0xf]
        %v757 = vld [vmem:[%s753 + $0xc] sm:$0xf]
        %v758 = vld [vmem:[%s753 + $0x10] sm:$0xf]
        %v759 = vld [vmem:[%s753 + $0x14] sm:$0xf]
        %v760 = vld [vmem:[%s753 + $0x18] sm:$0xf]
        %v761 = vld [vmem:[%s753 + $0x1c] sm:$0xf]
        %v762 = vld [vmem:[%s753 + $0x20] sm:$0xf]
        %v763 = vld [vmem:[%s753 + $0x24] sm:$0xf]
        %v764 = vld [vmem:[%s753 + $0x28] sm:$0xf]
        %v765 = vld [vmem:[%s753 + $0x2c] sm:$0xf]
        %v766 = vld [vmem:[%s753 + $0x30] sm:$0xf]
        %v767 = vld [vmem:[%s753 + $0x34] sm:$0xf]
        %v768 = vld [vmem:[%s753 + $0x38] sm:$0xf]
        %v769 = vld [vmem:[%s753 + $0x3c] sm:$0xf]
        %v771 = vunpack.c.l.b16 %v752
        %v772 = vpack.c.b16 %v771, %v771
        %v773 = vrot.slane %v772, 1
        %v791 = vunpack.c.l.b16 %v754
        %v792 = vunpack.c.l.b16 %v755
        %v793 = vunpack.c.l.b16 %v756
        %v794 = vunpack.c.l.b16 %v757
        %v795 = vunpack.c.l.b16 %v758
        %v796 = vunpack.c.l.b16 %v759
        %v797 = vunpack.c.l.b16 %v760
        %v798 = vunpack.c.l.b16 %v761
        %v799 = vunpack.c.l.b16 %v762
        %v800 = vunpack.c.l.b16 %v763
        %v801 = vunpack.c.l.b16 %v764
        %v802 = vunpack.c.l.b16 %v765
        %v803 = vunpack.c.l.b16 %v766
        %v804 = vunpack.c.l.b16 %v767
        %v805 = vunpack.c.l.b16 %v768
        %v806 = vunpack.c.l.b16 %v769
        %v807 = vpack.c.b16 %v792, %v791
        %v808 = vpack.c.b16 %v794, %v793
        %v809 = vpack.c.b16 %v796, %v795
        %v810 = vpack.c.b16 %v798, %v797
        %v811 = vpack.c.b16 %v800, %v799
        %v812 = vpack.c.b16 %v802, %v801
        %v813 = vpack.c.b16 %v804, %v803
        %v814 = vpack.c.b16 %v806, %v805
        %823 = vmatprep.subr.bf16.mxu0 0
        %824 = vmatpush1.bf16.msra.mxu0 %v807
        %825 = vmatprep.subr.bf16.mxu0 0
        %826 = vmatpush1.bf16.msra.mxu0 %v808
        %827 = vmatprep.subr.bf16.mxu0 0
        %828 = vmatpush1.bf16.msra.mxu0 %v809
        %829 = vmatprep.subr.bf16.mxu0 0
        %830 = vmatpush1.bf16.msra.mxu0 %v810
        %831 = vmatprep.subr.bf16.mxu0 0
        %832 = vmatpush1.bf16.msra.mxu0 %v811
        %833 = vmatprep.subr.bf16.mxu0 0
        %834 = vmatpush1.bf16.msra.mxu0 %v812
        %835 = vmatprep.subr.bf16.mxu0 0
        %836 = vmatpush1.bf16.msra.mxu0 %v813
        %837 = vmatprep.subr.bf16.mxu0 0
        %838 = vmatpush1.bf16.msra.mxu0 %v814
        %839 = vmatprep.subr.bf16.mxu0 0
        %840 = vmatpush1.bf16.msra.mxu0 0
        %841 = vmatprep.subr.bf16.mxu0 0
        %842 = vmatpush1.bf16.msra.mxu0 0
        %843 = vmatprep.subr.bf16.mxu0 0
        %844 = vmatpush1.bf16.msra.mxu0 0
        %845 = vmatprep.subr.bf16.mxu0 0
        %846 = vmatpush1.bf16.msra.mxu0 0
        %847 = vmatprep.subr.bf16.mxu0 0
        %848 = vmatpush1.bf16.msra.mxu0 0
        %849 = vmatprep.subr.bf16.mxu0 0
        %850 = vmatpush1.bf16.msra.mxu0 0
        %851 = vmatprep.subr.bf16.mxu0 0
        %852 = vmatpush1.bf16.msra.mxu0 0
        %853 = vmatprep.subr.bf16.mxu0 0
        %854 = vmatpush1.bf16.msra.mxu0 0
        %855 = vmatprep.mubr.bf16.mxu0 0
        %856 = vmatmul.mubr.bf16.gmra.mrb[0].mxu0 %v773
        %v857 = vpop.f32.mrb[0].mxu0
        %v858 = vadd.f32 0.0, %v857
        %v859 = vpop.f32.mrb[0].mxu0
        %v860 = vpop.f32.mrb[0].mxu0
        %v861 = vpop.f32.mrb[0].mxu0
        %862 = vdwg.mxu0
        %v863 = vadd.f32 %v751, %v858
        %s864 = sadd.s32 %s183, 2
        %s865 = smul.addr %s864, 4
        %s866 = scalar_lea.vmem %s168, %s865
        %v867 = vld [vmem:[%s866] sm:$0x3]
        %s868 = scalar_lea.vmem %s172, 384
        %v869 = vld [vmem:[%s868] sm:$0xf]
        %v870 = vld [vmem:[%s868 + $0x4] sm:$0xf]
        %v871 = vld [vmem:[%s868 + $0x8] sm:$0xf]
        %v872 = vld [vmem:[%s868 + $0xc] sm:$0xf]
        %v873 = vld [vmem:[%s868 + $0x10] sm:$0xf]
        %v874 = vld [vmem:[%s868 + $0x14] sm:$0xf]
        %v875 = vld [vmem:[%s868 + $0x18] sm:$0xf]
        %v876 = vld [vmem:[%s868 + $0x1c] sm:$0xf]
        %v877 = vld [vmem:[%s868 + $0x20] sm:$0xf]
        %v878 = vld [vmem:[%s868 + $0x24] sm:$0xf]
        %v879 = vld [vmem:[%s868 + $0x28] sm:$0xf]
        %v880 = vld [vmem:[%s868 + $0x2c] sm:$0xf]
        %v881 = vld [vmem:[%s868 + $0x30] sm:$0xf]
        %v882 = vld [vmem:[%s868 + $0x34] sm:$0xf]
        %v883 = vld [vmem:[%s868 + $0x38] sm:$0xf]
        %v884 = vld [vmem:[%s868 + $0x3c] sm:$0xf]
        %v901 = vunpack.c.l.b16 %v869
        %v902 = vunpack.c.l.b16 %v870
        %v903 = vunpack.c.l.b16 %v871
        %v904 = vunpack.c.l.b16 %v872
        %v905 = vunpack.c.l.b16 %v873
        %v906 = vunpack.c.l.b16 %v874
        %v907 = vunpack.c.l.b16 %v875
        %v908 = vunpack.c.l.b16 %v876
        %v909 = vunpack.c.l.b16 %v877
        %v910 = vunpack.c.l.b16 %v878
        %v911 = vunpack.c.l.b16 %v879
        %v912 = vunpack.c.l.b16 %v880
        %v913 = vunpack.c.l.b16 %v881
        %v914 = vunpack.c.l.b16 %v882
        %v915 = vunpack.c.l.b16 %v883
        %v916 = vunpack.c.l.b16 %v884
        %v917 = vpack.c.b16 %v902, %v901
        %v918 = vpack.c.b16 %v904, %v903
        %v919 = vpack.c.b16 %v906, %v905
        %v920 = vpack.c.b16 %v908, %v907
        %v921 = vpack.c.b16 %v910, %v909
        %v922 = vpack.c.b16 %v912, %v911
        %v923 = vpack.c.b16 %v914, %v913
        %v924 = vpack.c.b16 %v916, %v915
        %933 = vmatprep.subr.bf16.mxu0 0
        %934 = vmatpush1.bf16.msra.mxu0 %v917
        %935 = vmatprep.subr.bf16.mxu0 0
        %936 = vmatpush1.bf16.msra.mxu0 %v918
        %937 = vmatprep.subr.bf16.mxu0 0
        %938 = vmatpush1.bf16.msra.mxu0 %v919
        %939 = vmatprep.subr.bf16.mxu0 0
        %940 = vmatpush1.bf16.msra.mxu0 %v920
        %941 = vmatprep.subr.bf16.mxu0 0
        %942 = vmatpush1.bf16.msra.mxu0 %v921
        %943 = vmatprep.subr.bf16.mxu0 0
        %944 = vmatpush1.bf16.msra.mxu0 %v922
        %945 = vmatprep.subr.bf16.mxu0 0
        %946 = vmatpush1.bf16.msra.mxu0 %v923
        %947 = vmatprep.subr.bf16.mxu0 0
        %948 = vmatpush1.bf16.msra.mxu0 %v924
        %949 = vmatprep.subr.bf16.mxu0 0
        %950 = vmatpush1.bf16.msra.mxu0 0
        %951 = vmatprep.subr.bf16.mxu0 0
        %952 = vmatpush1.bf16.msra.mxu0 0
        %953 = vmatprep.subr.bf16.mxu0 0
        %954 = vmatpush1.bf16.msra.mxu0 0
        %955 = vmatprep.subr.bf16.mxu0 0
        %956 = vmatpush1.bf16.msra.mxu0 0
        %957 = vmatprep.subr.bf16.mxu0 0
        %958 = vmatpush1.bf16.msra.mxu0 0
        %959 = vmatprep.subr.bf16.mxu0 0
        %960 = vmatpush1.bf16.msra.mxu0 0
        %961 = vmatprep.subr.bf16.mxu0 0
        %962 = vmatpush1.bf16.msra.mxu0 0
        %963 = vmatprep.subr.bf16.mxu0 0
        %964 = vmatpush1.bf16.msra.mxu0 0
        %965 = vmatprep.mubr.bf16.mxu0 0
        %966 = vmatmul.mubr.bf16.gmra.mrb[0].mxu0 %v867
        %v967 = vpop.f32.mrb[0].mxu0
        %v968 = vadd.f32 0.0, %v967
        %v969 = vpop.f32.mrb[0].mxu0
        %v970 = vpop.f32.mrb[0].mxu0
        %v971 = vpop.f32.mrb[0].mxu0
        %972 = vdwg.mxu0
        %v973 = vadd.f32 %v863, %v968
        %v974 = vld [vmem:[%s866] sm:$0x7]
        %s975 = scalar_lea.vmem %s172, 448
        %v976 = vld [vmem:[%s975] sm:$0xf]
        %v977 = vld [vmem:[%s975 + $0x4] sm:$0xf]
        %v978 = vld [vmem:[%s975 + $0x8] sm:$0xf]
        %v979 = vld [vmem:[%s975 + $0xc] sm:$0xf]
        %v980 = vld [vmem:[%s975 + $0x10] sm:$0xf]
        %v981 = vld [vmem:[%s975 + $0x14] sm:$0xf]
        %v982 = vld [vmem:[%s975 + $0x18] sm:$0xf]
        %v983 = vld [vmem:[%s975 + $0x1c] sm:$0xf]
        %v984 = vld [vmem:[%s975 + $0x20] sm:$0xf]
        %v985 = vld [vmem:[%s975 + $0x24] sm:$0xf]
        %v986 = vld [vmem:[%s975 + $0x28] sm:$0xf]
        %v987 = vld [vmem:[%s975 + $0x2c] sm:$0xf]
        %v988 = vld [vmem:[%s975 + $0x30] sm:$0xf]
        %v989 = vld [vmem:[%s975 + $0x34] sm:$0xf]
        %v990 = vld [vmem:[%s975 + $0x38] sm:$0xf]
        %v991 = vld [vmem:[%s975 + $0x3c] sm:$0xf]
        %v993 = vunpack.c.l.b16 %v974
        %v994 = vpack.c.b16 %v993, %v993
        %v996 = vshrl.u32 %v994, 16
        %v998 = vshll.u32 %v994, 16
        %v1000 = vrot.slane %v998, 1
        %v1001 = vor.u32 %v996, %v1000
        %v1019 = vunpack.c.l.b16 %v976
        %v1020 = vunpack.c.l.b16 %v977
        %v1021 = vunpack.c.l.b16 %v978
        %v1022 = vunpack.c.l.b16 %v979
        %v1023 = vunpack.c.l.b16 %v980
        %v1024 = vunpack.c.l.b16 %v981
        %v1025 = vunpack.c.l.b16 %v982
        %v1026 = vunpack.c.l.b16 %v983
        %v1027 = vunpack.c.l.b16 %v984
        %v1028 = vunpack.c.l.b16 %v985
        %v1029 = vunpack.c.l.b16 %v986
        %v1030 = vunpack.c.l.b16 %v987
        %v1031 = vunpack.c.l.b16 %v988
        %v1032 = vunpack.c.l.b16 %v989
        %v1033 = vunpack.c.l.b16 %v990
        %v1034 = vunpack.c.l.b16 %v991
        %v1035 = vpack.c.b16 %v1020, %v1019
        %v1036 = vpack.c.b16 %v1022, %v1021
        %v1037 = vpack.c.b16 %v1024, %v1023
        %v1038 = vpack.c.b16 %v1026, %v1025
        %v1039 = vpack.c.b16 %v1028, %v1027
        %v1040 = vpack.c.b16 %v1030, %v1029
        %v1041 = vpack.c.b16 %v1032, %v1031
        %v1042 = vpack.c.b16 %v1034, %v1033
        %1051 = vmatprep.subr.bf16.mxu0 0
        %1052 = vmatpush1.bf16.msra.mxu0 %v1035
        %1053 = vmatprep.subr.bf16.mxu0 0
        %1054 = vmatpush1.bf16.msra.mxu0 %v1036
        %1055 = vmatprep.subr.bf16.mxu0 0
        %1056 = vmatpush1.bf16.msra.mxu0 %v1037
        %1057 = vmatprep.subr.bf16.mxu0 0
        %1058 = vmatpush1.bf16.msra.mxu0 %v1038
        %1059 = vmatprep.subr.bf16.mxu0 0
        %1060 = vmatpush1.bf16.msra.mxu0 %v1039
        %1061 = vmatprep.subr.bf16.mxu0 0
        %1062 = vmatpush1.bf16.msra.mxu0 %v1040
        %1063 = vmatprep.subr.bf16.mxu0 0
        %1064 = vmatpush1.bf16.msra.mxu0 %v1041
        %1065 = vmatprep.subr.bf16.mxu0 0
        %1066 = vmatpush1.bf16.msra.mxu0 %v1042
        %1067 = vmatprep.subr.bf16.mxu0 0
        %1068 = vmatpush1.bf16.msra.mxu0 0
        %1069 = vmatprep.subr.bf16.mxu0 0
        %1070 = vmatpush1.bf16.msra.mxu0 0
        %1071 = vmatprep.subr.bf16.mxu0 0
        %1072 = vmatpush1.bf16.msra.mxu0 0
        %1073 = vmatprep.subr.bf16.mxu0 0
        %1074 = vmatpush1.bf16.msra.mxu0 0
        %1075 = vmatprep.subr.bf16.mxu0 0
        %1076 = vmatpush1.bf16.msra.mxu0 0
        %1077 = vmatprep.subr.bf16.mxu0 0
        %1078 = vmatpush1.bf16.msra.mxu0 0
        %1079 = vmatprep.subr.bf16.mxu0 0
        %1080 = vmatpush1.bf16.msra.mxu0 0
        %1081 = vmatprep.subr.bf16.mxu0 0
        %1082 = vmatpush1.bf16.msra.mxu0 0
        %1083 = vmatprep.mubr.bf16.mxu0 0
        %1084 = vmatmul.mubr.bf16.gmra.mrb[0].mxu0 %v1001
        %v1085 = vpop.f32.mrb[0].mxu0
        %v1086 = vadd.f32 0.0, %v1085
        %v1087 = vpop.f32.mrb[0].mxu0
        %v1088 = vpop.f32.mrb[0].mxu0
        %v1089 = vpop.f32.mrb[0].mxu0
        %1090 = vdwg.mxu0
        %v1091 = vadd.f32 %v973, %v1086
        %v1092 = vld [vmem:[%s866] sm:$0x6]
        %s1093 = scalar_lea.vmem %s172, 512
        %v1094 = vld [vmem:[%s1093] sm:$0xf]
        %v1095 = vld [vmem:[%s1093 + $0x4] sm:$0xf]
        %v1096 = vld [vmem:[%s1093 + $0x8] sm:$0xf]
        %v1097 = vld [vmem:[%s1093 + $0xc] sm:$0xf]
        %v1098 = vld [vmem:[%s1093 + $0x10] sm:$0xf]
        %v1099 = vld [vmem:[%s1093 + $0x14] sm:$0xf]
        %v1100 = vld [vmem:[%s1093 + $0x18] sm:$0xf]
        %v1101 = vld [vmem:[%s1093 + $0x1c] sm:$0xf]
        %v1102 = vld [vmem:[%s1093 + $0x20] sm:$0xf]
        %v1103 = vld [vmem:[%s1093 + $0x24] sm:$0xf]
        %v1104 = vld [vmem:[%s1093 + $0x28] sm:$0xf]
        %v1105 = vld [vmem:[%s1093 + $0x2c] sm:$0xf]
        %v1106 = vld [vmem:[%s1093 + $0x30] sm:$0xf]
        %v1107 = vld [vmem:[%s1093 + $0x34] sm:$0xf]
        %v1108 = vld [vmem:[%s1093 + $0x38] sm:$0xf]
        %v1109 = vld [vmem:[%s1093 + $0x3c] sm:$0xf]
        %v1111 = vunpack.c.l.b16 %v1092
        %v1112 = vpack.c.b16 %v1111, %v1111
        %v1113 = vrot.slane %v1112, 1
        %v1131 = vunpack.c.l.b16 %v1094
        %v1132 = vunpack.c.l.b16 %v1095
        %v1133 = vunpack.c.l.b16 %v1096
        %v1134 = vunpack.c.l.b16 %v1097
        %v1135 = vunpack.c.l.b16 %v1098
        %v1136 = vunpack.c.l.b16 %v1099
        %v1137 = vunpack.c.l.b16 %v1100
        %v1138 = vunpack.c.l.b16 %v1101
        %v1139 = vunpack.c.l.b16 %v1102
        %v1140 = vunpack.c.l.b16 %v1103
        %v1141 = vunpack.c.l.b16 %v1104
        %v1142 = vunpack.c.l.b16 %v1105
        %v1143 = vunpack.c.l.b16 %v1106
        %v1144 = vunpack.c.l.b16 %v1107
        %v1145 = vunpack.c.l.b16 %v1108
        %v1146 = vunpack.c.l.b16 %v1109
        %v1147 = vpack.c.b16 %v1132, %v1131
        %v1148 = vpack.c.b16 %v1134, %v1133
        %v1149 = vpack.c.b16 %v1136, %v1135
        %v1150 = vpack.c.b16 %v1138, %v1137
        %v1151 = vpack.c.b16 %v1140, %v1139
        %v1152 = vpack.c.b16 %v1142, %v1141
        %v1153 = vpack.c.b16 %v1144, %v1143
        %v1154 = vpack.c.b16 %v1146, %v1145
        %1163 = vmatprep.subr.bf16.mxu0 0
        %1164 = vmatpush1.bf16.msra.mxu0 %v1147
        %1165 = vmatprep.subr.bf16.mxu0 0
        %1166 = vmatpush1.bf16.msra.mxu0 %v1148
        %1167 = vmatprep.subr.bf16.mxu0 0
        %1168 = vmatpush1.bf16.msra.mxu0 %v1149
        %1169 = vmatprep.subr.bf16.mxu0 0
        %1170 = vmatpush1.bf16.msra.mxu0 %v1150
        %1171 = vmatprep.subr.bf16.mxu0 0
        %1172 = vmatpush1.bf16.msra.mxu0 %v1151
        %1173 = vmatprep.subr.bf16.mxu0 0
        %1174 = vmatpush1.bf16.msra.mxu0 %v1152
        %1175 = vmatprep.subr.bf16.mxu0 0
        %1176 = vmatpush1.bf16.msra.mxu0 %v1153
        %1177 = vmatprep.subr.bf16.mxu0 0
        %1178 = vmatpush1.bf16.msra.mxu0 %v1154
        %1179 = vmatprep.subr.bf16.mxu0 0
        %1180 = vmatpush1.bf16.msra.mxu0 0
        %1181 = vmatprep.subr.bf16.mxu0 0
        %1182 = vmatpush1.bf16.msra.mxu0 0
        %1183 = vmatprep.subr.bf16.mxu0 0
        %1184 = vmatpush1.bf16.msra.mxu0 0
        %1185 = vmatprep.subr.bf16.mxu0 0
        %1186 = vmatpush1.bf16.msra.mxu0 0
        %1187 = vmatprep.subr.bf16.mxu0 0
        %1188 = vmatpush1.bf16.msra.mxu0 0
        %1189 = vmatprep.subr.bf16.mxu0 0
        %1190 = vmatpush1.bf16.msra.mxu0 0
        %1191 = vmatprep.subr.bf16.mxu0 0
        %1192 = vmatpush1.bf16.msra.mxu0 0
        %1193 = vmatprep.subr.bf16.mxu0 0
        %1194 = vmatpush1.bf16.msra.mxu0 0
        %1195 = vmatprep.mubr.bf16.mxu0 0
        %1196 = vmatmul.mubr.bf16.gmra.mrb[0].mxu0 %v1113
        %v1197 = vpop.f32.mrb[0].mxu0
        %v1198 = vadd.f32 0.0, %v1197
        %v1199 = vpop.f32.mrb[0].mxu0
        %v1200 = vpop.f32.mrb[0].mxu0
        %v1201 = vpop.f32.mrb[0].mxu0
        %1202 = vdwg.mxu0
        %v1203 = vadd.f32 %v1091, %v1198
        %v1204 = vpack.c.bf16 %v1203, %v1203
        %s1205 = smul.addr %s183, 2
        %s1206 = scalar_lea.vmem %s180, %s1205
        %1207 = vst [vmem:[%s1206] sm:$0x3] %v1204
      $region33: #{densenet_forward.17} parent=27 // loop_footer
        %s187 = sadd.s32 1, %s183
      $region34: #{densenet_forward.17} parent=27 // loop_footer_branch
        %182 = sbr.rel target = $region30
      $region35: #{densenet_forward.17} parent=27 // loop_exit
        _
      %p1208 = scmp.lt.s32.totalorder %s17, 1
      %s1209 = scalar_select %p1208, %s17, 1
      %p1210 = scmp.lt.s32.totalorder %s18, 0
      %s1211 = scalar_select %p1210, %s18, 0
      %s1212 = smul.addr %s1209, 4
      %s1213 = sadd.s32 %s1211, %s1212
      %s1214 = smul.addr %s1213, 2
      %s1215 = scalar_lea.vmem %s2, %s1214
      // Predicated region
      $region36: #{densenet_forward.17} parent=27 // pred_check
        %p1216 = pneg %p97
      $region37: #{densenet_forward.17} parent=27 // pred_check_branch
        %1218 = sbr.rel (%p1216) target = $region39
      $region38: #{densenet_forward.17} parent=27 // pred_region
        _
      $region39: #{densenet_forward.17} parent=27 // pred_fallthru
        _
    $region28: #{densenet_forward.17} parent=5 // pred_fallthru
      _
    %p1219 = scmp.le.s32.totalorder 2, %s8
    // Predicated region
    $region40: #{densenet_forward.17} parent=5 // pred_check
      %p1220 = pneg %p1219
    $region41: #{densenet_forward.17} parent=5 // pred_check_branch
      %1222 = sbr.rel (%p1220) target = $region43
    $region42: #{densenet_forward.17} parent=5 // pred_region
      %s1223 = ssub.s32 %s8, 2
      // Predicated region
      $region44: #{densenet_forward.17} parent=42 // pred_check
        %p1224 = pneg %p103
      $region45: #{densenet_forward.17} parent=42 // pred_check_branch
        %1226 = sbr.rel (%p1224) target = $region47
      $region46: #{densenet_forward.17} parent=42 // pred_region
        %p1227 = scmp.lt.s32.totalorder %s19, 1
        %s1228 = scalar_select %p1227, %s19, 1
        %p1229 = scmp.lt.s32.totalorder %s20, 0
        %s1230 = scalar_select %p1229, %s20, 0
        %s1231 = smul.addr %s1228, 4
        %s1232 = sadd.s32 %s1230, %s1231
        %s1233 = smul.addr %s1232, 2
        %s1234 = scalar_lea.vmem %s2, %s1233
      $region47: #{densenet_forward.17} parent=42 // pred_fallthru
        _
    $region43: #{densenet_forward.17} parent=5 // pred_fallthru
      _
  $region6: #{densenet_forward.17} parent=0 // loop_footer
    %s12 = sadd.s32 1, %s8
  $region7: #{densenet_forward.17} parent=0 // loop_footer_branch
    %7 = sbr.rel target = $region3
  $region8: #{densenet_forward.17} parent=0 // loop_exit
    _

// kernel: densenet_forward.20
$region0: #{densenet_forward.20}
  #allocation0 [shape = 'u32[]', space=smem, size = 0x4, offset = 0x4, fixed_abs, tag = 'smem constant byte address 0x4 - core index']
  #allocation1 [shape = 'u32[144,128]{1,0:T(1,128)}', space=vmem, size = 0x12000, scoped, tag = 'internal scratch']
  %s0 = inlined_call_operand.vmem [shape: bf16[32,128], index: 0, kind: input, shape index: {}]
  %s1 = inlined_call_operand.vmem [shape: bf16[128,128], index: 1, kind: input, shape index: {}]
  %s2 = inlined_call_operand.vmem [shape: f32[1,128], index: 2, kind: input, shape index: {}]
  %s3 = inlined_call_operand.vmem [shape: f32[1,128], index: 3, kind: input, shape index: {}]
  %s4 = inlined_call_operand.vmem [shape: bf16[32,128], index: 4, kind: output, shape index: {}]
  %s5 = sld [smem:[#allocation0]]
  $region26: #{densenet_forward.20} parent=0
    _
  %s7 = ssub.s32 1, %s5
  %s8 = scalar_select 0, %s7, %s5
  // Predicated region
  $region2: #{densenet_forward.20} parent=0 // pred_check
    _
  $region3: #{densenet_forward.20} parent=0 // pred_check_branch
    %10 = sbr.rel (0) target = $region5
  $region4: #{densenet_forward.20} parent=0 // pred_region
    _
  $region5: #{densenet_forward.20} parent=0 // pred_fallthru
    _
  // Predicated region
  $region6: #{densenet_forward.20} parent=0 // pred_check
    _
  $region7: #{densenet_forward.20} parent=0 // pred_check_branch
    %12 = sbr.rel (0) target = $region9
  $region8: #{densenet_forward.20} parent=0 // pred_region
    _
  $region9: #{densenet_forward.20} parent=0 // pred_fallthru
    _
  // Predicated region
  $region10: #{densenet_forward.20} parent=0 // pred_check
    _
  $region11: #{densenet_forward.20} parent=0 // pred_check_branch
    %14 = sbr.rel (0) target = $region13
  $region12: #{densenet_forward.20} parent=0 // pred_region
    _
  $region13: #{densenet_forward.20} parent=0 // pred_fallthru
    _
  // Predicated region
  $region14: #{densenet_forward.20} parent=0 // pred_check
    _
  $region15: #{densenet_forward.20} parent=0 // pred_check_branch
    %16 = sbr.rel (0) target = $region17
  $region16: #{densenet_forward.20} parent=0 // pred_region
    _
  $region17: #{densenet_forward.20} parent=0 // pred_fallthru
    _
  %v18 = vld [vmem:[%s0] sm:$0xf]
  %v19 = vld [vmem:[%s0 + $0x4] sm:$0xf]
  %v20 = vld [vmem:[%s0 + $0x8] sm:$0xf]
  %v21 = vld [vmem:[%s0 + $0xc] sm:$0xf]
  %v22 = vunpack.c.l.bf16 %v18
  %v23 = vunpack.c.l.bf16 %v19
  %v24 = vunpack.c.l.bf16 %v20
  %v25 = vunpack.c.l.bf16 %v21
  %v26 = vld [vmem:[%s2] sm:$0x1]
  %v28 = vlaneseq
  %v29 = vshrl.u32 %v28, 7
  %v30 = vsub.s32 0, %v29
  %v31 = vrot.slane %v26, %v30
  %v33 = vmul.f32 %v22, %v31
  %v34 = vmul.f32 %v23, %v31
  %v35 = vmul.f32 %v24, %v31
  %v36 = vmul.f32 %v25, %v31
  %v37 = vld [vmem:[%s3] sm:$0x1]
  %v39 = vlaneseq
  %v40 = vshrl.u32 %v39, 7
  %v41 = vsub.s32 0, %v40
  %v42 = vrot.slane %v37, %v41
  %v44 = vadd.f32 %v33, %v42
  %v45 = vadd.f32 %v34, %v42
  %v46 = vadd.f32 %v35, %v42
  %v47 = vadd.f32 %v36, %v42
  %v48 = vmax.f32 %v44, 0.0
  %v49 = vmax.f32 %v45, 0.0
  %v50 = vmax.f32 %v46, 0.0
  %v51 = vmax.f32 %v47, 0.0
  %v52 = vpack.c.bf16 %v49, %v48
  %v53 = vpack.c.bf16 %v51, %v50
  %v54 = vld [vmem:[%s1] sm:$0xf]
  %v55 = vld [vmem:[%s1 + $0x4] sm:$0xf]
  %v56 = vld [vmem:[%s1 + $0x8] sm:$0xf]
  %v57 = vld [vmem:[%s1 + $0xc] sm:$0xf]
  %v58 = vld [vmem:[%s1 + $0x10] sm:$0xf]
  %v59 = vld [vmem:[%s1 + $0x14] sm:$0xf]
  %v60 = vld [vmem:[%s1 + $0x18] sm:$0xf]
  %v61 = vld [vmem:[%s1 + $0x1c] sm:$0xf]
  %v62 = vld [vmem:[%s1 + $0x20] sm:$0xf]
  %v63 = vld [vmem:[%s1 + $0x24] sm:$0xf]
  %v64 = vld [vmem:[%s1 + $0x28] sm:$0xf]
  %v65 = vld [vmem:[%s1 + $0x2c] sm:$0xf]
  %v66 = vld [vmem:[%s1 + $0x30] sm:$0xf]
  %v67 = vld [vmem:[%s1 + $0x34] sm:$0xf]
  %v68 = vld [vmem:[%s1 + $0x38] sm:$0xf]
  %v69 = vld [vmem:[%s1 + $0x3c] sm:$0xf]
  %v86 = vunpack.c.l.b16 %v54
  %v87 = vunpack.c.l.b16 %v55
  %v88 = vunpack.c.l.b16 %v56
  %v89 = vunpack.c.l.b16 %v57
  %v90 = vunpack.c.l.b16 %v58
  %v91 = vunpack.c.l.b16 %v59
  %v92 = vunpack.c.l.b16 %v60
  %v93 = vunpack.c.l.b16 %v61
  %v94 = vunpack.c.l.b16 %v62
  %v95 = vunpack.c.l.b16 %v63
  %v96 = vunpack.c.l.b16 %v64
  %v97 = vunpack.c.l.b16 %v65
  %v98 = vunpack.c.l.b16 %v66
  %v99 = vunpack.c.l.b16 %v67
  %v100 = vunpack.c.l.b16 %v68
  %v101 = vunpack.c.l.b16 %v69
  %v102 = vpack.c.b16 %v87, %v86
  %v103 = vpack.c.b16 %v89, %v88
  %v104 = vpack.c.b16 %v91, %v90
  %v105 = vpack.c.b16 %v93, %v92
  %v106 = vpack.c.b16 %v95, %v94
  %v107 = vpack.c.b16 %v97, %v96
  %v108 = vpack.c.b16 %v99, %v98
  %v109 = vpack.c.b16 %v101, %v100
  %118 = vmatprep.subr.bf16.mxu0 0
  %119 = vmatpush1.bf16.msra.mxu0 %v102
  %120 = vmatprep.subr.bf16.mxu0 0
  %121 = vmatpush1.bf16.msra.mxu0 %v103
  %122 = vmatprep.subr.bf16.mxu0 0
  %123 = vmatpush1.bf16.msra.mxu0 %v104
  %124 = vmatprep.subr.bf16.mxu0 0
  %125 = vmatpush1.bf16.msra.mxu0 %v105
  %126 = vmatprep.subr.bf16.mxu0 0
  %127 = vmatpush1.bf16.msra.mxu0 %v106
  %128 = vmatprep.subr.bf16.mxu0 0
  %129 = vmatpush1.bf16.msra.mxu0 %v107
  %130 = vmatprep.subr.bf16.mxu0 0
  %131 = vmatpush1.bf16.msra.mxu0 %v108
  %132 = vmatprep.subr.bf16.mxu0 0
  %133 = vmatpush1.bf16.msra.mxu0 %v109
  %134 = vmatprep.subr.bf16.mxu0 0
  %135 = vmatpush1.bf16.msra.mxu0 0
  %136 = vmatprep.subr.bf16.mxu0 0
  %137 = vmatpush1.bf16.msra.mxu0 0
  %138 = vmatprep.subr.bf16.mxu0 0
  %139 = vmatpush1.bf16.msra.mxu0 0
  %140 = vmatprep.subr.bf16.mxu0 0
  %141 = vmatpush1.bf16.msra.mxu0 0
  %142 = vmatprep.subr.bf16.mxu0 0
  %143 = vmatpush1.bf16.msra.mxu0 0
  %144 = vmatprep.subr.bf16.mxu0 0
  %145 = vmatpush1.bf16.msra.mxu0 0
  %146 = vmatprep.subr.bf16.mxu0 0
  %147 = vmatpush1.bf16.msra.mxu0 0
  %148 = vmatprep.subr.bf16.mxu0 0
  %149 = vmatpush1.bf16.msra.mxu0 0
  %150 = vmatprep.mubr.bf16.mxu0 0
  %151 = vmatmul.mubr.bf16.gmra.mrb[0].mxu0 %v52
  %v152 = vpop.f32.mrb[0].mxu0
  %v153 = vadd.f32 0.0, %v152
  %v154 = vpop.f32.mrb[0].mxu0
  %v155 = vpop.f32.mrb[0].mxu0
  %v156 = vadd.f32 0.0, %v155
  %v157 = vpop.f32.mrb[0].mxu0
  %158 = vmatprep.mubr.bf16.mxu0 0
  %159 = vmatmul.mubr.bf16.gmra.mrb[0].mxu0 %v53
  %v160 = vpop.f32.mrb[0].mxu0
  %v161 = vadd.f32 0.0, %v160
  %v162 = vpop.f32.mrb[0].mxu0
  %v163 = vpop.f32.mrb[0].mxu0
  %v164 = vadd.f32 0.0, %v163
  %v165 = vpop.f32.mrb[0].mxu0
  %166 = vdwg.mxu0
  %v167 = vpack.c.bf16 %v156, %v153
  %v168 = vpack.c.bf16 %v164, %v161
  %v171 = vunpack.c.l.b16 %v167
  %v172 = vunpack.c.h.b16 %v167
  %v173 = vunpack.c.l.b16 %v168
  %v174 = vunpack.c.h.b16 %v168
  %v175 = vpack.c.b16 %v171, %v171
  %v176 = vpack.c.b16 %v172, %v172
  %v177 = vpack.c.b16 %v173, %v173
  %v178 = vpack.c.b16 %v174, %v174
  %183 = vst [vmem:[%s4] sm:$0xf] %v175
  %184 = vst [vmem:[%s4 + $0x4] sm:$0xf] %v176
  %185 = vst [vmem:[%s4 + $0x8] sm:$0xf] %v177
  %186 = vst [vmem:[%s4 + $0xc] sm:$0xf] %v178
  // Predicated region
  $region18: #{densenet_forward.20} parent=0 // pred_check
    _
  $region19: #{densenet_forward.20} parent=0 // pred_check_branch
    %188 = sbr.rel (0) target = $region21
  $region20: #{densenet_forward.20} parent=0 // pred_region
    _
  $region21: #{densenet_forward.20} parent=0 // pred_fallthru
    _
  // Predicated region
  $region22: #{densenet_forward.20} parent=0 // pred_check
    _
  $region23: #{densenet_forward.20} parent=0 // pred_check_branch
    %190 = sbr.rel (0) target = $region25
  $region24: #{densenet_forward.20} parent=0 // pred_region
    _
  $region25: #{densenet_forward.20} parent=0 // pred_fallthru
    _

// kernel: densenet_forward.21
$region0: #{densenet_forward.21}
  #allocation0 [shape = 'u32[]', space=smem, size = 0x4, offset = 0x4, fixed_abs, tag = 'smem constant byte address 0x4 - core index']
  #allocation1 [shape = 'u32[144,128]{1,0:T(1,128)}', space=vmem, size = 0x12000, scoped, tag = 'internal scratch']
  %s0 = inlined_call_operand.vmem [shape: bf16[2,4,2,256], index: 0, kind: input, shape index: {}]
  %s1 = inlined_call_operand.vmem [shape: bf16[2,2,2,128], index: 1, kind: output, shape index: {}]
  %s2 = sld [smem:[#allocation0]]
  $region44: #{densenet_forward.21} parent=0
    _
  %s4 = ssub.s32 1, %s2
  %s5 = scalar_select 0, %s4, %s2
  loop: start=0, step=1, limit=4
  $region2: #{densenet_forward.21} parent=0 // loop_pre_header
    _
  $region3: #{densenet_forward.21} parent=0 // loop_header
    %s7 = sphi 0, %s11
    %p8 = scmp.ge.s32.totalorder %s7, 4
    %s17 = sphi 0, %s19
    %s20 = sphi 0, %s17
    %s21 = sphi 0, %s20
    %s37 = sphi 0, %s21
    %s43 = sphi 0, %s45
    %s46 = sphi 0, %s43
    %s47 = sphi 0, %s46
    %s63 = sphi 0, %s47
  $region4: #{densenet_forward.21} parent=0 // loop_header_branch
    %10 = sbr.rel (%p8) target = $region8
  $region5: #{densenet_forward.21} parent=0 // loop_body
    %s12 = ssub.s32 %s7, 1
    %s13 = ssub.s32 %s7, 2
    %s14 = sadd.s32 %s7, 1
    %s15 = ssub.s32 %s7, %s14
    %p16 = scmp.eq.s32.totalorder %s15, 0
    %s18 = sadd.s32 %s17, 1
    %s19 = scalar_select %p16, %s17, %s18
    %p22 = pneg %p16
    %p23 = scmp.eq.s32.totalorder %s7, 1
    %p24 = por %p22, %p23
    %p25 = scmp.ne.s32.totalorder %s17, %s20
    %p26 = scmp.eq.s32.totalorder %s7, 0
    %p27 = por %p25, %p26
    %p28 = scmp.ne.s32.totalorder %s17, %s20
    %p29 = scmp.eq.s32.totalorder %s12, 1
    %p30 = por %p28, %p29
    %p31 = scmp.ne.s32.totalorder %s20, %s21
    %p32 = scmp.eq.s32.totalorder %s12, 0
    %p33 = por %p31, %p32
    %p34 = scmp.ne.s32.totalorder %s20, %s21
    %p35 = scmp.eq.s32.totalorder %s13, 1
    %p36 = por %p34, %p35
    %p38 = scmp.ne.s32.totalorder %s21, %s37
    %p39 = scmp.eq.s32.totalorder %s13, 0
    %p40 = por %p38, %p39
    %s41 = ssub.s32 %s7, %s14
    %p42 = scmp.eq.s32.totalorder %s41, 0
    %s44 = sadd.s32 %s43, 1
    %s45 = scalar_select %p42, %s43, %s44
    %p48 = pneg %p42
    %p49 = scmp.eq.s32.totalorder %s7, 1
    %p50 = por %p48, %p49
    %p51 = scmp.ne.s32.totalorder %s43, %s46
    %p52 = scmp.eq.s32.totalorder %s7, 0
    %p53 = por %p51, %p52
    %p54 = scmp.ne.s32.totalorder %s43, %s46
    %p55 = scmp.eq.s32.totalorder %s12, 1
    %p56 = por %p54, %p55
    %p57 = scmp.ne.s32.totalorder %s46, %s47
    %p58 = scmp.eq.s32.totalorder %s12, 0
    %p59 = por %p57, %p58
    %p60 = scmp.ne.s32.totalorder %s46, %s47
    %p61 = scmp.eq.s32.totalorder %s13, 1
    %p62 = por %p60, %p61
    %p64 = scmp.ne.s32.totalorder %s47, %s63
    %p65 = scmp.eq.s32.totalorder %s13, 0
    %p66 = por %p64, %p65
    %p67 = scmp.le.s32.totalorder 1, %s7
    %p68 = scmp.lt.s32.totalorder %s7, 3
    %p69 = pnand %p67, %p68
    %p70 = pneg %p69
    // Predicated region
    $region9: #{densenet_forward.21} parent=5 // pred_check
      _
    $region10: #{densenet_forward.21} parent=5 // pred_check_branch
      %72 = sbr.rel (%p69) target = $region12
    $region11: #{densenet_forward.21} parent=5 // pred_region
      %s73 = ssub.s32 %s7, 1
    $region12: #{densenet_forward.21} parent=5 // pred_fallthru
      _
    %p74 = scmp.lt.s32.totalorder %s7, 2
    // Predicated region
    $region13: #{densenet_forward.21} parent=5 // pred_check
      %p75 = pneg %p74
    $region14: #{densenet_forward.21} parent=5 // pred_check_branch
      %77 = sbr.rel (%p75) target = $region16
    $region15: #{densenet_forward.21} parent=5 // pred_region
      // Predicated region
      $region17: #{densenet_forward.21} parent=15 // pred_check
        %p78 = pneg %p27
      $region18: #{densenet_forward.21} parent=15 // pred_check_branch
        %80 = sbr.rel (%p78) target = $region20
      $region19: #{densenet_forward.21} parent=15 // pred_region
        %p81 = scmp.lt.s32.totalorder %s7, 1
        %s82 = scalar_select %p81, %s7, 1
        %s83 = smul.addr %s82, 8
        %s84 = scalar_lea.vmem %s0, %s83
      $region20: #{densenet_forward.21} parent=15 // pred_fallthru
        _
    $region16: #{densenet_forward.21} parent=5 // pred_fallthru
      _
    %p85 = scmp.le.s32.totalorder 1, %s7
    %p86 = scmp.lt.s32.totalorder %s7, 3
    %p87 = pnand %p85, %p86
    %p88 = pneg %p87
    // Predicated region
    $region21: #{densenet_forward.21} parent=5 // pred_check
      _
    $region22: #{densenet_forward.21} parent=5 // pred_check_branch
      %90 = sbr.rel (%p87) target = $region24
    $region23: #{densenet_forward.21} parent=5 // pred_region
      %s91 = ssub.s32 %s7, 1
      %p92 = scmp.lt.s32.totalorder %s12, 1
      %s93 = scalar_select %p92, %s12, 1
      %s94 = smul.addr %s93, 8
      %s95 = scalar_lea.vmem %s0, %s94
      %p96 = pneg %p33
      %p97 = pneg %p30
      %p98 = pneg %p59
      %p99 = pneg %p56
      %p100 = scmp.lt.s32.totalorder %s12, 1
      %s101 = scalar_select %p100, %s12, 1
      %s102 = smul.addr %s101, 2
      %s103 = scalar_lea.vmem %s1, %s102
      %p104 = scmp.lt.s32.totalorder %s12, 1
      %s105 = scalar_select %p104, %s12, 1
      %s106 = smul.addr %s105, 8
      %s107 = scalar_lea.vmem %s0, %s106
      %p108 = scmp.lt.s32.totalorder %s12, 1
      %s109 = scalar_select %p108, %s12, 1
      %s110 = smul.addr %s109, 2
      %s111 = scalar_lea.vmem %s1, %s110
      loop: start=0, step=1, limit=2
      $region25: #{densenet_forward.21} parent=23 // loop_pre_header
        _
      $region26: #{densenet_forward.21} parent=23 // loop_header
        %s113 = sphi 0, %s117
        %p114 = scmp.ge.s32.totalorder %s113, 2
      $region27: #{densenet_forward.21} parent=23 // loop_header_branch
        %116 = sbr.rel (%p114) target = $region31
      $region28: #{densenet_forward.21} parent=23 // loop_body
        %s118 = smul.u32 %s113, 2
        %s119 = smul.u32 %s118, 2
        %s120 = scalar_lea.vmem %s107, %s119
        %v121 = vld [vmem:[%s120] sm:$0x1]
        %v122 = vunpack.c.l.bf16 %v121
        %v123 = vld [vmem:[%s120 + $0x1] sm:$0x1]
        %v124 = vunpack.c.l.bf16 %v123
        %v125 = vadd.f32 %v122, %v124
        %s126 = sadd.s32 %s118, 1
        %s127 = smul.u32 %s126, 2
        %s128 = scalar_lea.vmem %s107, %s127
        %v129 = vld [vmem:[%s128] sm:$0x1]
        %v130 = vunpack.c.l.bf16 %v129
        %v131 = vadd.f32 %v125, %v130
        %v132 = vld [vmem:[%s128 + $0x1] sm:$0x1]
        %v133 = vunpack.c.l.bf16 %v132
        %v134 = vadd.f32 %v131, %v133
        %v135 = vmul.f32 %v134, 0.25
        %v136 = vpack.c.bf16 %v135, %v135
        %s137 = scalar_lea.vmem %s111, %s113
        %138 = vst [vmem:[%s137] sm:$0x1] %v136
      $region29: #{densenet_forward.21} parent=23 // loop_footer
        %s117 = sadd.s32 1, %s113
      $region30: #{densenet_forward.21} parent=23 // loop_footer_branch
        %112 = sbr.rel target = $region26
      $region31: #{densenet_forward.21} parent=23 // loop_exit
        _
      %p139 = scmp.lt.s32.totalorder %s12, 1
      %s140 = scalar_select %p139, %s12, 1
      %s141 = smul.addr %s140, 2
      %s142 = scalar_lea.vmem %s1, %s141
      // Predicated region
      $region32: #{densenet_forward.21} parent=23 // pred_check
        %p143 = pneg %p56
      $region33: #{densenet_forward.21} parent=23 // pred_check_branch
        %145 = sbr.rel (%p143) target = $region35
      $region34: #{densenet_forward.21} parent=23 // pred_region
        _
      $region35: #{densenet_forward.21} parent=23 // pred_fallthru
        _
    $region24: #{densenet_forward.21} parent=5 // pred_fallthru
      _
    %p146 = scmp.le.s32.totalorder 2, %s7
    // Predicated region
    $region36: #{densenet_forward.21} parent=5 // pred_check
      %p147 = pneg %p146
    $region37: #{densenet_forward.21} parent=5 // pred_check_branch
      %149 = sbr.rel (%p147) target = $region39
    $region38: #{densenet_forward.21} parent=5 // pred_region
      %s150 = ssub.s32 %s7, 2
      // Predicated region
      $region40: #{densenet_forward.21} parent=38 // pred_check
        %p151 = pneg %p62
      $region41: #{densenet_forward.21} parent=38 // pred_check_branch
        %153 = sbr.rel (%p151) target = $region43
      $region42: #{densenet_forward.21} parent=38 // pred_region
        %p154 = scmp.lt.s32.totalorder %s13, 1
        %s155 = scalar_select %p154, %s13, 1
        %s156 = smul.addr %s155, 2
        %s157 = scalar_lea.vmem %s1, %s156
      $region43: #{densenet_forward.21} parent=38 // pred_fallthru
        _
    $region39: #{densenet_forward.21} parent=5 // pred_fallthru
      _
  $region6: #{densenet_forward.21} parent=0 // loop_footer
    %s11 = sadd.s32 1, %s7
  $region7: #{densenet_forward.21} parent=0 // loop_footer_branch
    %6 = sbr.rel target = $region3
  $region8: #{densenet_forward.21} parent=0 // loop_exit
    _

// kernel: densenet_forward.22
$region0: #{densenet_forward.22}
  #allocation0 [shape = 'u32[]', space=smem, size = 0x4, offset = 0x4, fixed_abs, tag = 'smem constant byte address 0x4 - core index']
  #allocation1 [shape = 'u32[144,128]{1,0:T(1,128)}', space=vmem, size = 0x12000, scoped, tag = 'internal scratch']
  %s0 = inlined_call_operand.vmem [shape: bf16[16,128], index: 0, kind: input, shape index: {}]
  %s1 = inlined_call_operand.vmem [shape: bf16[128,128], index: 1, kind: input, shape index: {}]
  %s2 = inlined_call_operand.vmem [shape: f32[1,128], index: 2, kind: input, shape index: {}]
  %s3 = inlined_call_operand.vmem [shape: f32[1,128], index: 3, kind: input, shape index: {}]
  %s4 = inlined_call_operand.vmem [shape: f32[1,128], index: 4, kind: input, shape index: {}]
  %s5 = inlined_call_operand.vmem [shape: f32[1,128], index: 5, kind: input, shape index: {}]
  %s6 = inlined_call_operand.vmem [shape: bf16[16,128], index: 6, kind: output, shape index: {}]
  %s7 = sld [smem:[#allocation0]]
  $region34: #{densenet_forward.22} parent=0
    _
  %s9 = ssub.s32 1, %s7
  %s10 = scalar_select 0, %s9, %s7
  // Predicated region
  $region2: #{densenet_forward.22} parent=0 // pred_check
    _
  $region3: #{densenet_forward.22} parent=0 // pred_check_branch
    %12 = sbr.rel (0) target = $region5
  $region4: #{densenet_forward.22} parent=0 // pred_region
    _
  $region5: #{densenet_forward.22} parent=0 // pred_fallthru
    _
  // Predicated region
  $region6: #{densenet_forward.22} parent=0 // pred_check
    _
  $region7: #{densenet_forward.22} parent=0 // pred_check_branch
    %14 = sbr.rel (0) target = $region9
  $region8: #{densenet_forward.22} parent=0 // pred_region
    _
  $region9: #{densenet_forward.22} parent=0 // pred_fallthru
    _
  // Predicated region
  $region10: #{densenet_forward.22} parent=0 // pred_check
    _
  $region11: #{densenet_forward.22} parent=0 // pred_check_branch
    %16 = sbr.rel (0) target = $region13
  $region12: #{densenet_forward.22} parent=0 // pred_region
    _
  $region13: #{densenet_forward.22} parent=0 // pred_fallthru
    _
  // Predicated region
  $region14: #{densenet_forward.22} parent=0 // pred_check
    _
  $region15: #{densenet_forward.22} parent=0 // pred_check_branch
    %18 = sbr.rel (0) target = $region17
  $region16: #{densenet_forward.22} parent=0 // pred_region
    _
  $region17: #{densenet_forward.22} parent=0 // pred_fallthru
    _
  // Predicated region
  $region18: #{densenet_forward.22} parent=0 // pred_check
    _
  $region19: #{densenet_forward.22} parent=0 // pred_check_branch
    %20 = sbr.rel (0) target = $region21
  $region20: #{densenet_forward.22} parent=0 // pred_region
    _
  $region21: #{densenet_forward.22} parent=0 // pred_fallthru
    _
  // Predicated region
  $region22: #{densenet_forward.22} parent=0 // pred_check
    _
  $region23: #{densenet_forward.22} parent=0 // pred_check_branch
    %22 = sbr.rel (0) target = $region25
  $region24: #{densenet_forward.22} parent=0 // pred_region
    _
  $region25: #{densenet_forward.22} parent=0 // pred_fallthru
    _
  %v24 = vld [vmem:[%s0] sm:$0xf]
  %v25 = vld [vmem:[%s0 + $0x4] sm:$0xf]
  %v26 = vunpack.c.l.bf16 %v24
  %v27 = vunpack.c.l.bf16 %v25
  %v28 = vld [vmem:[%s2] sm:$0x1]
  %v30 = vlaneseq
  %v31 = vshrl.u32 %v30, 7
  %v32 = vsub.s32 0, %v31
  %v33 = vrot.slane %v28, %v32
  %v35 = vmul.f32 %v26, %v33
  %v36 = vmul.f32 %v27, %v33
  %v37 = vld [vmem:[%s3] sm:$0x1]
  %v39 = vlaneseq
  %v40 = vshrl.u32 %v39, 7
  %v41 = vsub.s32 0, %v40
  %v42 = vrot.slane %v37, %v41
  %v44 = vadd.f32 %v35, %v42
  %v45 = vadd.f32 %v36, %v42
  %v46 = vmax.f32 %v44, 0.0
  %v47 = vmax.f32 %v45, 0.0
  %v48 = vpack.c.bf16 %v47, %v46
  %v49 = vld [vmem:[%s1] sm:$0xf]
  %v50 = vld [vmem:[%s1 + $0x4] sm:$0xf]
  %v51 = vld [vmem:[%s1 + $0x8] sm:$0xf]
  %v52 = vld [vmem:[%s1 + $0xc] sm:$0xf]
  %v53 = vld [vmem:[%s1 + $0x10] sm:$0xf]
  %v54 = vld [vmem:[%s1 + $0x14] sm:$0xf]
  %v55 = vld [vmem:[%s1 + $0x18] sm:$0xf]
  %v56 = vld [vmem:[%s1 + $0x1c] sm:$0xf]
  %v57 = vld [vmem:[%s1 + $0x20] sm:$0xf]
  %v58 = vld [vmem:[%s1 + $0x24] sm:$0xf]
  %v59 = vld [vmem:[%s1 + $0x28] sm:$0xf]
  %v60 = vld [vmem:[%s1 + $0x2c] sm:$0xf]
  %v61 = vld [vmem:[%s1 + $0x30] sm:$0xf]
  %v62 = vld [vmem:[%s1 + $0x34] sm:$0xf]
  %v63 = vld [vmem:[%s1 + $0x38] sm:$0xf]
  %v64 = vld [vmem:[%s1 + $0x3c] sm:$0xf]
  %v81 = vunpack.c.l.b16 %v49
  %v82 = vunpack.c.l.b16 %v50
  %v83 = vunpack.c.l.b16 %v51
  %v84 = vunpack.c.l.b16 %v52
  %v85 = vunpack.c.l.b16 %v53
  %v86 = vunpack.c.l.b16 %v54
  %v87 = vunpack.c.l.b16 %v55
  %v88 = vunpack.c.l.b16 %v56
  %v89 = vunpack.c.l.b16 %v57
  %v90 = vunpack.c.l.b16 %v58
  %v91 = vunpack.c.l.b16 %v59
  %v92 = vunpack.c.l.b16 %v60
  %v93 = vunpack.c.l.b16 %v61
  %v94 = vunpack.c.l.b16 %v62
  %v95 = vunpack.c.l.b16 %v63
  %v96 = vunpack.c.l.b16 %v64
  %v97 = vpack.c.b16 %v82, %v81
  %v98 = vpack.c.b16 %v84, %v83
  %v99 = vpack.c.b16 %v86, %v85
  %v100 = vpack.c.b16 %v88, %v87
  %v101 = vpack.c.b16 %v90, %v89
  %v102 = vpack.c.b16 %v92, %v91
  %v103 = vpack.c.b16 %v94, %v93
  %v104 = vpack.c.b16 %v96, %v95
  %113 = vmatprep.subr.bf16.mxu0 0
  %114 = vmatpush1.bf16.msra.mxu0 %v97
  %115 = vmatprep.subr.bf16.mxu0 0
  %116 = vmatpush1.bf16.msra.mxu0 %v98
  %117 = vmatprep.subr.bf16.mxu0 0
  %118 = vmatpush1.bf16.msra.mxu0 %v99
  %119 = vmatprep.subr.bf16.mxu0 0
  %120 = vmatpush1.bf16.msra.mxu0 %v100
  %121 = vmatprep.subr.bf16.mxu0 0
  %122 = vmatpush1.bf16.msra.mxu0 %v101
  %123 = vmatprep.subr.bf16.mxu0 0
  %124 = vmatpush1.bf16.msra.mxu0 %v102
  %125 = vmatprep.subr.bf16.mxu0 0
  %126 = vmatpush1.bf16.msra.mxu0 %v103
  %127 = vmatprep.subr.bf16.mxu0 0
  %128 = vmatpush1.bf16.msra.mxu0 %v104
  %129 = vmatprep.subr.bf16.mxu0 0
  %130 = vmatpush1.bf16.msra.mxu0 0
  %131 = vmatprep.subr.bf16.mxu0 0
  %132 = vmatpush1.bf16.msra.mxu0 0
  %133 = vmatprep.subr.bf16.mxu0 0
  %134 = vmatpush1.bf16.msra.mxu0 0
  %135 = vmatprep.subr.bf16.mxu0 0
  %136 = vmatpush1.bf16.msra.mxu0 0
  %137 = vmatprep.subr.bf16.mxu0 0
  %138 = vmatpush1.bf16.msra.mxu0 0
  %139 = vmatprep.subr.bf16.mxu0 0
  %140 = vmatpush1.bf16.msra.mxu0 0
  %141 = vmatprep.subr.bf16.mxu0 0
  %142 = vmatpush1.bf16.msra.mxu0 0
  %143 = vmatprep.subr.bf16.mxu0 0
  %144 = vmatpush1.bf16.msra.mxu0 0
  %145 = vmatprep.mubr.bf16.mxu0 0
  %146 = vmatmul.mubr.bf16.gmra.mrb[0].mxu0 %v48
  %v147 = vpop.f32.mrb[0].mxu0
  %v148 = vadd.f32 0.0, %v147
  %v149 = vpop.f32.mrb[0].mxu0
  %v150 = vpop.f32.mrb[0].mxu0
  %v151 = vadd.f32 0.0, %v150
  %v152 = vpop.f32.mrb[0].mxu0
  %153 = vdwg.mxu0
  %v154 = vld [vmem:[%s4] sm:$0x1]
  %v156 = vlaneseq
  %v157 = vshrl.u32 %v156, 7
  %v158 = vsub.s32 0, %v157
  %v159 = vrot.slane %v154, %v158
  %v161 = vmul.f32 %v148, %v159
  %v162 = vmul.f32 %v151, %v159
  %v163 = vld [vmem:[%s5] sm:$0x1]
  %v165 = vlaneseq
  %v166 = vshrl.u32 %v165, 7
  %v167 = vsub.s32 0, %v166
  %v168 = vrot.slane %v163, %v167
  %v170 = vadd.f32 %v161, %v168
  %v171 = vadd.f32 %v162, %v168
  %v172 = vmax.f32 %v170, 0.0
  %v173 = vmax.f32 %v171, 0.0
  %v174 = vpack.c.bf16 %v173, %v172
  %v176 = vunpack.c.l.b16 %v174
  %v177 = vunpack.c.h.b16 %v174
  %v178 = vpack.c.b16 %v176, %v176
  %v179 = vpack.c.b16 %v177, %v177
  %182 = vst [vmem:[%s6] sm:$0xf] %v178
  %183 = vst [vmem:[%s6 + $0x4] sm:$0xf] %v179
  // Predicated region
  $region26: #{densenet_forward.22} parent=0 // pred_check
    _
  $region27: #{densenet_forward.22} parent=0 // pred_check_branch
    %185 = sbr.rel (0) target = $region29
  $region28: #{densenet_forward.22} parent=0 // pred_region
    _
  $region29: #{densenet_forward.22} parent=0 // pred_fallthru
    _
  // Predicated region
  $region30: #{densenet_forward.22} parent=0 // pred_check
    _
  $region31: #{densenet_forward.22} parent=0 // pred_check_branch
    %187 = sbr.rel (0) target = $region33
  $region32: #{densenet_forward.22} parent=0 // pred_region
    _
  $region33: #{densenet_forward.22} parent=0 // pred_fallthru
    _

// kernel: densenet_forward.23
$region0: #{densenet_forward.23}
  #allocation0 [shape = 'u32[]', space=smem, size = 0x4, offset = 0x4, fixed_abs, tag = 'smem constant byte address 0x4 - core index']
  #allocation1 [shape = 'u32[144,128]{1,0:T(1,128)}', space=vmem, size = 0x12000, scoped, tag = 'internal scratch']
  %s0 = inlined_call_operand.vmem [shape: bf16[2,4,4,128], index: 0, kind: input, shape index: {}]
  %s1 = inlined_call_operand.vmem [shape: bf16[3,3,128,128], index: 1, kind: input, shape index: {}]
  %s2 = inlined_call_operand.vmem [shape: bf16[2,2,2,128], index: 2, kind: output, shape index: {}]
  %s3 = sld [smem:[#allocation0]]
  $region48: #{densenet_forward.23} parent=0
    _
  %s5 = ssub.s32 1, %s3
  %s6 = scalar_select 0, %s5, %s3
  loop: start=0, step=1, limit=4
  $region2: #{densenet_forward.23} parent=0 // loop_pre_header
    _
  $region3: #{densenet_forward.23} parent=0 // loop_header
    %s8 = sphi 0, %s12
    %p9 = scmp.ge.s32.totalorder %s8, 4
    %s15 = sphi 0, %s27
    %s16 = sphi 0, %s23
    %s17 = sphi 0, %s15
    %s18 = sphi 0, %s16
    %s19 = sphi 0, %s17
    %s20 = sphi 0, %s18
    %s30 = sphi 0, %s32
    %s33 = sphi 0, %s30
    %s34 = sphi 0, %s33
    %s50 = sphi 0, %s34
    %s56 = sphi 0, %s58
    %s59 = sphi 0, %s56
    %s60 = sphi 0, %s59
    %s76 = sphi 0, %s60
    %s84 = sphi 0, %s86
    %s87 = sphi 0, %s84
    %s88 = sphi 0, %s87
    %s104 = sphi 0, %s88
  $region4: #{densenet_forward.23} parent=0 // loop_header_branch
    %11 = sbr.rel (%p9) target = $region8
  $region5: #{densenet_forward.23} parent=0 // loop_body
    %s13 = ssub.s32 %s8, 1
    %s14 = ssub.s32 %s8, 2
    %s21 = sadd.s32 1, %s16
    %p22 = scmp.ge.s32.totalorder %s21, 1
    %s23 = scalar_select %p22, 0, %s21
    %s24 = sadd.s32 1, %s15
    %s25 = scalar_select %p22, %s24, %s15
    %p26 = scmp.ge.s32.totalorder %s25, 2
    %s27 = scalar_select %p26, 0, %s25
    %s28 = ssub.s32 %s15, %s27
    %p29 = scmp.eq.s32.totalorder %s28, 0
    %s31 = sadd.s32 %s30, 1
    %s32 = scalar_select %p29, %s30, %s31
    %p35 = pneg %p29
    %p36 = scmp.eq.s32.totalorder %s8, 1
    %p37 = por %p35, %p36
    %p38 = scmp.ne.s32.totalorder %s30, %s33
    %p39 = scmp.eq.s32.totalorder %s8, 0
    %p40 = por %p38, %p39
    %p41 = scmp.ne.s32.totalorder %s30, %s33
    %p42 = scmp.eq.s32.totalorder %s13, 1
    %p43 = por %p41, %p42
    %p44 = scmp.ne.s32.totalorder %s33, %s34
    %p45 = scmp.eq.s32.totalorder %s13, 0
    %p46 = por %p44, %p45
    %p47 = scmp.ne.s32.totalorder %s33, %s34
    %p48 = scmp.eq.s32.totalorder %s14, 1
    %p49 = por %p47, %p48
    %p51 = scmp.ne.s32.totalorder %s34, %s50
    %p52 = scmp.eq.s32.totalorder %s14, 0
    %p53 = por %p51, %p52
    %s54 = ssub.s32 %s16, %s23
    %p55 = scmp.eq.s32.totalorder %s54, 0
    %s57 = sadd.s32 %s56, 1
    %s58 = scalar_select %p55, %s56, %s57
    %p61 = pneg %p55
    %p62 = scmp.eq.s32.totalorder %s8, 1
    %p63 = por %p61, %p62
    %p64 = scmp.ne.s32.totalorder %s56, %s59
    %p65 = scmp.eq.s32.totalorder %s8, 0
    %p66 = por %p64, %p65
    %p67 = scmp.ne.s32.totalorder %s56, %s59
    %p68 = scmp.eq.s32.totalorder %s13, 1
    %p69 = por %p67, %p68
    %p70 = scmp.ne.s32.totalorder %s59, %s60
    %p71 = scmp.eq.s32.totalorder %s13, 0
    %p72 = por %p70, %p71
    %p73 = scmp.ne.s32.totalorder %s59, %s60
    %p74 = scmp.eq.s32.totalorder %s14, 1
    %p75 = por %p73, %p74
    %p77 = scmp.ne.s32.totalorder %s60, %s76
    %p78 = scmp.eq.s32.totalorder %s14, 0
    %p79 = por %p77, %p78
    %s80 = ssub.s32 %s15, %s27
    %s81 = ssub.s32 %s16, %s23
    %s82 = sor.u32 %s80, %s81
    %p83 = scmp.eq.s32.totalorder %s82, 0
    %s85 = sadd.s32 %s84, 1
    %s86 = scalar_select %p83, %s84, %s85
    %p89 = pneg %p83
    %p90 = scmp.eq.s32.totalorder %s8, 1
    %p91 = por %p89, %p90
    %p92 = scmp.ne.s32.totalorder %s84, %s87
    %p93 = scmp.eq.s32.totalorder %s8, 0
    %p94 = por %p92, %p93
    %p95 = scmp.ne.s32.totalorder %s84, %s87
    %p96 = scmp.eq.s32.totalorder %s13, 1
    %p97 = por %p95, %p96
    %p98 = scmp.ne.s32.totalorder %s87, %s88
    %p99 = scmp.eq.s32.totalorder %s13, 0
    %p100 = por %p98, %p99
    %p101 = scmp.ne.s32.totalorder %s87, %s88
    %p102 = scmp.eq.s32.totalorder %s14, 1
    %p103 = por %p101, %p102
    %p105 = scmp.ne.s32.totalorder %s88, %s104
    %p106 = scmp.eq.s32.totalorder %s14, 0
    %p107 = por %p105, %p106
    %p108 = scmp.le.s32.totalorder 1, %s8
    %p109 = scmp.lt.s32.totalorder %s8, 3
    %p110 = pnand %p108, %p109
    %p111 = pneg %p110
    // Predicated region
    $region9: #{densenet_forward.23} parent=5 // pred_check
      _
    $region10: #{densenet_forward.23} parent=5 // pred_check_branch
      %113 = sbr.rel (%p110) target = $region12
    $region11: #{densenet_forward.23} parent=5 // pred_region
      %s114 = ssub.s32 %s8, 1
      // Predicated region
      $region13: #{densenet_forward.23} parent=11 // pred_check
        %p115 = pneg %p72
      $region14: #{densenet_forward.23} parent=11 // pred_check_branch
        %117 = sbr.rel (%p115) target = $region16
      $region15: #{densenet_forward.23} parent=11 // pred_region
        %p118 = scmp.lt.s32.totalorder %s18, 0
        %s119 = scalar_select %p118, %s18, 0
        %s120 = smul.addr %s119, 4
        %s121 = scalar_lea.vmem %s1, %s120
      $region16: #{densenet_forward.23} parent=11 // pred_fallthru
        _
    $region12: #{densenet_forward.23} parent=5 // pred_fallthru
      _
    %p122 = scmp.lt.s32.totalorder %s8, 2
    // Predicated region
    $region17: #{densenet_forward.23} parent=5 // pred_check
      %p123 = pneg %p122
    $region18: #{densenet_forward.23} parent=5 // pred_check_branch
      %125 = sbr.rel (%p123) target = $region20
    $region19: #{densenet_forward.23} parent=5 // pred_region
      // Predicated region
      $region21: #{densenet_forward.23} parent=19 // pred_check
        %p126 = pneg %p40
      $region22: #{densenet_forward.23} parent=19 // pred_check_branch
        %128 = sbr.rel (%p126) target = $region24
      $region23: #{densenet_forward.23} parent=19 // pred_region
        %p129 = scmp.lt.s32.totalorder %s15, 1
        %s130 = scalar_select %p129, %s15, 1
        %s131 = smul.addr %s130, 4
        %s132 = smul.addr %s131, 2
        %s133 = scalar_lea.vmem %s0, %s132
      $region24: #{densenet_forward.23} parent=19 // pred_fallthru
        _
    $region20: #{densenet_forward.23} parent=5 // pred_fallthru
      _
    %p134 = scmp.le.s32.totalorder 1, %s8
    %p135 = scmp.lt.s32.totalorder %s8, 3
    %p136 = pnand %p134, %p135
    %p137 = pneg %p136
    // Predicated region
    $region25: #{densenet_forward.23} parent=5 // pred_check
      _
    $region26: #{densenet_forward.23} parent=5 // pred_check_branch
      %139 = sbr.rel (%p136) target = $region28
    $region27: #{densenet_forward.23} parent=5 // pred_region
      %s140 = ssub.s32 %s8, 1
      %p141 = scmp.lt.s32.totalorder %s17, 1
      %s142 = scalar_select %p141, %s17, 1
      %s143 = smul.addr %s142, 4
      %s144 = smul.addr %s143, 2
      %s145 = scalar_lea.vmem %s0, %s144
      %p146 = pneg %p46
      %p147 = pneg %p43
      %p148 = scmp.lt.s32.totalorder %s18, 0
      %s149 = scalar_select %p148, %s18, 0
      %s150 = smul.addr %s149, 4
      %s151 = scalar_lea.vmem %s1, %s150
      %p152 = pneg %p72
      %p153 = pneg %p69
      %p154 = pneg %p100
      %p155 = pneg %p97
      %p156 = scmp.lt.s32.totalorder %s17, 1
      %s157 = scalar_select %p156, %s17, 1
      %p158 = scmp.lt.s32.totalorder %s18, 0
      %s159 = scalar_select %p158, %s18, 0
      %s160 = smul.addr %s157, 2
      %s161 = sadd.s32 %s159, %s160
      %s162 = scalar_lea.vmem %s2, %s161
      %p163 = scmp.lt.s32.totalorder %s17, 1
      %s164 = scalar_select %p163, %s17, 1
      %s165 = smul.addr %s164, 4
      %s166 = smul.addr %s165, 2
      %s167 = scalar_lea.vmem %s0, %s166
      %p168 = scmp.lt.s32.totalorder %s18, 0
      %s169 = scalar_select %p168, %s18, 0
      %s170 = smul.addr %s169, 4
      %s171 = scalar_lea.vmem %s1, %s170
      %p172 = scmp.lt.s32.totalorder %s17, 1
      %s173 = scalar_select %p172, %s17, 1
      %p174 = scmp.lt.s32.totalorder %s18, 0
      %s175 = scalar_select %p174, %s18, 0
      %s176 = smul.addr %s173, 2
      %s177 = sadd.s32 %s175, %s176
      %s178 = scalar_lea.vmem %s2, %s177
      loop: start=0, step=1, limit=2
      $region29: #{densenet_forward.23} parent=27 // loop_pre_header
        _
      $region30: #{densenet_forward.23} parent=27 // loop_header
        %s181 = sphi 0, %s185
        %p182 = scmp.ge.s32.totalorder %s181, 2
      $region31: #{densenet_forward.23} parent=27 // loop_header_branch
        %184 = sbr.rel (%p182) target = $region35
      $region32: #{densenet_forward.23} parent=27 // loop_body
        %s186 = smul.addr %s181, 2
        %s187 = scalar_lea.vmem %s167, %s186
        %v188 = vld [vmem:[%s187] sm:$0x1]
        %v189 = vld [vmem:[%s171] sm:$0xf]
        %v190 = vld [vmem:[%s171 + $0x4] sm:$0xf]
        %v191 = vld [vmem:[%s171 + $0x8] sm:$0xf]
        %v192 = vld [vmem:[%s171 + $0xc] sm:$0xf]
        %v193 = vld [vmem:[%s171 + $0x10] sm:$0xf]
        %v194 = vld [vmem:[%s171 + $0x14] sm:$0xf]
        %v195 = vld [vmem:[%s171 + $0x18] sm:$0xf]
        %v196 = vld [vmem:[%s171 + $0x1c] sm:$0xf]
        %v197 = vld [vmem:[%s171 + $0x20] sm:$0xf]
        %v198 = vld [vmem:[%s171 + $0x24] sm:$0xf]
        %v199 = vld [vmem:[%s171 + $0x28] sm:$0xf]
        %v200 = vld [vmem:[%s171 + $0x2c] sm:$0xf]
        %v201 = vld [vmem:[%s171 + $0x30] sm:$0xf]
        %v202 = vld [vmem:[%s171 + $0x34] sm:$0xf]
        %v203 = vld [vmem:[%s171 + $0x38] sm:$0xf]
        %v204 = vld [vmem:[%s171 + $0x3c] sm:$0xf]
        %v205 = vld [vmem:[%s187] sm:$0x3]
        %s206 = scalar_lea.vmem %s171, 64
        %v207 = vld [vmem:[%s206] sm:$0xf]
        %v208 = vld [vmem:[%s206 + $0x4] sm:$0xf]
        %v209 = vld [vmem:[%s206 + $0x8] sm:$0xf]
        %v210 = vld [vmem:[%s206 + $0xc] sm:$0xf]
        %v211 = vld [vmem:[%s206 + $0x10] sm:$0xf]
        %v212 = vld [vmem:[%s206 + $0x14] sm:$0xf]
        %v213 = vld [vmem:[%s206 + $0x18] sm:$0xf]
        %v214 = vld [vmem:[%s206 + $0x1c] sm:$0xf]
        %v215 = vld [vmem:[%s206 + $0x20] sm:$0xf]
        %v216 = vld [vmem:[%s206 + $0x24] sm:$0xf]
        %v217 = vld [vmem:[%s206 + $0x28] sm:$0xf]
        %v218 = vld [vmem:[%s206 + $0x2c] sm:$0xf]
        %v219 = vld [vmem:[%s206 + $0x30] sm:$0xf]
        %v220 = vld [vmem:[%s206 + $0x34] sm:$0xf]
        %v221 = vld [vmem:[%s206 + $0x38] sm:$0xf]
        %v222 = vld [vmem:[%s206 + $0x3c] sm:$0xf]
        %v225 = vunpack.c.l.s4 1983009808
        %v226 = vunpack.c.0.s8 %v225
        %v227 = vlaneseq
        %v228 = vshrl.u32 %v227, 7
        %v229 = vsub.s32 %v226, %v228
        %v230 = vrot.slane %v205, %v229
        %v232 = vshrl.u32 %v230, 16
        %v234 = vshll.u32 %v230, 16
        %v236 = vrot.slane %v234, 1
        %v237 = vor.u32 %v232, %v236
        %v255 = vunpack.c.l.b16 %v207
        %v256 = vunpack.c.l.b16 %v208
        %v257 = vunpack.c.l.b16 %v209
        %v258 = vunpack.c.l.b16 %v210
        %v259 = vunpack.c.l.b16 %v211
        %v260 = vunpack.c.l.b16 %v212
        %v261 = vunpack.c.l.b16 %v213
        %v262 = vunpack.c.l.b16 %v214
        %v263 = vunpack.c.l.b16 %v215
        %v264 = vunpack.c.l.b16 %v216
        %v265 = vunpack.c.l.b16 %v217
        %v266 = vunpack.c.l.b16 %v218
        %v267 = vunpack.c.l.b16 %v219
        %v268 = vunpack.c.l.b16 %v220
        %v269 = vunpack.c.l.b16 %v221
        %v270 = vunpack.c.l.b16 %v222
        %v271 = vpack.c.b16 %v256, %v255
        %v272 = vpack.c.b16 %v258, %v257
        %v273 = vpack.c.b16 %v260, %v259
        %v274 = vpack.c.b16 %v262, %v261
        %v275 = vpack.c.b16 %v264, %v263
        %v276 = vpack.c.b16 %v266, %v265
        %v277 = vpack.c.b16 %v268, %v267
        %v278 = vpack.c.b16 %v270, %v269
        %287 = vmatprep.subr.bf16.mxu0 0
        %288 = vmatpush1.bf16.msra.mxu0 %v271
        %289 = vmatprep.subr.bf16.mxu0 0
        %290 = vmatpush1.bf16.msra.mxu0 %v272
        %291 = vmatprep.subr.bf16.mxu0 0
        %292 = vmatpush1.bf16.msra.mxu0 %v273
        %293 = vmatprep.subr.bf16.mxu0 0
        %294 = vmatpush1.bf16.msra.mxu0 %v274
        %295 = vmatprep.subr.bf16.mxu0 0
        %296 = vmatpush1.bf16.msra.mxu0 %v275
        %297 = vmatprep.subr.bf16.mxu0 0
        %298 = vmatpush1.bf16.msra.mxu0 %v276
        %299 = vmatprep.subr.bf16.mxu0 0
        %300 = vmatpush1.bf16.msra.mxu0 %v277
        %301 = vmatprep.subr.bf16.mxu0 0
        %302 = vmatpush1.bf16.msra.mxu0 %v278
        %303 = vmatprep.subr.bf16.mxu0 0
        %304 = vmatpush1.bf16.msra.mxu0 0
        %305 = vmatprep.subr.bf16.mxu0 0
        %306 = vmatpush1.bf16.msra.mxu0 0
        %307 = vmatprep.subr.bf16.mxu0 0
        %308 = vmatpush1.bf16.msra.mxu0 0
        %309 = vmatprep.subr.bf16.mxu0 0
        %310 = vmatpush1.bf16.msra.mxu0 0
        %311 = vmatprep.subr.bf16.mxu0 0
        %312 = vmatpush1.bf16.msra.mxu0 0
        %313 = vmatprep.subr.bf16.mxu0 0
        %314 = vmatpush1.bf16.msra.mxu0 0
        %315 = vmatprep.subr.bf16.mxu0 0
        %316 = vmatpush1.bf16.msra.mxu0 0
        %317 = vmatprep.subr.bf16.mxu0 0
        %318 = vmatpush1.bf16.msra.mxu0 0
        %319 = vmatprep.mubr.bf16.mxu0 0
        %320 = vmatmul.mubr.bf16.gmra.mrb[0].mxu0 %v237
        %v321 = vpop.f32.mrb[0].mxu0
        %v322 = vadd.f32 0.0, %v321
        %v323 = vpop.f32.mrb[0].mxu0
        %v324 = vpop.f32.mrb[0].mxu0
        %v325 = vpop.f32.mrb[0].mxu0
        %326 = vdwg.mxu0
        %v343 = vunpack.c.l.b16 %v189
        %v344 = vunpack.c.l.b16 %v190
        %v345 = vunpack.c.l.b16 %v191
        %v346 = vunpack.c.l.b16 %v192
        %v347 = vunpack.c.l.b16 %v193
        %v348 = vunpack.c.l.b16 %v194
        %v349 = vunpack.c.l.b16 %v195
        %v350 = vunpack.c.l.b16 %v196
        %v351 = vunpack.c.l.b16 %v197
        %v352 = vunpack.c.l.b16 %v198
        %v353 = vunpack.c.l.b16 %v199
        %v354 = vunpack.c.l.b16 %v200
        %v355 = vunpack.c.l.b16 %v201
        %v356 = vunpack.c.l.b16 %v202
        %v357 = vunpack.c.l.b16 %v203
        %v358 = vunpack.c.l.b16 %v204
        %v359 = vpack.c.b16 %v344, %v343
        %v360 = vpack.c.b16 %v346, %v345
        %v361 = vpack.c.b16 %v348, %v347
        %v362 = vpack.c.b16 %v350, %v349
        %v363 = vpack.c.b16 %v352, %v351
        %v364 = vpack.c.b16 %v354, %v353
        %v365 = vpack.c.b16 %v356, %v355
        %v366 = vpack.c.b16 %v358, %v357
        %375 = vmatprep.subr.bf16.mxu0 0
        %376 = vmatpush1.bf16.msra.mxu0 %v359
        %377 = vmatprep.subr.bf16.mxu0 0
        %378 = vmatpush1.bf16.msra.mxu0 %v360
        %379 = vmatprep.subr.bf16.mxu0 0
        %380 = vmatpush1.bf16.msra.mxu0 %v361
        %381 = vmatprep.subr.bf16.mxu0 0
        %382 = vmatpush1.bf16.msra.mxu0 %v362
        %383 = vmatprep.subr.bf16.mxu0 0
        %384 = vmatpush1.bf16.msra.mxu0 %v363
        %385 = vmatprep.subr.bf16.mxu0 0
        %386 = vmatpush1.bf16.msra.mxu0 %v364
        %387 = vmatprep.subr.bf16.mxu0 0
        %388 = vmatpush1.bf16.msra.mxu0 %v365
        %389 = vmatprep.subr.bf16.mxu0 0
        %390 = vmatpush1.bf16.msra.mxu0 %v366
        %391 = vmatprep.subr.bf16.mxu0 0
        %392 = vmatpush1.bf16.msra.mxu0 0
        %393 = vmatprep.subr.bf16.mxu0 0
        %394 = vmatpush1.bf16.msra.mxu0 0
        %395 = vmatprep.subr.bf16.mxu0 0
        %396 = vmatpush1.bf16.msra.mxu0 0
        %397 = vmatprep.subr.bf16.mxu0 0
        %398 = vmatpush1.bf16.msra.mxu0 0
        %399 = vmatprep.subr.bf16.mxu0 0
        %400 = vmatpush1.bf16.msra.mxu0 0
        %401 = vmatprep.subr.bf16.mxu0 0
        %402 = vmatpush1.bf16.msra.mxu0 0
        %403 = vmatprep.subr.bf16.mxu0 0
        %404 = vmatpush1.bf16.msra.mxu0 0
        %405 = vmatprep.subr.bf16.mxu0 0
        %406 = vmatpush1.bf16.msra.mxu0 0
        %407 = vmatprep.mubr.bf16.mxu0 0
        %408 = vmatmul.mubr.bf16.gmra.mrb[0].mxu0 %v188
        %v409 = vpop.f32.mrb[0].mxu0
        %v410 = vadd.f32 %v322, %v409
        %v411 = vpop.f32.mrb[0].mxu0
        %v412 = vpop.f32.mrb[0].mxu0
        %v413 = vpop.f32.mrb[0].mxu0
        %414 = vdwg.mxu0
        %v415 = vld [vmem:[%s187] sm:$0x2]
        %s416 = scalar_lea.vmem %s171, 128
        %v417 = vld [vmem:[%s416] sm:$0xf]
        %v418 = vld [vmem:[%s416 + $0x4] sm:$0xf]
        %v419 = vld [vmem:[%s416 + $0x8] sm:$0xf]
        %v420 = vld [vmem:[%s416 + $0xc] sm:$0xf]
        %v421 = vld [vmem:[%s416 + $0x10] sm:$0xf]
        %v422 = vld [vmem:[%s416 + $0x14] sm:$0xf]
        %v423 = vld [vmem:[%s416 + $0x18] sm:$0xf]
        %v424 = vld [vmem:[%s416 + $0x1c] sm:$0xf]
        %v425 = vld [vmem:[%s416 + $0x20] sm:$0xf]
        %v426 = vld [vmem:[%s416 + $0x24] sm:$0xf]
        %v427 = vld [vmem:[%s416 + $0x28] sm:$0xf]
        %v428 = vld [vmem:[%s416 + $0x2c] sm:$0xf]
        %v429 = vld [vmem:[%s416 + $0x30] sm:$0xf]
        %v430 = vld [vmem:[%s416 + $0x34] sm:$0xf]
        %v431 = vld [vmem:[%s416 + $0x38] sm:$0xf]
        %v432 = vld [vmem:[%s416 + $0x3c] sm:$0xf]
        %v435 = vunpack.c.l.s4 1983009808
        %v436 = vunpack.c.0.s8 %v435
        %v437 = vlaneseq
        %v438 = vshrl.u32 %v437, 7
        %v439 = vsub.s32 %v436, %v438
        %v440 = vrot.slane %v415, %v439
        %v441 = vrot.slane %v440, 1
        %v459 = vunpack.c.l.b16 %v417
        %v460 = vunpack.c.l.b16 %v418
        %v461 = vunpack.c.l.b16 %v419
        %v462 = vunpack.c.l.b16 %v420
        %v463 = vunpack.c.l.b16 %v421
        %v464 = vunpack.c.l.b16 %v422
        %v465 = vunpack.c.l.b16 %v423
        %v466 = vunpack.c.l.b16 %v424
        %v467 = vunpack.c.l.b16 %v425
        %v468 = vunpack.c.l.b16 %v426
        %v469 = vunpack.c.l.b16 %v427
        %v470 = vunpack.c.l.b16 %v428
        %v471 = vunpack.c.l.b16 %v429
        %v472 = vunpack.c.l.b16 %v430
        %v473 = vunpack.c.l.b16 %v431
        %v474 = vunpack.c.l.b16 %v432
        %v475 = vpack.c.b16 %v460, %v459
        %v476 = vpack.c.b16 %v462, %v461
        %v477 = vpack.c.b16 %v464, %v463
        %v478 = vpack.c.b16 %v466, %v465
        %v479 = vpack.c.b16 %v468, %v467
        %v480 = vpack.c.b16 %v470, %v469
        %v481 = vpack.c.b16 %v472, %v471
        %v482 = vpack.c.b16 %v474, %v473
        %491 = vmatprep.subr.bf16.mxu0 0
        %492 = vmatpush1.bf16.msra.mxu0 %v475
        %493 = vmatprep.subr.bf16.mxu0 0
        %494 = vmatpush1.bf16.msra.mxu0 %v476
        %495 = vmatprep.subr.bf16.mxu0 0
        %496 = vmatpush1.bf16.msra.mxu0 %v477
        %497 = vmatprep.subr.bf16.mxu0 0
        %498 = vmatpush1.bf16.msra.mxu0 %v478
        %499 = vmatprep.subr.bf16.mxu0 0
        %500 = vmatpush1.bf16.msra.mxu0 %v479
        %501 = vmatprep.subr.bf16.mxu0 0
        %502 = vmatpush1.bf16.msra.mxu0 %v480
        %503 = vmatprep.subr.bf16.mxu0 0
        %504 = vmatpush1.bf16.msra.mxu0 %v481
        %505 = vmatprep.subr.bf16.mxu0 0
        %506 = vmatpush1.bf16.msra.mxu0 %v482
        %507 = vmatprep.subr.bf16.mxu0 0
        %508 = vmatpush1.bf16.msra.mxu0 0
        %509 = vmatprep.subr.bf16.mxu0 0
        %510 = vmatpush1.bf16.msra.mxu0 0
        %511 = vmatprep.subr.bf16.mxu0 0
        %512 = vmatpush1.bf16.msra.mxu0 0
        %513 = vmatprep.subr.bf16.mxu0 0
        %514 = vmatpush1.bf16.msra.mxu0 0
        %515 = vmatprep.subr.bf16.mxu0 0
        %516 = vmatpush1.bf16.msra.mxu0 0
        %517 = vmatprep.subr.bf16.mxu0 0
        %518 = vmatpush1.bf16.msra.mxu0 0
        %519 = vmatprep.subr.bf16.mxu0 0
        %520 = vmatpush1.bf16.msra.mxu0 0
        %521 = vmatprep.subr.bf16.mxu0 0
        %522 = vmatpush1.bf16.msra.mxu0 0
        %523 = vmatprep.mubr.bf16.mxu0 0
        %524 = vmatmul.mubr.bf16.gmra.mrb[0].mxu0 %v441
        %v525 = vpop.f32.mrb[0].mxu0
        %v526 = vadd.f32 0.0, %v525
        %v527 = vpop.f32.mrb[0].mxu0
        %v528 = vpop.f32.mrb[0].mxu0
        %v529 = vpop.f32.mrb[0].mxu0
        %530 = vdwg.mxu0
        %v531 = vadd.f32 %v410, %v526
        %s532 = sadd.s32 %s181, 1
        %s533 = smul.addr %s532, 2
        %s534 = scalar_lea.vmem %s167, %s533
        %v535 = vld [vmem:[%s534] sm:$0x1]
        %s536 = scalar_lea.vmem %s171, 192
        %v537 = vld [vmem:[%s536] sm:$0xf]
        %v538 = vld [vmem:[%s536 + $0x4] sm:$0xf]
        %v539 = vld [vmem:[%s536 + $0x8] sm:$0xf]
        %v540 = vld [vmem:[%s536 + $0xc] sm:$0xf]
        %v541 = vld [vmem:[%s536 + $0x10] sm:$0xf]
        %v542 = vld [vmem:[%s536 + $0x14] sm:$0xf]
        %v543 = vld [vmem:[%s536 + $0x18] sm:$0xf]
        %v544 = vld [vmem:[%s536 + $0x1c] sm:$0xf]
        %v545 = vld [vmem:[%s536 + $0x20] sm:$0xf]
        %v546 = vld [vmem:[%s536 + $0x24] sm:$0xf]
        %v547 = vld [vmem:[%s536 + $0x28] sm:$0xf]
        %v548 = vld [vmem:[%s536 + $0x2c] sm:$0xf]
        %v549 = vld [vmem:[%s536 + $0x30] sm:$0xf]
        %v550 = vld [vmem:[%s536 + $0x34] sm:$0xf]
        %v551 = vld [vmem:[%s536 + $0x38] sm:$0xf]
        %v552 = vld [vmem:[%s536 + $0x3c] sm:$0xf]
        %v569 = vunpack.c.l.b16 %v537
        %v570 = vunpack.c.l.b16 %v538
        %v571 = vunpack.c.l.b16 %v539
        %v572 = vunpack.c.l.b16 %v540
        %v573 = vunpack.c.l.b16 %v541
        %v574 = vunpack.c.l.b16 %v542
        %v575 = vunpack.c.l.b16 %v543
        %v576 = vunpack.c.l.b16 %v544
        %v577 = vunpack.c.l.b16 %v545
        %v578 = vunpack.c.l.b16 %v546
        %v579 = vunpack.c.l.b16 %v547
        %v580 = vunpack.c.l.b16 %v548
        %v581 = vunpack.c.l.b16 %v549
        %v582 = vunpack.c.l.b16 %v550
        %v583 = vunpack.c.l.b16 %v551
        %v584 = vunpack.c.l.b16 %v552
        %v585 = vpack.c.b16 %v570, %v569
        %v586 = vpack.c.b16 %v572, %v571
        %v587 = vpack.c.b16 %v574, %v573
        %v588 = vpack.c.b16 %v576, %v575
        %v589 = vpack.c.b16 %v578, %v577
        %v590 = vpack.c.b16 %v580, %v579
        %v591 = vpack.c.b16 %v582, %v581
        %v592 = vpack.c.b16 %v584, %v583
        %601 = vmatprep.subr.bf16.mxu0 0
        %602 = vmatpush1.bf16.msra.mxu0 %v585
        %603 = vmatprep.subr.bf16.mxu0 0
        %604 = vmatpush1.bf16.msra.mxu0 %v586
        %605 = vmatprep.subr.bf16.mxu0 0
        %606 = vmatpush1.bf16.msra.mxu0 %v587
        %607 = vmatprep.subr.bf16.mxu0 0
        %608 = vmatpush1.bf16.msra.mxu0 %v588
        %609 = vmatprep.subr.bf16.mxu0 0
        %610 = vmatpush1.bf16.msra.mxu0 %v589
        %611 = vmatprep.subr.bf16.mxu0 0
        %612 = vmatpush1.bf16.msra.mxu0 %v590
        %613 = vmatprep.subr.bf16.mxu0 0
        %614 = vmatpush1.bf16.msra.mxu0 %v591
        %615 = vmatprep.subr.bf16.mxu0 0
        %616 = vmatpush1.bf16.msra.mxu0 %v592
        %617 = vmatprep.subr.bf16.mxu0 0
        %618 = vmatpush1.bf16.msra.mxu0 0
        %619 = vmatprep.subr.bf16.mxu0 0
        %620 = vmatpush1.bf16.msra.mxu0 0
        %621 = vmatprep.subr.bf16.mxu0 0
        %622 = vmatpush1.bf16.msra.mxu0 0
        %623 = vmatprep.subr.bf16.mxu0 0
        %624 = vmatpush1.bf16.msra.mxu0 0
        %625 = vmatprep.subr.bf16.mxu0 0
        %626 = vmatpush1.bf16.msra.mxu0 0
        %627 = vmatprep.subr.bf16.mxu0 0
        %628 = vmatpush1.bf16.msra.mxu0 0
        %629 = vmatprep.subr.bf16.mxu0 0
        %630 = vmatpush1.bf16.msra.mxu0 0
        %631 = vmatprep.subr.bf16.mxu0 0
        %632 = vmatpush1.bf16.msra.mxu0 0
        %633 = vmatprep.mubr.bf16.mxu0 0
        %634 = vmatmul.mubr.bf16.gmra.mrb[0].mxu0 %v535
        %v635 = vpop.f32.mrb[0].mxu0
        %v636 = vadd.f32 0.0, %v635
        %v637 = vpop.f32.mrb[0].mxu0
        %v638 = vpop.f32.mrb[0].mxu0
        %v639 = vpop.f32.mrb[0].mxu0
        %640 = vdwg.mxu0
        %v641 = vadd.f32 %v531, %v636
        %v642 = vld [vmem:[%s534] sm:$0x3]
        %s643 = scalar_lea.vmem %s171, 256
        %v644 = vld [vmem:[%s643] sm:$0xf]
        %v645 = vld [vmem:[%s643 + $0x4] sm:$0xf]
        %v646 = vld [vmem:[%s643 + $0x8] sm:$0xf]
        %v647 = vld [vmem:[%s643 + $0xc] sm:$0xf]
        %v648 = vld [vmem:[%s643 + $0x10] sm:$0xf]
        %v649 = vld [vmem:[%s643 + $0x14] sm:$0xf]
        %v650 = vld [vmem:[%s643 + $0x18] sm:$0xf]
        %v651 = vld [vmem:[%s643 + $0x1c] sm:$0xf]
        %v652 = vld [vmem:[%s643 + $0x20] sm:$0xf]
        %v653 = vld [vmem:[%s643 + $0x24] sm:$0xf]
        %v654 = vld [vmem:[%s643 + $0x28] sm:$0xf]
        %v655 = vld [vmem:[%s643 + $0x2c] sm:$0xf]
        %v656 = vld [vmem:[%s643 + $0x30] sm:$0xf]
        %v657 = vld [vmem:[%s643 + $0x34] sm:$0xf]
        %v658 = vld [vmem:[%s643 + $0x38] sm:$0xf]
        %v659 = vld [vmem:[%s643 + $0x3c] sm:$0xf]
        %v662 = vunpack.c.l.s4 1983009808
        %v663 = vunpack.c.0.s8 %v662
        %v664 = vlaneseq
        %v665 = vshrl.u32 %v664, 7
        %v666 = vsub.s32 %v663, %v665
        %v667 = vrot.slane %v642, %v666
        %v669 = vshrl.u32 %v667, 16
        %v671 = vshll.u32 %v667, 16
        %v673 = vrot.slane %v671, 1
        %v674 = vor.u32 %v669, %v673
        %v692 = vunpack.c.l.b16 %v644
        %v693 = vunpack.c.l.b16 %v645
        %v694 = vunpack.c.l.b16 %v646
        %v695 = vunpack.c.l.b16 %v647
        %v696 = vunpack.c.l.b16 %v648
        %v697 = vunpack.c.l.b16 %v649
        %v698 = vunpack.c.l.b16 %v650
        %v699 = vunpack.c.l.b16 %v651
        %v700 = vunpack.c.l.b16 %v652
        %v701 = vunpack.c.l.b16 %v653
        %v702 = vunpack.c.l.b16 %v654
        %v703 = vunpack.c.l.b16 %v655
        %v704 = vunpack.c.l.b16 %v656
        %v705 = vunpack.c.l.b16 %v657
        %v706 = vunpack.c.l.b16 %v658
        %v707 = vunpack.c.l.b16 %v659
        %v708 = vpack.c.b16 %v693, %v692
        %v709 = vpack.c.b16 %v695, %v694
        %v710 = vpack.c.b16 %v697, %v696
        %v711 = vpack.c.b16 %v699, %v698
        %v712 = vpack.c.b16 %v701, %v700
        %v713 = vpack.c.b16 %v703, %v702
        %v714 = vpack.c.b16 %v705, %v704
        %v715 = vpack.c.b16 %v707, %v706
        %724 = vmatprep.subr.bf16.mxu0 0
        %725 = vmatpush1.bf16.msra.mxu0 %v708
        %726 = vmatprep.subr.bf16.mxu0 0
        %727 = vmatpush1.bf16.msra.mxu0 %v709
        %728 = vmatprep.subr.bf16.mxu0 0
        %729 = vmatpush1.bf16.msra.mxu0 %v710
        %730 = vmatprep.subr.bf16.mxu0 0
        %731 = vmatpush1.bf16.msra.mxu0 %v711
        %732 = vmatprep.subr.bf16.mxu0 0
        %733 = vmatpush1.bf16.msra.mxu0 %v712
        %734 = vmatprep.subr.bf16.mxu0 0
        %735 = vmatpush1.bf16.msra.mxu0 %v713
        %736 = vmatprep.subr.bf16.mxu0 0
        %737 = vmatpush1.bf16.msra.mxu0 %v714
        %738 = vmatprep.subr.bf16.mxu0 0
        %739 = vmatpush1.bf16.msra.mxu0 %v715
        %740 = vmatprep.subr.bf16.mxu0 0
        %741 = vmatpush1.bf16.msra.mxu0 0
        %742 = vmatprep.subr.bf16.mxu0 0
        %743 = vmatpush1.bf16.msra.mxu0 0
        %744 = vmatprep.subr.bf16.mxu0 0
        %745 = vmatpush1.bf16.msra.mxu0 0
        %746 = vmatprep.subr.bf16.mxu0 0
        %747 = vmatpush1.bf16.msra.mxu0 0
        %748 = vmatprep.subr.bf16.mxu0 0
        %749 = vmatpush1.bf16.msra.mxu0 0
        %750 = vmatprep.subr.bf16.mxu0 0
        %751 = vmatpush1.bf16.msra.mxu0 0
        %752 = vmatprep.subr.bf16.mxu0 0
        %753 = vmatpush1.bf16.msra.mxu0 0
        %754 = vmatprep.subr.bf16.mxu0 0
        %755 = vmatpush1.bf16.msra.mxu0 0
        %756 = vmatprep.mubr.bf16.mxu0 0
        %757 = vmatmul.mubr.bf16.gmra.mrb[0].mxu0 %v674
        %v758 = vpop.f32.mrb[0].mxu0
        %v759 = vadd.f32 0.0, %v758
        %v760 = vpop.f32.mrb[0].mxu0
        %v761 = vpop.f32.mrb[0].mxu0
        %v762 = vpop.f32.mrb[0].mxu0
        %763 = vdwg.mxu0
        %v764 = vadd.f32 %v641, %v759
        %v765 = vld [vmem:[%s534] sm:$0x2]
        %s766 = scalar_lea.vmem %s171, 320
        %v767 = vld [vmem:[%s766] sm:$0xf]
        %v768 = vld [vmem:[%s766 + $0x4] sm:$0xf]
        %v769 = vld [vmem:[%s766 + $0x8] sm:$0xf]
        %v770 = vld [vmem:[%s766 + $0xc] sm:$0xf]
        %v771 = vld [vmem:[%s766 + $0x10] sm:$0xf]
        %v772 = vld [vmem:[%s766 + $0x14] sm:$0xf]
        %v773 = vld [vmem:[%s766 + $0x18] sm:$0xf]
        %v774 = vld [vmem:[%s766 + $0x1c] sm:$0xf]
        %v775 = vld [vmem:[%s766 + $0x20] sm:$0xf]
        %v776 = vld [vmem:[%s766 + $0x24] sm:$0xf]
        %v777 = vld [vmem:[%s766 + $0x28] sm:$0xf]
        %v778 = vld [vmem:[%s766 + $0x2c] sm:$0xf]
        %v779 = vld [vmem:[%s766 + $0x30] sm:$0xf]
        %v780 = vld [vmem:[%s766 + $0x34] sm:$0xf]
        %v781 = vld [vmem:[%s766 + $0x38] sm:$0xf]
        %v782 = vld [vmem:[%s766 + $0x3c] sm:$0xf]
        %v785 = vunpack.c.l.s4 1983009808
        %v786 = vunpack.c.0.s8 %v785
        %v787 = vlaneseq
        %v788 = vshrl.u32 %v787, 7
        %v789 = vsub.s32 %v786, %v788
        %v790 = vrot.slane %v765, %v789
        %v791 = vrot.slane %v790, 1
        %v809 = vunpack.c.l.b16 %v767
        %v810 = vunpack.c.l.b16 %v768
        %v811 = vunpack.c.l.b16 %v769
        %v812 = vunpack.c.l.b16 %v770
        %v813 = vunpack.c.l.b16 %v771
        %v814 = vunpack.c.l.b16 %v772
        %v815 = vunpack.c.l.b16 %v773
        %v816 = vunpack.c.l.b16 %v774
        %v817 = vunpack.c.l.b16 %v775
        %v818 = vunpack.c.l.b16 %v776
        %v819 = vunpack.c.l.b16 %v777
        %v820 = vunpack.c.l.b16 %v778
        %v821 = vunpack.c.l.b16 %v779
        %v822 = vunpack.c.l.b16 %v780
        %v823 = vunpack.c.l.b16 %v781
        %v824 = vunpack.c.l.b16 %v782
        %v825 = vpack.c.b16 %v810, %v809
        %v826 = vpack.c.b16 %v812, %v811
        %v827 = vpack.c.b16 %v814, %v813
        %v828 = vpack.c.b16 %v816, %v815
        %v829 = vpack.c.b16 %v818, %v817
        %v830 = vpack.c.b16 %v820, %v819
        %v831 = vpack.c.b16 %v822, %v821
        %v832 = vpack.c.b16 %v824, %v823
        %841 = vmatprep.subr.bf16.mxu0 0
        %842 = vmatpush1.bf16.msra.mxu0 %v825
        %843 = vmatprep.subr.bf16.mxu0 0
        %844 = vmatpush1.bf16.msra.mxu0 %v826
        %845 = vmatprep.subr.bf16.mxu0 0
        %846 = vmatpush1.bf16.msra.mxu0 %v827
        %847 = vmatprep.subr.bf16.mxu0 0
        %848 = vmatpush1.bf16.msra.mxu0 %v828
        %849 = vmatprep.subr.bf16.mxu0 0
        %850 = vmatpush1.bf16.msra.mxu0 %v829
        %851 = vmatprep.subr.bf16.mxu0 0
        %852 = vmatpush1.bf16.msra.mxu0 %v830
        %853 = vmatprep.subr.bf16.mxu0 0
        %854 = vmatpush1.bf16.msra.mxu0 %v831
        %855 = vmatprep.subr.bf16.mxu0 0
        %856 = vmatpush1.bf16.msra.mxu0 %v832
        %857 = vmatprep.subr.bf16.mxu0 0
        %858 = vmatpush1.bf16.msra.mxu0 0
        %859 = vmatprep.subr.bf16.mxu0 0
        %860 = vmatpush1.bf16.msra.mxu0 0
        %861 = vmatprep.subr.bf16.mxu0 0
        %862 = vmatpush1.bf16.msra.mxu0 0
        %863 = vmatprep.subr.bf16.mxu0 0
        %864 = vmatpush1.bf16.msra.mxu0 0
        %865 = vmatprep.subr.bf16.mxu0 0
        %866 = vmatpush1.bf16.msra.mxu0 0
        %867 = vmatprep.subr.bf16.mxu0 0
        %868 = vmatpush1.bf16.msra.mxu0 0
        %869 = vmatprep.subr.bf16.mxu0 0
        %870 = vmatpush1.bf16.msra.mxu0 0
        %871 = vmatprep.subr.bf16.mxu0 0
        %872 = vmatpush1.bf16.msra.mxu0 0
        %873 = vmatprep.mubr.bf16.mxu0 0
        %874 = vmatmul.mubr.bf16.gmra.mrb[0].mxu0 %v791
        %v875 = vpop.f32.mrb[0].mxu0
        %v876 = vadd.f32 0.0, %v875
        %v877 = vpop.f32.mrb[0].mxu0
        %v878 = vpop.f32.mrb[0].mxu0
        %v879 = vpop.f32.mrb[0].mxu0
        %880 = vdwg.mxu0
        %v881 = vadd.f32 %v764, %v876
        %s882 = sadd.s32 %s181, 2
        %s883 = smul.addr %s882, 2
        %s884 = scalar_lea.vmem %s167, %s883
        %v885 = vld [vmem:[%s884] sm:$0x1]
        %s886 = scalar_lea.vmem %s171, 384
        %v887 = vld [vmem:[%s886] sm:$0xf]
        %v888 = vld [vmem:[%s886 + $0x4] sm:$0xf]
        %v889 = vld [vmem:[%s886 + $0x8] sm:$0xf]
        %v890 = vld [vmem:[%s886 + $0xc] sm:$0xf]
        %v891 = vld [vmem:[%s886 + $0x10] sm:$0xf]
        %v892 = vld [vmem:[%s886 + $0x14] sm:$0xf]
        %v893 = vld [vmem:[%s886 + $0x18] sm:$0xf]
        %v894 = vld [vmem:[%s886 + $0x1c] sm:$0xf]
        %v895 = vld [vmem:[%s886 + $0x20] sm:$0xf]
        %v896 = vld [vmem:[%s886 + $0x24] sm:$0xf]
        %v897 = vld [vmem:[%s886 + $0x28] sm:$0xf]
        %v898 = vld [vmem:[%s886 + $0x2c] sm:$0xf]
        %v899 = vld [vmem:[%s886 + $0x30] sm:$0xf]
        %v900 = vld [vmem:[%s886 + $0x34] sm:$0xf]
        %v901 = vld [vmem:[%s886 + $0x38] sm:$0xf]
        %v902 = vld [vmem:[%s886 + $0x3c] sm:$0xf]
        %v919 = vunpack.c.l.b16 %v887
        %v920 = vunpack.c.l.b16 %v888
        %v921 = vunpack.c.l.b16 %v889
        %v922 = vunpack.c.l.b16 %v890
        %v923 = vunpack.c.l.b16 %v891
        %v924 = vunpack.c.l.b16 %v892
        %v925 = vunpack.c.l.b16 %v893
        %v926 = vunpack.c.l.b16 %v894
        %v927 = vunpack.c.l.b16 %v895
        %v928 = vunpack.c.l.b16 %v896
        %v929 = vunpack.c.l.b16 %v897
        %v930 = vunpack.c.l.b16 %v898
        %v931 = vunpack.c.l.b16 %v899
        %v932 = vunpack.c.l.b16 %v900
        %v933 = vunpack.c.l.b16 %v901
        %v934 = vunpack.c.l.b16 %v902
        %v935 = vpack.c.b16 %v920, %v919
        %v936 = vpack.c.b16 %v922, %v921
        %v937 = vpack.c.b16 %v924, %v923
        %v938 = vpack.c.b16 %v926, %v925
        %v939 = vpack.c.b16 %v928, %v927
        %v940 = vpack.c.b16 %v930, %v929
        %v941 = vpack.c.b16 %v932, %v931
        %v942 = vpack.c.b16 %v934, %v933
        %951 = vmatprep.subr.bf16.mxu0 0
        %952 = vmatpush1.bf16.msra.mxu0 %v935
        %953 = vmatprep.subr.bf16.mxu0 0
        %954 = vmatpush1.bf16.msra.mxu0 %v936
        %955 = vmatprep.subr.bf16.mxu0 0
        %956 = vmatpush1.bf16.msra.mxu0 %v937
        %957 = vmatprep.subr.bf16.mxu0 0
        %958 = vmatpush1.bf16.msra.mxu0 %v938
        %959 = vmatprep.subr.bf16.mxu0 0
        %960 = vmatpush1.bf16.msra.mxu0 %v939
        %961 = vmatprep.subr.bf16.mxu0 0
        %962 = vmatpush1.bf16.msra.mxu0 %v940
        %963 = vmatprep.subr.bf16.mxu0 0
        %964 = vmatpush1.bf16.msra.mxu0 %v941
        %965 = vmatprep.subr.bf16.mxu0 0
        %966 = vmatpush1.bf16.msra.mxu0 %v942
        %967 = vmatprep.subr.bf16.mxu0 0
        %968 = vmatpush1.bf16.msra.mxu0 0
        %969 = vmatprep.subr.bf16.mxu0 0
        %970 = vmatpush1.bf16.msra.mxu0 0
        %971 = vmatprep.subr.bf16.mxu0 0
        %972 = vmatpush1.bf16.msra.mxu0 0
        %973 = vmatprep.subr.bf16.mxu0 0
        %974 = vmatpush1.bf16.msra.mxu0 0
        %975 = vmatprep.subr.bf16.mxu0 0
        %976 = vmatpush1.bf16.msra.mxu0 0
        %977 = vmatprep.subr.bf16.mxu0 0
        %978 = vmatpush1.bf16.msra.mxu0 0
        %979 = vmatprep.subr.bf16.mxu0 0
        %980 = vmatpush1.bf16.msra.mxu0 0
        %981 = vmatprep.subr.bf16.mxu0 0
        %982 = vmatpush1.bf16.msra.mxu0 0
        %983 = vmatprep.mubr.bf16.mxu0 0
        %984 = vmatmul.mubr.bf16.gmra.mrb[0].mxu0 %v885
        %v985 = vpop.f32.mrb[0].mxu0
        %v986 = vadd.f32 0.0, %v985
        %v987 = vpop.f32.mrb[0].mxu0
        %v988 = vpop.f32.mrb[0].mxu0
        %v989 = vpop.f32.mrb[0].mxu0
        %990 = vdwg.mxu0
        %v991 = vadd.f32 %v881, %v986
        %v992 = vld [vmem:[%s884] sm:$0x3]
        %s993 = scalar_lea.vmem %s171, 448
        %v994 = vld [vmem:[%s993] sm:$0xf]
        %v995 = vld [vmem:[%s993 + $0x4] sm:$0xf]
        %v996 = vld [vmem:[%s993 + $0x8] sm:$0xf]
        %v997 = vld [vmem:[%s993 + $0xc] sm:$0xf]
        %v998 = vld [vmem:[%s993 + $0x10] sm:$0xf]
        %v999 = vld [vmem:[%s993 + $0x14] sm:$0xf]
        %v1000 = vld [vmem:[%s993 + $0x18] sm:$0xf]
        %v1001 = vld [vmem:[%s993 + $0x1c] sm:$0xf]
        %v1002 = vld [vmem:[%s993 + $0x20] sm:$0xf]
        %v1003 = vld [vmem:[%s993 + $0x24] sm:$0xf]
        %v1004 = vld [vmem:[%s993 + $0x28] sm:$0xf]
        %v1005 = vld [vmem:[%s993 + $0x2c] sm:$0xf]
        %v1006 = vld [vmem:[%s993 + $0x30] sm:$0xf]
        %v1007 = vld [vmem:[%s993 + $0x34] sm:$0xf]
        %v1008 = vld [vmem:[%s993 + $0x38] sm:$0xf]
        %v1009 = vld [vmem:[%s993 + $0x3c] sm:$0xf]
        %v1012 = vunpack.c.l.s4 1983009808
        %v1013 = vunpack.c.0.s8 %v1012
        %v1014 = vlaneseq
        %v1015 = vshrl.u32 %v1014, 7
        %v1016 = vsub.s32 %v1013, %v1015
        %v1017 = vrot.slane %v992, %v1016
        %v1019 = vshrl.u32 %v1017, 16
        %v1021 = vshll.u32 %v1017, 16
        %v1023 = vrot.slane %v1021, 1
        %v1024 = vor.u32 %v1019, %v1023
        %v1042 = vunpack.c.l.b16 %v994
        %v1043 = vunpack.c.l.b16 %v995
        %v1044 = vunpack.c.l.b16 %v996
        %v1045 = vunpack.c.l.b16 %v997
        %v1046 = vunpack.c.l.b16 %v998
        %v1047 = vunpack.c.l.b16 %v999
        %v1048 = vunpack.c.l.b16 %v1000
        %v1049 = vunpack.c.l.b16 %v1001
        %v1050 = vunpack.c.l.b16 %v1002
        %v1051 = vunpack.c.l.b16 %v1003
        %v1052 = vunpack.c.l.b16 %v1004
        %v1053 = vunpack.c.l.b16 %v1005
        %v1054 = vunpack.c.l.b16 %v1006
        %v1055 = vunpack.c.l.b16 %v1007
        %v1056 = vunpack.c.l.b16 %v1008
        %v1057 = vunpack.c.l.b16 %v1009
        %v1058 = vpack.c.b16 %v1043, %v1042
        %v1059 = vpack.c.b16 %v1045, %v1044
        %v1060 = vpack.c.b16 %v1047, %v1046
        %v1061 = vpack.c.b16 %v1049, %v1048
        %v1062 = vpack.c.b16 %v1051, %v1050
        %v1063 = vpack.c.b16 %v1053, %v1052
        %v1064 = vpack.c.b16 %v1055, %v1054
        %v1065 = vpack.c.b16 %v1057, %v1056
        %1074 = vmatprep.subr.bf16.mxu0 0
        %1075 = vmatpush1.bf16.msra.mxu0 %v1058
        %1076 = vmatprep.subr.bf16.mxu0 0
        %1077 = vmatpush1.bf16.msra.mxu0 %v1059
        %1078 = vmatprep.subr.bf16.mxu0 0
        %1079 = vmatpush1.bf16.msra.mxu0 %v1060
        %1080 = vmatprep.subr.bf16.mxu0 0
        %1081 = vmatpush1.bf16.msra.mxu0 %v1061
        %1082 = vmatprep.subr.bf16.mxu0 0
        %1083 = vmatpush1.bf16.msra.mxu0 %v1062
        %1084 = vmatprep.subr.bf16.mxu0 0
        %1085 = vmatpush1.bf16.msra.mxu0 %v1063
        %1086 = vmatprep.subr.bf16.mxu0 0
        %1087 = vmatpush1.bf16.msra.mxu0 %v1064
        %1088 = vmatprep.subr.bf16.mxu0 0
        %1089 = vmatpush1.bf16.msra.mxu0 %v1065
        %1090 = vmatprep.subr.bf16.mxu0 0
        %1091 = vmatpush1.bf16.msra.mxu0 0
        %1092 = vmatprep.subr.bf16.mxu0 0
        %1093 = vmatpush1.bf16.msra.mxu0 0
        %1094 = vmatprep.subr.bf16.mxu0 0
        %1095 = vmatpush1.bf16.msra.mxu0 0
        %1096 = vmatprep.subr.bf16.mxu0 0
        %1097 = vmatpush1.bf16.msra.mxu0 0
        %1098 = vmatprep.subr.bf16.mxu0 0
        %1099 = vmatpush1.bf16.msra.mxu0 0
        %1100 = vmatprep.subr.bf16.mxu0 0
        %1101 = vmatpush1.bf16.msra.mxu0 0
        %1102 = vmatprep.subr.bf16.mxu0 0
        %1103 = vmatpush1.bf16.msra.mxu0 0
        %1104 = vmatprep.subr.bf16.mxu0 0
        %1105 = vmatpush1.bf16.msra.mxu0 0
        %1106 = vmatprep.mubr.bf16.mxu0 0
        %1107 = vmatmul.mubr.bf16.gmra.mrb[0].mxu0 %v1024
        %v1108 = vpop.f32.mrb[0].mxu0
        %v1109 = vadd.f32 0.0, %v1108
        %v1110 = vpop.f32.mrb[0].mxu0
        %v1111 = vpop.f32.mrb[0].mxu0
        %v1112 = vpop.f32.mrb[0].mxu0
        %1113 = vdwg.mxu0
        %v1114 = vadd.f32 %v991, %v1109
        %v1115 = vld [vmem:[%s884] sm:$0x2]
        %s1116 = scalar_lea.vmem %s171, 512
        %v1117 = vld [vmem:[%s1116] sm:$0xf]
        %v1118 = vld [vmem:[%s1116 + $0x4] sm:$0xf]
        %v1119 = vld [vmem:[%s1116 + $0x8] sm:$0xf]
        %v1120 = vld [vmem:[%s1116 + $0xc] sm:$0xf]
        %v1121 = vld [vmem:[%s1116 + $0x10] sm:$0xf]
        %v1122 = vld [vmem:[%s1116 + $0x14] sm:$0xf]
        %v1123 = vld [vmem:[%s1116 + $0x18] sm:$0xf]
        %v1124 = vld [vmem:[%s1116 + $0x1c] sm:$0xf]
        %v1125 = vld [vmem:[%s1116 + $0x20] sm:$0xf]
        %v1126 = vld [vmem:[%s1116 + $0x24] sm:$0xf]
        %v1127 = vld [vmem:[%s1116 + $0x28] sm:$0xf]
        %v1128 = vld [vmem:[%s1116 + $0x2c] sm:$0xf]
        %v1129 = vld [vmem:[%s1116 + $0x30] sm:$0xf]
        %v1130 = vld [vmem:[%s1116 + $0x34] sm:$0xf]
        %v1131 = vld [vmem:[%s1116 + $0x38] sm:$0xf]
        %v1132 = vld [vmem:[%s1116 + $0x3c] sm:$0xf]
        %v1135 = vunpack.c.l.s4 1983009808
        %v1136 = vunpack.c.0.s8 %v1135
        %v1137 = vlaneseq
        %v1138 = vshrl.u32 %v1137, 7
        %v1139 = vsub.s32 %v1136, %v1138
        %v1140 = vrot.slane %v1115, %v1139
        %v1141 = vrot.slane %v1140, 1
        %v1159 = vunpack.c.l.b16 %v1117
        %v1160 = vunpack.c.l.b16 %v1118
        %v1161 = vunpack.c.l.b16 %v1119
        %v1162 = vunpack.c.l.b16 %v1120
        %v1163 = vunpack.c.l.b16 %v1121
        %v1164 = vunpack.c.l.b16 %v1122
        %v1165 = vunpack.c.l.b16 %v1123
        %v1166 = vunpack.c.l.b16 %v1124
        %v1167 = vunpack.c.l.b16 %v1125
        %v1168 = vunpack.c.l.b16 %v1126
        %v1169 = vunpack.c.l.b16 %v1127
        %v1170 = vunpack.c.l.b16 %v1128
        %v1171 = vunpack.c.l.b16 %v1129
        %v1172 = vunpack.c.l.b16 %v1130
        %v1173 = vunpack.c.l.b16 %v1131
        %v1174 = vunpack.c.l.b16 %v1132
        %v1175 = vpack.c.b16 %v1160, %v1159
        %v1176 = vpack.c.b16 %v1162, %v1161
        %v1177 = vpack.c.b16 %v1164, %v1163
        %v1178 = vpack.c.b16 %v1166, %v1165
        %v1179 = vpack.c.b16 %v1168, %v1167
        %v1180 = vpack.c.b16 %v1170, %v1169
        %v1181 = vpack.c.b16 %v1172, %v1171
        %v1182 = vpack.c.b16 %v1174, %v1173
        %1191 = vmatprep.subr.bf16.mxu0 0
        %1192 = vmatpush1.bf16.msra.mxu0 %v1175
        %1193 = vmatprep.subr.bf16.mxu0 0
        %1194 = vmatpush1.bf16.msra.mxu0 %v1176
        %1195 = vmatprep.subr.bf16.mxu0 0
        %1196 = vmatpush1.bf16.msra.mxu0 %v1177
        %1197 = vmatprep.subr.bf16.mxu0 0
        %1198 = vmatpush1.bf16.msra.mxu0 %v1178
        %1199 = vmatprep.subr.bf16.mxu0 0
        %1200 = vmatpush1.bf16.msra.mxu0 %v1179
        %1201 = vmatprep.subr.bf16.mxu0 0
        %1202 = vmatpush1.bf16.msra.mxu0 %v1180
        %1203 = vmatprep.subr.bf16.mxu0 0
        %1204 = vmatpush1.bf16.msra.mxu0 %v1181
        %1205 = vmatprep.subr.bf16.mxu0 0
        %1206 = vmatpush1.bf16.msra.mxu0 %v1182
        %1207 = vmatprep.subr.bf16.mxu0 0
        %1208 = vmatpush1.bf16.msra.mxu0 0
        %1209 = vmatprep.subr.bf16.mxu0 0
        %1210 = vmatpush1.bf16.msra.mxu0 0
        %1211 = vmatprep.subr.bf16.mxu0 0
        %1212 = vmatpush1.bf16.msra.mxu0 0
        %1213 = vmatprep.subr.bf16.mxu0 0
        %1214 = vmatpush1.bf16.msra.mxu0 0
        %1215 = vmatprep.subr.bf16.mxu0 0
        %1216 = vmatpush1.bf16.msra.mxu0 0
        %1217 = vmatprep.subr.bf16.mxu0 0
        %1218 = vmatpush1.bf16.msra.mxu0 0
        %1219 = vmatprep.subr.bf16.mxu0 0
        %1220 = vmatpush1.bf16.msra.mxu0 0
        %1221 = vmatprep.subr.bf16.mxu0 0
        %1222 = vmatpush1.bf16.msra.mxu0 0
        %1223 = vmatprep.mubr.bf16.mxu0 0
        %1224 = vmatmul.mubr.bf16.gmra.mrb[0].mxu0 %v1141
        %v1225 = vpop.f32.mrb[0].mxu0
        %v1226 = vadd.f32 0.0, %v1225
        %v1227 = vpop.f32.mrb[0].mxu0
        %v1228 = vpop.f32.mrb[0].mxu0
        %v1229 = vpop.f32.mrb[0].mxu0
        %1230 = vdwg.mxu0
        %v1231 = vadd.f32 %v1114, %v1226
        %v1232 = vpack.c.bf16 %v1231, %v1231
        %s1233 = scalar_lea.vmem %s178, %s181
        %1234 = vst [vmem:[%s1233] sm:$0x1] %v1232
      $region33: #{densenet_forward.23} parent=27 // loop_footer
        %s185 = sadd.s32 1, %s181
      $region34: #{densenet_forward.23} parent=27 // loop_footer_branch
        %180 = sbr.rel target = $region30
      $region35: #{densenet_forward.23} parent=27 // loop_exit
        _
      %p1235 = scmp.lt.s32.totalorder %s17, 1
      %s1236 = scalar_select %p1235, %s17, 1
      %p1237 = scmp.lt.s32.totalorder %s18, 0
      %s1238 = scalar_select %p1237, %s18, 0
      %s1239 = smul.addr %s1236, 2
      %s1240 = sadd.s32 %s1238, %s1239
      %s1241 = scalar_lea.vmem %s2, %s1240
      // Predicated region
      $region36: #{densenet_forward.23} parent=27 // pred_check
        %p1242 = pneg %p97
      $region37: #{densenet_forward.23} parent=27 // pred_check_branch
        %1244 = sbr.rel (%p1242) target = $region39
      $region38: #{densenet_forward.23} parent=27 // pred_region
        _
      $region39: #{densenet_forward.23} parent=27 // pred_fallthru
        _
    $region28: #{densenet_forward.23} parent=5 // pred_fallthru
      _
    %p1245 = scmp.le.s32.totalorder 2, %s8
    // Predicated region
    $region40: #{densenet_forward.23} parent=5 // pred_check
      %p1246 = pneg %p1245
    $region41: #{densenet_forward.23} parent=5 // pred_check_branch
      %1248 = sbr.rel (%p1246) target = $region43
    $region42: #{densenet_forward.23} parent=5 // pred_region
      %s1249 = ssub.s32 %s8, 2
      // Predicated region
      $region44: #{densenet_forward.23} parent=42 // pred_check
        %p1250 = pneg %p103
      $region45: #{densenet_forward.23} parent=42 // pred_check_branch
        %1252 = sbr.rel (%p1250) target = $region47
      $region46: #{densenet_forward.23} parent=42 // pred_region
        %p1253 = scmp.lt.s32.totalorder %s19, 1
        %s1254 = scalar_select %p1253, %s19, 1
        %p1255 = scmp.lt.s32.totalorder %s20, 0
        %s1256 = scalar_select %p1255, %s20, 0
        %s1257 = smul.addr %s1254, 2
        %s1258 = sadd.s32 %s1256, %s1257
        %s1259 = scalar_lea.vmem %s2, %s1258
      $region47: #{densenet_forward.23} parent=42 // pred_fallthru
        _
    $region43: #{densenet_forward.23} parent=5 // pred_fallthru
      _
  $region6: #{densenet_forward.23} parent=0 // loop_footer
    %s12 = sadd.s32 1, %s8
  $region7: #{densenet_forward.23} parent=0 // loop_footer_branch
    %7 = sbr.rel target = $region3
  $region8: #{densenet_forward.23} parent=0 // loop_exit
    _

// kernel: densenet_forward.26
$region0: #{densenet_forward.26}
  #allocation0 [shape = 'u32[]', space=smem, size = 0x4, offset = 0x4, fixed_abs, tag = 'smem constant byte address 0x4 - core index']
  #allocation1 [shape = 'u32[144,128]{1,0:T(1,128)}', space=vmem, size = 0x12000, scoped, tag = 'internal scratch']
  %s0 = inlined_call_operand.vmem [shape: bf16[2,4,128], index: 0, kind: input, shape index: {}]
  %s1 = inlined_call_operand.vmem [shape: f32[1,128], index: 1, kind: input, shape index: {}]
  %s2 = inlined_call_operand.vmem [shape: f32[1,128], index: 2, kind: input, shape index: {}]
  %s3 = inlined_call_operand.vmem [shape: f32[2,1,128], index: 3, kind: output, shape index: {}]
  %s4 = sld [smem:[#allocation0]]
  $region45: #{densenet_forward.26} parent=0
    _
  %s6 = ssub.s32 1, %s4
  %s7 = scalar_select 0, %s6, %s4
  loop: start=0, step=1, limit=4
  $region2: #{densenet_forward.26} parent=0 // loop_pre_header
    _
  $region3: #{densenet_forward.26} parent=0 // loop_header
    %s9 = sphi 0, %s13
    %p10 = scmp.ge.s32.totalorder %s9, 4
    %s19 = sphi 0, %s21
    %s22 = sphi 0, %s19
    %s23 = sphi 0, %s22
    %s39 = sphi 0, %s23
    %s43 = sphi 0, %s43
    %s45 = sphi 0, %s43
    %s46 = sphi 0, %s45
    %s60 = sphi 0, %s46
    %s64 = sphi 0, %s64
    %s66 = sphi 0, %s64
    %s67 = sphi 0, %s66
    %s81 = sphi 0, %s67
    %s87 = sphi 0, %s89
    %s90 = sphi 0, %s87
    %s91 = sphi 0, %s90
    %s107 = sphi 0, %s91
  $region4: #{densenet_forward.26} parent=0 // loop_header_branch
    %12 = sbr.rel (%p10) target = $region8
  $region5: #{densenet_forward.26} parent=0 // loop_body
    %s14 = ssub.s32 %s9, 1
    %s15 = ssub.s32 %s9, 2
    %s16 = sadd.s32 %s9, 1
    %s17 = ssub.s32 %s9, %s16
    %p18 = scmp.eq.s32.totalorder %s17, 0
    %s20 = sadd.s32 %s19, 1
    %s21 = scalar_select %p18, %s19, %s20
    %p24 = pneg %p18
    %p25 = scmp.eq.s32.totalorder %s9, 1
    %p26 = por %p24, %p25
    %p27 = scmp.ne.s32.totalorder %s19, %s22
    %p28 = scmp.eq.s32.totalorder %s9, 0
    %p29 = por %p27, %p28
    %p30 = scmp.ne.s32.totalorder %s19, %s22
    %p31 = scmp.eq.s32.totalorder %s14, 1
    %p32 = por %p30, %p31
    %p33 = scmp.ne.s32.totalorder %s22, %s23
    %p34 = scmp.eq.s32.totalorder %s14, 0
    %p35 = por %p33, %p34
    %p36 = scmp.ne.s32.totalorder %s22, %s23
    %p37 = scmp.eq.s32.totalorder %s15, 1
    %p38 = por %p36, %p37
    %p40 = scmp.ne.s32.totalorder %s23, %s39
    %p41 = scmp.eq.s32.totalorder %s15, 0
    %p42 = por %p40, %p41
    %s44 = sadd.s32 %s43, 1
    %p47 = scmp.eq.s32.totalorder %s9, 1
    %p48 = scmp.ne.s32.totalorder %s43, %s45
    %p49 = scmp.eq.s32.totalorder %s9, 0
    %p50 = por %p48, %p49
    %p51 = scmp.ne.s32.totalorder %s43, %s45
    %p52 = scmp.eq.s32.totalorder %s14, 1
    %p53 = por %p51, %p52
    %p54 = scmp.ne.s32.totalorder %s45, %s46
    %p55 = scmp.eq.s32.totalorder %s14, 0
    %p56 = por %p54, %p55
    %p57 = scmp.ne.s32.totalorder %s45, %s46
    %p58 = scmp.eq.s32.totalorder %s15, 1
    %p59 = por %p57, %p58
    %p61 = scmp.ne.s32.totalorder %s46, %s60
    %p62 = scmp.eq.s32.totalorder %s15, 0
    %p63 = por %p61, %p62
    %s65 = sadd.s32 %s64, 1
    %p68 = scmp.eq.s32.totalorder %s9, 1
    %p69 = scmp.ne.s32.totalorder %s64, %s66
    %p70 = scmp.eq.s32.totalorder %s9, 0
    %p71 = por %p69, %p70
    %p72 = scmp.ne.s32.totalorder %s64, %s66
    %p73 = scmp.eq.s32.totalorder %s14, 1
    %p74 = por %p72, %p73
    %p75 = scmp.ne.s32.totalorder %s66, %s67
    %p76 = scmp.eq.s32.totalorder %s14, 0
    %p77 = por %p75, %p76
    %p78 = scmp.ne.s32.totalorder %s66, %s67
    %p79 = scmp.eq.s32.totalorder %s15, 1
    %p80 = por %p78, %p79
    %p82 = scmp.ne.s32.totalorder %s67, %s81
    %p83 = scmp.eq.s32.totalorder %s15, 0
    %p84 = por %p82, %p83
    %s85 = ssub.s32 %s9, %s16
    %p86 = scmp.eq.s32.totalorder %s85, 0
    %s88 = sadd.s32 %s87, 1
    %s89 = scalar_select %p86, %s87, %s88
    %p92 = pneg %p86
    %p93 = scmp.eq.s32.totalorder %s9, 1
    %p94 = por %p92, %p93
    %p95 = scmp.ne.s32.totalorder %s87, %s90
    %p96 = scmp.eq.s32.totalorder %s9, 0
    %p97 = por %p95, %p96
    %p98 = scmp.ne.s32.totalorder %s87, %s90
    %p99 = scmp.eq.s32.totalorder %s14, 1
    %p100 = por %p98, %p99
    %p101 = scmp.ne.s32.totalorder %s90, %s91
    %p102 = scmp.eq.s32.totalorder %s14, 0
    %p103 = por %p101, %p102
    %p104 = scmp.ne.s32.totalorder %s90, %s91
    %p105 = scmp.eq.s32.totalorder %s15, 1
    %p106 = por %p104, %p105
    %p108 = scmp.ne.s32.totalorder %s91, %s107
    %p109 = scmp.eq.s32.totalorder %s15, 0
    %p110 = por %p108, %p109
    %p111 = scmp.le.s32.totalorder 1, %s9
    %p112 = scmp.lt.s32.totalorder %s9, 3
    %p113 = pnand %p111, %p112
    %p114 = pneg %p113
    // Predicated region
    $region9: #{densenet_forward.26} parent=5 // pred_check
      _
    $region10: #{densenet_forward.26} parent=5 // pred_check_branch
      %116 = sbr.rel (%p113) target = $region12
    $region11: #{densenet_forward.26} parent=5 // pred_region
      %s117 = ssub.s32 %s9, 1
      // Predicated region
      $region13: #{densenet_forward.26} parent=11 // pred_check
        %p118 = pneg %p56
      $region14: #{densenet_forward.26} parent=11 // pred_check_branch
        %120 = sbr.rel (%p118) target = $region16
      $region15: #{densenet_forward.26} parent=11 // pred_region
        _
      $region16: #{densenet_forward.26} parent=11 // pred_fallthru
        _
      // Predicated region
      $region17: #{densenet_forward.26} parent=11 // pred_check
        %p121 = pneg %p77
      $region18: #{densenet_forward.26} parent=11 // pred_check_branch
        %123 = sbr.rel (%p121) target = $region20
      $region19: #{densenet_forward.26} parent=11 // pred_region
        _
      $region20: #{densenet_forward.26} parent=11 // pred_fallthru
        _
    $region12: #{densenet_forward.26} parent=5 // pred_fallthru
      _
    %p124 = scmp.lt.s32.totalorder %s9, 2
    // Predicated region
    $region21: #{densenet_forward.26} parent=5 // pred_check
      %p125 = pneg %p124
    $region22: #{densenet_forward.26} parent=5 // pred_check_branch
      %127 = sbr.rel (%p125) target = $region24
    $region23: #{densenet_forward.26} parent=5 // pred_region
      // Predicated region
      $region25: #{densenet_forward.26} parent=23 // pred_check
        %p128 = pneg %p29
      $region26: #{densenet_forward.26} parent=23 // pred_check_branch
        %130 = sbr.rel (%p128) target = $region28
      $region27: #{densenet_forward.26} parent=23 // pred_region
        %p131 = scmp.lt.s32.totalorder %s9, 1
        %s132 = scalar_select %p131, %s9, 1
        %s133 = smul.addr %s132, 2
        %s134 = scalar_lea.vmem %s0, %s133
      $region28: #{densenet_forward.26} parent=23 // pred_fallthru
        _
    $region24: #{densenet_forward.26} parent=5 // pred_fallthru
      _
    %p135 = scmp.le.s32.totalorder 1, %s9
    %p136 = scmp.lt.s32.totalorder %s9, 3
    %p137 = pnand %p135, %p136
    %p138 = pneg %p137
    // Predicated region
    $region29: #{densenet_forward.26} parent=5 // pred_check
      _
    $region30: #{densenet_forward.26} parent=5 // pred_check_branch
      %140 = sbr.rel (%p137) target = $region32
    $region31: #{densenet_forward.26} parent=5 // pred_region
      %s141 = ssub.s32 %s9, 1
      %p142 = scmp.lt.s32.totalorder %s14, 1
      %s143 = scalar_select %p142, %s14, 1
      %s144 = smul.addr %s143, 2
      %s145 = scalar_lea.vmem %s0, %s144
      %p146 = pneg %p35
      %p147 = pneg %p32
      %p148 = pneg %p56
      %p149 = pneg %p53
      %p150 = pneg %p77
      %p151 = pneg %p74
      %p152 = pneg %p103
      %p153 = pneg %p100
      %p154 = scmp.lt.s32.totalorder %s14, 1
      %s155 = scalar_select %p154, %s14, 1
      %s156 = scalar_lea.vmem %s3, %s155
      %p157 = scmp.lt.s32.totalorder %s14, 1
      %s158 = scalar_select %p157, %s14, 1
      %s159 = smul.addr %s158, 2
      %s160 = scalar_lea.vmem %s0, %s159
      %p161 = scmp.lt.s32.totalorder %s14, 1
      %s162 = scalar_select %p161, %s14, 1
      %s163 = scalar_lea.vmem %s3, %s162
      %v164 = vld [vmem:[%s160] sm:$0x3]
      %v165 = vunpack.c.l.bf16 %v164
      %v166 = vld [vmem:[%s1] sm:$0x1]
      %v168 = vlaneseq
      %v169 = vshrl.u32 %v168, 7
      %v170 = vsub.s32 0, %v169
      %v171 = vrot.slane %v166, %v170
      %v173 = vmul.f32 %v165, %v171
      %v174 = vld [vmem:[%s2] sm:$0x1]
      %v176 = vlaneseq
      %v177 = vshrl.u32 %v176, 7
      %v178 = vsub.s32 0, %v177
      %v179 = vrot.slane %v174, %v178
      %v181 = vadd.f32 %v173, %v179
      %v182 = vmax.f32 %v181, 0.0
      %vm183 = vcmask 1043456
      %v184 = vsel %vm183, %v182, 0.0
      %v185 = vrot.slane %v184, 4
      %v186 = vadd.f32 %v184, %v185
      %v187 = vrot.slane %v186, 2
      %v188 = vadd.f32 %v186, %v187
      %v189 = vrot.slane %v188, 1
      %v190 = vadd.f32 %v188, %v189
      %v191 = vrcp.pop 4.0
      %v192 = vmul.f32 %v190, %v191
      %193 = vst [vmem:[%s163] sm:$0x1] %v192
      %p194 = scmp.lt.s32.totalorder %s14, 1
      %s195 = scalar_select %p194, %s14, 1
      %s196 = scalar_lea.vmem %s3, %s195
      // Predicated region
      $region33: #{densenet_forward.26} parent=31 // pred_check
        %p197 = pneg %p100
      $region34: #{densenet_forward.26} parent=31 // pred_check_branch
        %199 = sbr.rel (%p197) target = $region36
      $region35: #{densenet_forward.26} parent=31 // pred_region
        _
      $region36: #{densenet_forward.26} parent=31 // pred_fallthru
        _
    $region32: #{densenet_forward.26} parent=5 // pred_fallthru
      _
    %p200 = scmp.le.s32.totalorder 2, %s9
    // Predicated region
    $region37: #{densenet_forward.26} parent=5 // pred_check
      %p201 = pneg %p200
    $region38: #{densenet_forward.26} parent=5 // pred_check_branch
      %203 = sbr.rel (%p201) target = $region40
    $region39: #{densenet_forward.26} parent=5 // pred_region
      %s204 = ssub.s32 %s9, 2
      // Predicated region
      $region41: #{densenet_forward.26} parent=39 // pred_check
        %p205 = pneg %p106
      $region42: #{densenet_forward.26} parent=39 // pred_check_branch
        %207 = sbr.rel (%p205) target = $region44
      $region43: #{densenet_forward.26} parent=39 // pred_region
        %p208 = scmp.lt.s32.totalorder %s15, 1
        %s209 = scalar_select %p208, %s15, 1
        %s210 = scalar_lea.vmem %s3, %s209
      $region44: #{densenet_forward.26} parent=39 // pred_fallthru
        _
    $region40: #{densenet_forward.26} parent=5 // pred_fallthru
      _
  $region6: #{densenet_forward.26} parent=0 // loop_footer
    %s13 = sadd.s32 1, %s9
  $region7: #{densenet_forward.26} parent=0 // loop_footer_branch
    %8 = sbr.rel target = $region3
  $region8: #{densenet_forward.26} parent=0 // loop_exit
    _

// kernel: densenet_forward.27
$region0: #{densenet_forward.27}
  #allocation0 [shape = 'u32[]', space=smem, size = 0x4, offset = 0x4, fixed_abs, tag = 'smem constant byte address 0x4 - core index']
  #allocation1 [shape = 'u32[144,128]{1,0:T(1,128)}', space=vmem, size = 0x12000, scoped, tag = 'internal scratch']
  %s0 = inlined_call_operand.vmem [shape: f32[16,128], index: 0, kind: input, shape index: {}]
  %s1 = inlined_call_operand.vmem [shape: bf16[128,128], index: 1, kind: input, shape index: {}]
  %s2 = inlined_call_operand.vmem [shape: f32[1,128], index: 2, kind: input, shape index: {}]
  %s3 = inlined_call_operand.vmem [shape: f32[16,128], index: 3, kind: output, shape index: {}]
  %s4 = sld [smem:[#allocation0]]
  $region22: #{densenet_forward.27} parent=0
    _
  %s6 = ssub.s32 1, %s4
  %s7 = scalar_select 0, %s6, %s4
  // Predicated region
  $region2: #{densenet_forward.27} parent=0 // pred_check
    _
  $region3: #{densenet_forward.27} parent=0 // pred_check_branch
    %9 = sbr.rel (0) target = $region5
  $region4: #{densenet_forward.27} parent=0 // pred_region
    _
  $region5: #{densenet_forward.27} parent=0 // pred_fallthru
    _
  // Predicated region
  $region6: #{densenet_forward.27} parent=0 // pred_check
    _
  $region7: #{densenet_forward.27} parent=0 // pred_check_branch
    %11 = sbr.rel (0) target = $region9
  $region8: #{densenet_forward.27} parent=0 // pred_region
    _
  $region9: #{densenet_forward.27} parent=0 // pred_fallthru
    _
  // Predicated region
  $region10: #{densenet_forward.27} parent=0 // pred_check
    _
  $region11: #{densenet_forward.27} parent=0 // pred_check_branch
    %13 = sbr.rel (0) target = $region13
  $region12: #{densenet_forward.27} parent=0 // pred_region
    _
  $region13: #{densenet_forward.27} parent=0 // pred_fallthru
    _
  %v15 = vld [vmem:[%s0] sm:$0xff]
  %v16 = vld [vmem:[%s0 + $0x8] sm:$0xff]
  %v17 = vpack.c.bf16 %v16, %v15
  %v18 = vld [vmem:[%s1] sm:$0xf]
  %v19 = vld [vmem:[%s1 + $0x4] sm:$0xf]
  %v20 = vld [vmem:[%s1 + $0x8] sm:$0xf]
  %v21 = vld [vmem:[%s1 + $0xc] sm:$0xf]
  %v22 = vld [vmem:[%s1 + $0x10] sm:$0xf]
  %v23 = vld [vmem:[%s1 + $0x14] sm:$0xf]
  %v24 = vld [vmem:[%s1 + $0x18] sm:$0xf]
  %v25 = vld [vmem:[%s1 + $0x1c] sm:$0xf]
  %v26 = vld [vmem:[%s1 + $0x20] sm:$0xf]
  %v27 = vld [vmem:[%s1 + $0x24] sm:$0xf]
  %v28 = vld [vmem:[%s1 + $0x28] sm:$0xf]
  %v29 = vld [vmem:[%s1 + $0x2c] sm:$0xf]
  %v30 = vld [vmem:[%s1 + $0x30] sm:$0xf]
  %v31 = vld [vmem:[%s1 + $0x34] sm:$0xf]
  %v32 = vld [vmem:[%s1 + $0x38] sm:$0xf]
  %v33 = vld [vmem:[%s1 + $0x3c] sm:$0xf]
  %v34 = vld [vmem:[%s2] sm:$0x1]
  %v36 = vlaneseq
  %v37 = vshrl.u32 %v36, 7
  %v38 = vsub.s32 0, %v37
  %v39 = vrot.slane %v34, %v38
  %v57 = vunpack.c.l.b16 %v18
  %v58 = vunpack.c.l.b16 %v19
  %v59 = vunpack.c.l.b16 %v20
  %v60 = vunpack.c.l.b16 %v21
  %v61 = vunpack.c.l.b16 %v22
  %v62 = vunpack.c.l.b16 %v23
  %v63 = vunpack.c.l.b16 %v24
  %v64 = vunpack.c.l.b16 %v25
  %v65 = vunpack.c.l.b16 %v26
  %v66 = vunpack.c.l.b16 %v27
  %v67 = vunpack.c.l.b16 %v28
  %v68 = vunpack.c.l.b16 %v29
  %v69 = vunpack.c.l.b16 %v30
  %v70 = vunpack.c.l.b16 %v31
  %v71 = vunpack.c.l.b16 %v32
  %v72 = vunpack.c.l.b16 %v33
  %v73 = vpack.c.b16 %v58, %v57
  %v74 = vpack.c.b16 %v60, %v59
  %v75 = vpack.c.b16 %v62, %v61
  %v76 = vpack.c.b16 %v64, %v63
  %v77 = vpack.c.b16 %v66, %v65
  %v78 = vpack.c.b16 %v68, %v67
  %v79 = vpack.c.b16 %v70, %v69
  %v80 = vpack.c.b16 %v72, %v71
  %89 = vmatprep.subr.bf16.mxu0 0
  %90 = vmatpush1.bf16.msra.mxu0 %v73
  %91 = vmatprep.subr.bf16.mxu0 0
  %92 = vmatpush1.bf16.msra.mxu0 %v74
  %93 = vmatprep.subr.bf16.mxu0 0
  %94 = vmatpush1.bf16.msra.mxu0 %v75
  %95 = vmatprep.subr.bf16.mxu0 0
  %96 = vmatpush1.bf16.msra.mxu0 %v76
  %97 = vmatprep.subr.bf16.mxu0 0
  %98 = vmatpush1.bf16.msra.mxu0 %v77
  %99 = vmatprep.subr.bf16.mxu0 0
  %100 = vmatpush1.bf16.msra.mxu0 %v78
  %101 = vmatprep.subr.bf16.mxu0 0
  %102 = vmatpush1.bf16.msra.mxu0 %v79
  %103 = vmatprep.subr.bf16.mxu0 0
  %104 = vmatpush1.bf16.msra.mxu0 %v80
  %105 = vmatprep.subr.bf16.mxu0 0
  %106 = vmatpush1.bf16.msra.mxu0 0
  %107 = vmatprep.subr.bf16.mxu0 0
  %108 = vmatpush1.bf16.msra.mxu0 0
  %109 = vmatprep.subr.bf16.mxu0 0
  %110 = vmatpush1.bf16.msra.mxu0 0
  %111 = vmatprep.subr.bf16.mxu0 0
  %112 = vmatpush1.bf16.msra.mxu0 0
  %113 = vmatprep.subr.bf16.mxu0 0
  %114 = vmatpush1.bf16.msra.mxu0 0
  %115 = vmatprep.subr.bf16.mxu0 0
  %116 = vmatpush1.bf16.msra.mxu0 0
  %117 = vmatprep.subr.bf16.mxu0 0
  %118 = vmatpush1.bf16.msra.mxu0 0
  %119 = vmatprep.subr.bf16.mxu0 0
  %120 = vmatpush1.bf16.msra.mxu0 0
  %121 = vmatprep.mubr.bf16.mxu0 0
  %122 = vmatmul.mubr.bf16.gmra.mrb[0].mxu0 %v17
  %v123 = vpop.f32.mrb[0].mxu0
  %v124 = vadd.f32 %v39, %v123
  %v125 = vpop.f32.mrb[0].mxu0
  %v126 = vpop.f32.mrb[0].mxu0
  %v127 = vadd.f32 %v39, %v126
  %v128 = vpop.f32.mrb[0].mxu0
  %129 = vdwg.mxu0
  %130 = vst [vmem:[%s3] sm:$0xff] %v124
  %131 = vst [vmem:[%s3 + $0x8] sm:$0xff] %v127
  // Predicated region
  $region14: #{densenet_forward.27} parent=0 // pred_check
    _
  $region15: #{densenet_forward.27} parent=0 // pred_check_branch
    %133 = sbr.rel (0) target = $region17
  $region16: #{densenet_forward.27} parent=0 // pred_region
    _
  $region17: #{densenet_forward.27} parent=0 // pred_fallthru
    _
  // Predicated region
  $region18: #{densenet_forward.27} parent=0 // pred_check
    _
  $region19: #{densenet_forward.27} parent=0 // pred_check_branch
    %135 = sbr.rel (0) target = $region21
  $region20: #{densenet_forward.27} parent=0 // pred_region
    _
  $region21: #{densenet_forward.27} parent=0 // pred_fallthru
    _

</llo_original>
